<compile_context>
chip_gen: v6e
topology: v6e:2x2x1
jax: 0.10.0
libtpu: 0.0.40
codegen_flags: <defaults>
</compile_context>

<pallas_src>
import math

import jax
import jax.numpy as jnp
from jax.experimental import pallas as pl
from jax.experimental.pallas import tpu as pltpu

HP = 128  # lane-padded hidden / output width (one full vreg lane span)


# -----------------------------------------------------------------------------
# Pallas kernel: fused bidirectional single-layer GRU (packed-sequence semantics
# via length masking) followed by fc(hidden[-1]).
# -----------------------------------------------------------------------------
def _gru_bidir_fc_kernel(x_ref, mask_ref,
                         wih_f_ref, whh_f_ref, bi_f_ref, bhn_f_ref,
                         wih_b_ref, whh_b_ref, bi_b_ref, bhn_b_ref,
                         wfc_ref, bfc_ref,
                         h_fwd_ref, h_bwd_ref, fc_ref,
                         gi_f_ref, gi_b_ref):
    Bp, Hp = h_fwd_ref.shape           # (8, 128)
    SB = x_ref.shape[0]                # S * Bp
    S = SB // Bp

    x = x_ref[...]                     # (S*Bp, H)

    # Hoisted input projections: one big MXU matmul per direction, outside the
    # serial recurrence.  r/z biases (b_ih + b_hh) and the n-gate b_ih are
    # pre-folded into bi_*; results land in VMEM scratch and are row-sliced per
    # timestep (sublane-aligned slices of 8 rows).
    gi_f_ref[...] = jnp.dot(x, wih_f_ref[...],
                            preferred_element_type=jnp.float32) + bi_f_ref[...]
    gi_b_ref[...] = jnp.dot(x, wih_b_ref[...],
                            preferred_element_type=jnp.float32) + bi_b_ref[...]

    whh_f = whh_f_ref[...]             # (Hp, 3*Hp), rows >= H are zero
    whh_b = whh_b_ref[...]
    bhn_f = bhn_f_ref[...]             # (1, Hp) — n-gate hidden bias (scaled by r)
    bhn_b = bhn_b_ref[...]

    def gru_step(h, gi_t, whh, bhn, m):
        gh = jnp.dot(h, whh, preferred_element_type=jnp.float32)        # (Bp, 3*Hp)
        # gate slices are full 128-lane blocks -> no cross-lane (XLU) extraction
        r = jax.nn.sigmoid(gi_t[:, 0:Hp] + gh[:, 0:Hp])
        z = jax.nn.sigmoid(gi_t[:, Hp:2 * Hp] + gh[:, Hp:2 * Hp])
        n = jnp.tanh(gi_t[:, 2 * Hp:3 * Hp] + r * (gh[:, 2 * Hp:3 * Hp] + bhn))
        h_new = (1.0 - z) * n + z * h
        # packed-sequence semantics: only rows with length > t are updated
        return h + m * (h_new - h)

    h_f = jnp.zeros((Bp, Hp), jnp.float32)
    h_b = jnp.zeros((Bp, Hp), jnp.float32)

    # Fused forward + backward recurrence, fully unrolled (S is a small static
    # constant) so the two independent directions interleave on MXU/VPU/EUP.
    for i in range(S):
        tf = i
        tb = S - 1 - i
        rows_f = pl.ds(tf * Bp, Bp)
        rows_b = pl.ds(tb * Bp, Bp)
        h_f = gru_step(h_f, gi_f_ref[rows_f, :], whh_f, bhn_f, mask_ref[rows_f, :])
        h_b = gru_step(h_b, gi_b_ref[rows_b, :], whh_b, bhn_b, mask_ref[rows_b, :])

    h_fwd_ref[...] = h_f
    h_bwd_ref[...] = h_b
    # hidden[-1] for (n_layers=1, bidirectional=True) is the backward final hidden.
    fc_ref[...] = jnp.dot(h_b, wfc_ref[...],
                          preferred_element_type=jnp.float32) + bfc_ref[...]


# -----------------------------------------------------------------------------
# Parameter initialization (deterministic, shapes match the nn.Module)
# -----------------------------------------------------------------------------
def init_params(key, input_size, hidden_size, output_size):
    H = hidden_size
    ks = jax.random.split(key, 12)
    bound = 1.0 / math.sqrt(H)

    def u(k, shape):
        return jax.random.uniform(k, shape, jnp.float32, -bound, bound)

    return dict(
        embedding=jax.random.normal(ks[0], (input_size, H), jnp.float32),   # nn.Embedding ~ N(0,1)
        # GRU layer 0, forward direction (PyTorch gate order r | z | n)
        w_ih_f=u(ks[1], (3 * H, H)), w_hh_f=u(ks[2], (3 * H, H)),
        b_ih_f=u(ks[3], (3 * H,)),   b_hh_f=u(ks[4], (3 * H,)),
        # GRU layer 0, backward direction
        w_ih_b=u(ks[5], (3 * H, H)), w_hh_b=u(ks[6], (3 * H, H)),
        b_ih_b=u(ks[7], (3 * H,)),   b_hh_b=u(ks[8], (3 * H,)),
        # fc
        w_fc=u(ks[9], (output_size, H)), b_fc=u(ks[10], (output_size,)),
    )


# -----------------------------------------------------------------------------
# Weight repacking: gate-blocked, lane-padded matrices + folded biases
# -----------------------------------------------------------------------------
def _prep_gru_dir(w_ih, w_hh, b_ih, b_hh, H):
    Hp = HP
    wih = jnp.zeros((H, 3 * Hp), jnp.float32)      # gate g at cols [g*Hp, g*Hp+H)
    whh = jnp.zeros((Hp, 3 * Hp), jnp.float32)     # rows >= H zero (padded h lanes)
    bi = jnp.zeros((1, 3 * Hp), jnp.float32)
    bhn = jnp.zeros((1, Hp), jnp.float32)
    for g in range(3):
        wih = wih.at[:, g * Hp:g * Hp + H].set(w_ih[g * H:(g + 1) * H, :].T)
        whh = whh.at[:H, g * Hp:g * Hp + H].set(w_hh[g * H:(g + 1) * H, :].T)
    # fold b_ih + b_hh for r and z; the n gate keeps b_hh separate (scaled by r)
    bi = bi.at[0, 0:H].set(b_ih[0:H] + b_hh[0:H])
    bi = bi.at[0, Hp:Hp + H].set(b_ih[H:2 * H] + b_hh[H:2 * H])
    bi = bi.at[0, 2 * Hp:2 * Hp + H].set(b_ih[2 * H:3 * H])
    bhn = bhn.at[0, 0:H].set(b_hh[2 * H:3 * H])
    return wih, whh, bi, bhn


# -----------------------------------------------------------------------------
# Wrapper (glue in plain JAX: embedding gather, the buggy `.view`, padding,
# weight repacking)
# -----------------------------------------------------------------------------
def rnn_classifier_forward(params, input_ids, seq_lengths):
    B, S = input_ids.shape
    H = params["embedding"].shape[1]
    O = params["w_fc"].shape[0]
    Hp = HP
    Op = HP
    Bp = max(8, ((B + 7) // 8) * 8)          # sublane-pad the batch

    emb = jnp.take(params["embedding"], input_ids, axis=0)     # (B, S, H)
    # replicate torch `emb.view(-1, emb.shape[0], hidden_size)` exactly:
    # a flat row-major reinterpretation to (S, B, H), NOT a transpose.
    x = emb.reshape(S, B, H)
    x_p = jnp.zeros((S, Bp, H), jnp.float32).at[:, :B, :].set(x)
    x_flat = x_p.reshape(S * Bp, H)

    # packed-sequence validity mask, precomputed once (padded rows get length 0)
    lens_p = jnp.zeros((Bp,), jnp.int32).at[:B].set(seq_lengths.astype(jnp.int32))
    t_idx = jnp.arange(S, dtype=jnp.int32)
    mask = (lens_p[None, :] > t_idx[:, None]).astype(jnp.float32)        # (S, Bp)
    mask_full = jnp.broadcast_to(mask[:, :, None], (S, Bp, Hp)).reshape(S * Bp, Hp)

    wih_f, whh_f, bi_f, bhn_f = _prep_gru_dir(params["w_ih_f"], params["w_hh_f"],
                                              params["b_ih_f"], params["b_hh_f"], H)
    wih_b, whh_b, bi_b, bhn_b = _prep_gru_dir(params["w_ih_b"], params["w_hh_b"],
                                              params["b_ih_b"], params["b_hh_b"], H)

    wfc = jnp.zeros((Hp, Op), jnp.float32).at[:H, :O].set(params["w_fc"].T)
    bfc = jnp.zeros((1, Op), jnp.float32).at[0, :O].set(params["b_fc"])

    vmem = pl.BlockSpec(memory_space=pltpu.MemorySpace.VMEM)
    kernel_args = (x_flat, mask_full,
                   wih_f, whh_f, bi_f, bhn_f,
                   wih_b, whh_b, bi_b, bhn_b,
                   wfc, bfc)

    h_f, h_b, fc_pad = pl.pallas_call(
        _gru_bidir_fc_kernel,
        out_shape=(jax.ShapeDtypeStruct((Bp, Hp), jnp.float32),
                   jax.ShapeDtypeStruct((Bp, Hp), jnp.float32),
                   jax.ShapeDtypeStruct((Bp, Op), jnp.float32)),
        in_specs=[vmem] * len(kernel_args),
        out_specs=(vmem, vmem, vmem),
        scratch_shapes=[pltpu.VMEM((S * Bp, 3 * Hp), jnp.float32),   # gi forward
                        pltpu.VMEM((S * Bp, 3 * Hp), jnp.float32)],  # gi backward
    )(*kernel_args)

    fc_out = fc_pad[:B, :O]
    hidden = jnp.stack([h_f[:B, :H], h_b[:B, :H]], axis=0)      # (n_layers*n_dir, B, H)
    return fc_out, hidden


# -----------------------------------------------------------------------------
# Pure-JAX reference (same math) for a correctness check
# -----------------------------------------------------------------------------
def _gru_dir_ref(x, lens, w_ih, w_hh, b_ih, b_hh, reverse):
    S, B, H = x.shape
    h = jnp.zeros((B, H), jnp.float32)
    ts = range(S - 1, -1, -1) if reverse else range(S)
    for t in ts:
        gi = x[t] @ w_ih.T + b_ih
        gh = h @ w_hh.T + b_hh
        r = jax.nn.sigmoid(gi[:, :H] + gh[:, :H])
        z = jax.nn.sigmoid(gi[:, H:2 * H] + gh[:, H:2 * H])
        n = jnp.tanh(gi[:, 2 * H:] + r * gh[:, 2 * H:])
        h_new = (1.0 - z) * n + z * h
        valid = (lens > t).reshape(B, 1)
        h = jnp.where(valid, h_new, h)
    return h


def rnn_classifier_reference(params, input_ids, seq_lengths):
    B, S = input_ids.shape
    H = params["embedding"].shape[1]
    emb = jnp.take(params["embedding"], input_ids, axis=0)
    x = emb.reshape(S, B, H)
    lens = seq_lengths.astype(jnp.int32)
    h_b = _gru_dir_ref(x, lens, params["w_ih_b"], params["w_hh_b"],
                       params["b_ih_b"], params["b_hh_b"], reverse=True)
    return h_b @ params["w_fc"].T + params["b_fc"]


if __name__ == "__main__":
    input_size, hidden_size, output_size = 128, 32, 18   # ASCII vocab, H=32, 18 classes
    B, S = 4, 8

    key = jax.random.PRNGKey(0)
    pkey, ikey = jax.random.split(key)
    params = init_params(pkey, input_size, hidden_size, output_size)

    input_ids = jax.random.randint(ikey, (B, S), 0, input_size, dtype=jnp.int32)
    # pack_padded_sequence requires lengths sorted descending
    seq_lengths = jnp.array([8, 6, 5, 3], dtype=jnp.int32)

    fc_out, hidden = rnn_classifier_forward(params, input_ids, seq_lengths)
    jax.block_until_ready(fc_out)

    ref = rnn_classifier_reference(params, input_ids, seq_lengths)
    assert fc_out.shape == (B, output_size)
    assert hidden.shape == (2, B, hidden_size)
    assert jnp.allclose(fc_out, ref, atol=1e-4, rtol=1e-3), (fc_out, ref)

    print("KERNEL_OK")
</pallas_src>

<mosaic_0001>
module attributes {stable_mosaic.version = 11 : i64} {
  func.func @_gru_bidir_fc_kernel(%arg0: memref<64x32xf32, #tpu.memory_space<vmem>>, %arg1: memref<64x128xf32, #tpu.memory_space<vmem>>, %arg2: memref<32x384xf32, #tpu.memory_space<vmem>>, %arg3: memref<128x384xf32, #tpu.memory_space<vmem>>, %arg4: memref<1x384xf32, #tpu.memory_space<vmem>>, %arg5: memref<1x128xf32, #tpu.memory_space<vmem>>, %arg6: memref<32x384xf32, #tpu.memory_space<vmem>>, %arg7: memref<128x384xf32, #tpu.memory_space<vmem>>, %arg8: memref<1x384xf32, #tpu.memory_space<vmem>>, %arg9: memref<1x128xf32, #tpu.memory_space<vmem>>, %arg10: memref<128x128xf32, #tpu.memory_space<vmem>>, %arg11: memref<1x128xf32, #tpu.memory_space<vmem>>, %arg12: memref<8x128xf32, #tpu.memory_space<vmem>>, %arg13: memref<8x128xf32, #tpu.memory_space<vmem>>, %arg14: memref<8x128xf32, #tpu.memory_space<vmem>>, %arg15: memref<64x384xf32, #tpu.memory_space<vmem>>, %arg16: memref<64x384xf32, #tpu.memory_space<vmem>>) attributes {dimension_semantics = [], scalar_prefetch = 0 : i64, scratch_operands = 2 : i64, tpu.core_type = #tpu.core_type<tc>} {
    %c0 = arith.constant 0 : index
    %c0_0 = arith.constant 0 : index
    %0 = vector.load %arg0[%c0, %c0_0] : memref<64x32xf32, #tpu.memory_space<vmem>>, vector<64x32xf32>
    %c0_1 = arith.constant 0 : index
    %c0_2 = arith.constant 0 : index
    %1 = vector.load %arg2[%c0_1, %c0_2] : memref<32x384xf32, #tpu.memory_space<vmem>>, vector<32x384xf32>
    %cst = arith.constant dense<0.000000e+00> : vector<64x384xf32>
    %2 = tpu.matmul %0, %1, %cst {dimension_numbers = #tpu.dot_dimension_numbers<[1], [0], [0], [1], [0, 0, 1, 1], [], []>} : vector<64x32xf32>, vector<32x384xf32>, vector<64x384xf32> -> vector<64x384xf32>
    %c0_3 = arith.constant 0 : index
    %c0_4 = arith.constant 0 : index
    %3 = vector.load %arg4[%c0_3, %c0_4] : memref<1x384xf32, #tpu.memory_space<vmem>>, vector<1x384xf32>
    %4 = vector.broadcast %3 : vector<1x384xf32> to vector<64x384xf32>
    %5 = arith.addf %2, %4 : vector<64x384xf32>
    %c0_5 = arith.constant 0 : index
    %c0_6 = arith.constant 0 : index
    %6 = vector.load %arg15[%c0_5, %c0_6] : memref<64x384xf32, #tpu.memory_space<vmem>>, vector<64x384xf32>
    tpu.vector_store %arg15[%c0_5, %c0_6], %5 {strides = array<i32>} : memref<64x384xf32, #tpu.memory_space<vmem>>, vector<64x384xf32>,
    %c0_7 = arith.constant 0 : index
    %c0_8 = arith.constant 0 : index
    %7 = vector.load %arg6[%c0_7, %c0_8] : memref<32x384xf32, #tpu.memory_space<vmem>>, vector<32x384xf32>
    %cst_9 = arith.constant dense<0.000000e+00> : vector<64x384xf32>
    %8 = tpu.matmul %0, %7, %cst_9 {dimension_numbers = #tpu.dot_dimension_numbers<[1], [0], [0], [1], [0, 0, 1, 1], [], []>} : vector<64x32xf32>, vector<32x384xf32>, vector<64x384xf32> -> vector<64x384xf32>
    %c0_10 = arith.constant 0 : index
    %c0_11 = arith.constant 0 : index
    %9 = vector.load %arg8[%c0_10, %c0_11] : memref<1x384xf32, #tpu.memory_space<vmem>>, vector<1x384xf32>
    %10 = vector.broadcast %9 : vector<1x384xf32> to vector<64x384xf32>
    %11 = arith.addf %8, %10 : vector<64x384xf32>
    %c0_12 = arith.constant 0 : index
    %c0_13 = arith.constant 0 : index
    %12 = vector.load %arg16[%c0_12, %c0_13] : memref<64x384xf32, #tpu.memory_space<vmem>>, vector<64x384xf32>
    tpu.vector_store %arg16[%c0_12, %c0_13], %11 {strides = array<i32>} : memref<64x384xf32, #tpu.memory_space<vmem>>, vector<64x384xf32>,
    %c0_14 = arith.constant 0 : index
    %c0_15 = arith.constant 0 : index
    %13 = vector.load %arg3[%c0_14, %c0_15] : memref<128x384xf32, #tpu.memory_space<vmem>>, vector<128x384xf32>
    %c0_16 = arith.constant 0 : index
    %c0_17 = arith.constant 0 : index
    %14 = vector.load %arg7[%c0_16, %c0_17] : memref<128x384xf32, #tpu.memory_space<vmem>>, vector<128x384xf32>
    %c0_18 = arith.constant 0 : index
    %c0_19 = arith.constant 0 : index
    %15 = vector.load %arg5[%c0_18, %c0_19] : memref<1x128xf32, #tpu.memory_space<vmem>>, vector<1x128xf32>
    %c0_20 = arith.constant 0 : index
    %c0_21 = arith.constant 0 : index
    %16 = vector.load %arg9[%c0_20, %c0_21] : memref<1x128xf32, #tpu.memory_space<vmem>>, vector<1x128xf32>
    %cst_22 = arith.constant 0.000000e+00 : f32
    %17 = vector.broadcast %cst_22 : f32 to vector<8x128xf32>
    %cst_23 = arith.constant 0.000000e+00 : f32
    %18 = vector.broadcast %cst_23 : f32 to vector<8x128xf32>
    %c0_24 = arith.constant 0 : index
    %c0_25 = arith.constant 0 : index
    %19 = vector.load %arg15[%c0_24, %c0_25] : memref<64x384xf32, #tpu.memory_space<vmem>>, vector<8x384xf32>
    %c0_26 = arith.constant 0 : index
    %c0_27 = arith.constant 0 : index
    %20 = vector.load %arg1[%c0_26, %c0_27] : memref<64x128xf32, #tpu.memory_space<vmem>>, vector<8x128xf32>
    %cst_28 = arith.constant dense<0.000000e+00> : vector<8x384xf32>
    %21 = tpu.matmul %17, %13, %cst_28 {dimension_numbers = #tpu.dot_dimension_numbers<[1], [0], [0], [1], [0, 0, 1, 1], [], []>} : vector<8x128xf32>, vector<128x384xf32>, vector<8x384xf32> -> vector<8x384xf32>
    %22 = vector.extract_strided_slice %19 {offsets = [0, 0], sizes = [8, 128], strides = [1, 1]} : vector<8x384xf32> to vector<8x128xf32>
    %23 = vector.extract_strided_slice %21 {offsets = [0, 0], sizes = [8, 128], strides = [1, 1]} : vector<8x384xf32> to vector<8x128xf32>
    %24 = arith.addf %22, %23 : vector<8x128xf32>
    %25 = arith.negf %24 : vector<8x128xf32>
    %26 = math.exp %25 : vector<8x128xf32>
    %cst_29 = arith.constant 1.000000e+00 : f32
    %27 = vector.broadcast %cst_29 : f32 to vector<8x128xf32>
    %28 = arith.addf %27, %26 : vector<8x128xf32>
    %29 = arith.divf %27, %28 : vector<8x128xf32>
    %30 = vector.extract_strided_slice %19 {offsets = [0, 128], sizes = [8, 128], strides = [1, 1]} : vector<8x384xf32> to vector<8x128xf32>
    %31 = vector.extract_strided_slice %21 {offsets = [0, 128], sizes = [8, 128], strides = [1, 1]} : vector<8x384xf32> to vector<8x128xf32>
    %32 = arith.addf %30, %31 : vector<8x128xf32>
    %33 = arith.negf %32 : vector<8x128xf32>
    %34 = math.exp %33 : vector<8x128xf32>
    %cst_30 = arith.constant 1.000000e+00 : f32
    %35 = vector.broadcast %cst_30 : f32 to vector<8x128xf32>
    %36 = arith.addf %35, %34 : vector<8x128xf32>
    %37 = arith.divf %35, %36 : vector<8x128xf32>
    %38 = vector.extract_strided_slice %19 {offsets = [0, 256], sizes = [8, 128], strides = [1, 1]} : vector<8x384xf32> to vector<8x128xf32>
    %39 = vector.extract_strided_slice %21 {offsets = [0, 256], sizes = [8, 128], strides = [1, 1]} : vector<8x384xf32> to vector<8x128xf32>
    %40 = vector.broadcast %15 : vector<1x128xf32> to vector<8x128xf32>
    %41 = arith.addf %39, %40 : vector<8x128xf32>
    %42 = arith.mulf %29, %41 : vector<8x128xf32>
    %43 = arith.addf %38, %42 : vector<8x128xf32>
    %44 = math.tanh %43 : vector<8x128xf32>
    %cst_31 = arith.constant 1.000000e+00 : f32
    %45 = vector.broadcast %cst_31 : f32 to vector<8x128xf32>
    %46 = arith.subf %45, %37 : vector<8x128xf32>
    %47 = arith.mulf %46, %44 : vector<8x128xf32>
    %48 = arith.mulf %37, %17 : vector<8x128xf32>
    %49 = arith.addf %47, %48 : vector<8x128xf32>
    %50 = arith.subf %49, %17 : vector<8x128xf32>
    %51 = arith.mulf %20, %50 : vector<8x128xf32>
    %52 = arith.addf %17, %51 : vector<8x128xf32>
    %c56 = arith.constant 56 : index
    %c0_32 = arith.constant 0 : index
    %53 = vector.load %arg16[%c56, %c0_32] : memref<64x384xf32, #tpu.memory_space<vmem>>, vector<8x384xf32>
    %c56_33 = arith.constant 56 : index
    %c0_34 = arith.constant 0 : index
    %54 = vector.load %arg1[%c56_33, %c0_34] : memref<64x128xf32, #tpu.memory_space<vmem>>, vector<8x128xf32>
    %cst_35 = arith.constant dense<0.000000e+00> : vector<8x384xf32>
    %55 = tpu.matmul %18, %14, %cst_35 {dimension_numbers = #tpu.dot_dimension_numbers<[1], [0], [0], [1], [0, 0, 1, 1], [], []>} : vector<8x128xf32>, vector<128x384xf32>, vector<8x384xf32> -> vector<8x384xf32>
    %56 = vector.extract_strided_slice %53 {offsets = [0, 0], sizes = [8, 128], strides = [1, 1]} : vector<8x384xf32> to vector<8x128xf32>
    %57 = vector.extract_strided_slice %55 {offsets = [0, 0], sizes = [8, 128], strides = [1, 1]} : vector<8x384xf32> to vector<8x128xf32>
    %58 = arith.addf %56, %57 : vector<8x128xf32>
    %59 = arith.negf %58 : vector<8x128xf32>
    %60 = math.exp %59 : vector<8x128xf32>
    %cst_36 = arith.constant 1.000000e+00 : f32
    %61 = vector.broadcast %cst_36 : f32 to vector<8x128xf32>
    %62 = arith.addf %61, %60 : vector<8x128xf32>
    %63 = arith.divf %61, %62 : vector<8x128xf32>
    %64 = vector.extract_strided_slice %53 {offsets = [0, 128], sizes = [8, 128], strides = [1, 1]} : vector<8x384xf32> to vector<8x128xf32>
    %65 = vector.extract_strided_slice %55 {offsets = [0, 128], sizes = [8, 128], strides = [1, 1]} : vector<8x384xf32> to vector<8x128xf32>
    %66 = arith.addf %64, %65 : vector<8x128xf32>
    %67 = arith.negf %66 : vector<8x128xf32>
    %68 = math.exp %67 : vector<8x128xf32>
    %cst_37 = arith.constant 1.000000e+00 : f32
    %69 = vector.broadcast %cst_37 : f32 to vector<8x128xf32>
    %70 = arith.addf %69, %68 : vector<8x128xf32>
    %71 = arith.divf %69, %70 : vector<8x128xf32>
    %72 = vector.extract_strided_slice %53 {offsets = [0, 256], sizes = [8, 128], strides = [1, 1]} : vector<8x384xf32> to vector<8x128xf32>
    %73 = vector.extract_strided_slice %55 {offsets = [0, 256], sizes = [8, 128], strides = [1, 1]} : vector<8x384xf32> to vector<8x128xf32>
    %74 = vector.broadcast %16 : vector<1x128xf32> to vector<8x128xf32>
    %75 = arith.addf %73, %74 : vector<8x128xf32>
    %76 = arith.mulf %63, %75 : vector<8x128xf32>
    %77 = arith.addf %72, %76 : vector<8x128xf32>
    %78 = math.tanh %77 : vector<8x128xf32>
    %cst_38 = arith.constant 1.000000e+00 : f32
    %79 = vector.broadcast %cst_38 : f32 to vector<8x128xf32>
    %80 = arith.subf %79, %71 : vector<8x128xf32>
    %81 = arith.mulf %80, %78 : vector<8x128xf32>
    %82 = arith.mulf %71, %18 : vector<8x128xf32>
    %83 = arith.addf %81, %82 : vector<8x128xf32>
    %84 = arith.subf %83, %18 : vector<8x128xf32>
    %85 = arith.mulf %54, %84 : vector<8x128xf32>
    %86 = arith.addf %18, %85 : vector<8x128xf32>
    %c8 = arith.constant 8 : index
    %c0_39 = arith.constant 0 : index
    %87 = vector.load %arg15[%c8, %c0_39] : memref<64x384xf32, #tpu.memory_space<vmem>>, vector<8x384xf32>
    %c8_40 = arith.constant 8 : index
    %c0_41 = arith.constant 0 : index
    %88 = vector.load %arg1[%c8_40, %c0_41] : memref<64x128xf32, #tpu.memory_space<vmem>>, vector<8x128xf32>
    %cst_42 = arith.constant dense<0.000000e+00> : vector<8x384xf32>
    %89 = tpu.matmul %52, %13, %cst_42 {dimension_numbers = #tpu.dot_dimension_numbers<[1], [0], [0], [1], [0, 0, 1, 1], [], []>} : vector<8x128xf32>, vector<128x384xf32>, vector<8x384xf32> -> vector<8x384xf32>
    %90 = vector.extract_strided_slice %87 {offsets = [0, 0], sizes = [8, 128], strides = [1, 1]} : vector<8x384xf32> to vector<8x128xf32>
    %91 = vector.extract_strided_slice %89 {offsets = [0, 0], sizes = [8, 128], strides = [1, 1]} : vector<8x384xf32> to vector<8x128xf32>
    %92 = arith.addf %90, %91 : vector<8x128xf32>
    %93 = arith.negf %92 : vector<8x128xf32>
    %94 = math.exp %93 : vector<8x128xf32>
    %cst_43 = arith.constant 1.000000e+00 : f32
    %95 = vector.broadcast %cst_43 : f32 to vector<8x128xf32>
    %96 = arith.addf %95, %94 : vector<8x128xf32>
    %97 = arith.divf %95, %96 : vector<8x128xf32>
    %98 = vector.extract_strided_slice %87 {offsets = [0, 128], sizes = [8, 128], strides = [1, 1]} : vector<8x384xf32> to vector<8x128xf32>
    %99 = vector.extract_strided_slice %89 {offsets = [0, 128], sizes = [8, 128], strides = [1, 1]} : vector<8x384xf32> to vector<8x128xf32>
    %100 = arith.addf %98, %99 : vector<8x128xf32>
    %101 = arith.negf %100 : vector<8x128xf32>
    %102 = math.exp %101 : vector<8x128xf32>
    %cst_44 = arith.constant 1.000000e+00 : f32
    %103 = vector.broadcast %cst_44 : f32 to vector<8x128xf32>
    %104 = arith.addf %103, %102 : vector<8x128xf32>
    %105 = arith.divf %103, %104 : vector<8x128xf32>
    %106 = vector.extract_strided_slice %87 {offsets = [0, 256], sizes = [8, 128], strides = [1, 1]} : vector<8x384xf32> to vector<8x128xf32>
    %107 = vector.extract_strided_slice %89 {offsets = [0, 256], sizes = [8, 128], strides = [1, 1]} : vector<8x384xf32> to vector<8x128xf32>
    %108 = vector.broadcast %15 : vector<1x128xf32> to vector<8x128xf32>
    %109 = arith.addf %107, %108 : vector<8x128xf32>
    %110 = arith.mulf %97, %109 : vector<8x128xf32>
    %111 = arith.addf %106, %110 : vector<8x128xf32>
    %112 = math.tanh %111 : vector<8x128xf32>
    %cst_45 = arith.constant 1.000000e+00 : f32
    %113 = vector.broadcast %cst_45 : f32 to vector<8x128xf32>
    %114 = arith.subf %113, %105 : vector<8x128xf32>
    %115 = arith.mulf %114, %112 : vector<8x128xf32>
    %116 = arith.mulf %105, %52 : vector<8x128xf32>
    %117 = arith.addf %115, %116 : vector<8x128xf32>
    %118 = arith.subf %117, %52 : vector<8x128xf32>
    %119 = arith.mulf %88, %118 : vector<8x128xf32>
    %120 = arith.addf %52, %119 : vector<8x128xf32>
    %c48 = arith.constant 48 : index
    %c0_46 = arith.constant 0 : index
    %121 = vector.load %arg16[%c48, %c0_46] : memref<64x384xf32, #tpu.memory_space<vmem>>, vector<8x384xf32>
    %c48_47 = arith.constant 48 : index
    %c0_48 = arith.constant 0 : index
    %122 = vector.load %arg1[%c48_47, %c0_48] : memref<64x128xf32, #tpu.memory_space<vmem>>, vector<8x128xf32>
    %cst_49 = arith.constant dense<0.000000e+00> : vector<8x384xf32>
    %123 = tpu.matmul %86, %14, %cst_49 {dimension_numbers = #tpu.dot_dimension_numbers<[1], [0], [0], [1], [0, 0, 1, 1], [], []>} : vector<8x128xf32>, vector<128x384xf32>, vector<8x384xf32> -> vector<8x384xf32>
    %124 = vector.extract_strided_slice %121 {offsets = [0, 0], sizes = [8, 128], strides = [1, 1]} : vector<8x384xf32> to vector<8x128xf32>
    %125 = vector.extract_strided_slice %123 {offsets = [0, 0], sizes = [8, 128], strides = [1, 1]} : vector<8x384xf32> to vector<8x128xf32>
    %126 = arith.addf %124, %125 : vector<8x128xf32>
    %127 = arith.negf %126 : vector<8x128xf32>
    %128 = math.exp %127 : vector<8x128xf32>
    %cst_50 = arith.constant 1.000000e+00 : f32
    %129 = vector.broadcast %cst_50 : f32 to vector<8x128xf32>
    %130 = arith.addf %129, %128 : vector<8x128xf32>
    %131 = arith.divf %129, %130 : vector<8x128xf32>
    %132 = vector.extract_strided_slice %121 {offsets = [0, 128], sizes = [8, 128], strides = [1, 1]} : vector<8x384xf32> to vector<8x128xf32>
    %133 = vector.extract_strided_slice %123 {offsets = [0, 128], sizes = [8, 128], strides = [1, 1]} : vector<8x384xf32> to vector<8x128xf32>
    %134 = arith.addf %132, %133 : vector<8x128xf32>
    %135 = arith.negf %134 : vector<8x128xf32>
    %136 = math.exp %135 : vector<8x128xf32>
    %cst_51 = arith.constant 1.000000e+00 : f32
    %137 = vector.broadcast %cst_51 : f32 to vector<8x128xf32>
    %138 = arith.addf %137, %136 : vector<8x128xf32>
    %139 = arith.divf %137, %138 : vector<8x128xf32>
    %140 = vector.extract_strided_slice %121 {offsets = [0, 256], sizes = [8, 128], strides = [1, 1]} : vector<8x384xf32> to vector<8x128xf32>
    %141 = vector.extract_strided_slice %123 {offsets = [0, 256], sizes = [8, 128], strides = [1, 1]} : vector<8x384xf32> to vector<8x128xf32>
    %142 = vector.broadcast %16 : vector<1x128xf32> to vector<8x128xf32>
    %143 = arith.addf %141, %142 : vector<8x128xf32>
    %144 = arith.mulf %131, %143 : vector<8x128xf32>
    %145 = arith.addf %140, %144 : vector<8x128xf32>
    %146 = math.tanh %145 : vector<8x128xf32>
    %cst_52 = arith.constant 1.000000e+00 : f32
    %147 = vector.broadcast %cst_52 : f32 to vector<8x128xf32>
    %148 = arith.subf %147, %139 : vector<8x128xf32>
    %149 = arith.mulf %148, %146 : vector<8x128xf32>
    %150 = arith.mulf %139, %86 : vector<8x128xf32>
    %151 = arith.addf %149, %150 : vector<8x128xf32>
    %152 = arith.subf %151, %86 : vector<8x128xf32>
    %153 = arith.mulf %122, %152 : vector<8x128xf32>
    %154 = arith.addf %86, %153 : vector<8x128xf32>
    %c16 = arith.constant 16 : index
    %c0_53 = arith.constant 0 : index
    %155 = vector.load %arg15[%c16, %c0_53] : memref<64x384xf32, #tpu.memory_space<vmem>>, vector<8x384xf32>
    %c16_54 = arith.constant 16 : index
    %c0_55 = arith.constant 0 : index
    %156 = vector.load %arg1[%c16_54, %c0_55] : memref<64x128xf32, #tpu.memory_space<vmem>>, vector<8x128xf32>
    %cst_56 = arith.constant dense<0.000000e+00> : vector<8x384xf32>
    %157 = tpu.matmul %120, %13, %cst_56 {dimension_numbers = #tpu.dot_dimension_numbers<[1], [0], [0], [1], [0, 0, 1, 1], [], []>} : vector<8x128xf32>, vector<128x384xf32>, vector<8x384xf32> -> vector<8x384xf32>
    %158 = vector.extract_strided_slice %155 {offsets = [0, 0], sizes = [8, 128], strides = [1, 1]} : vector<8x384xf32> to vector<8x128xf32>
    %159 = vector.extract_strided_slice %157 {offsets = [0, 0], sizes = [8, 128], strides = [1, 1]} : vector<8x384xf32> to vector<8x128xf32>
    %160 = arith.addf %158, %159 : vector<8x128xf32>
    %161 = arith.negf %160 : vector<8x128xf32>
    %162 = math.exp %161 : vector<8x128xf32>
    %cst_57 = arith.constant 1.000000e+00 : f32
    %163 = vector.broadcast %cst_57 : f32 to vector<8x128xf32>
    %164 = arith.addf %163, %162 : vector<8x128xf32>
    %165 = arith.divf %163, %164 : vector<8x128xf32>
    %166 = vector.extract_strided_slice %155 {offsets = [0, 128], sizes = [8, 128], strides = [1, 1]} : vector<8x384xf32> to vector<8x128xf32>
    %167 = vector.extract_strided_slice %157 {offsets = [0, 128], sizes = [8, 128], strides = [1, 1]} : vector<8x384xf32> to vector<8x128xf32>
    %168 = arith.addf %166, %167 : vector<8x128xf32>
    %169 = arith.negf %168 : vector<8x128xf32>
    %170 = math.exp %169 : vector<8x128xf32>
    %cst_58 = arith.constant 1.000000e+00 : f32
    %171 = vector.broadcast %cst_58 : f32 to vector<8x128xf32>
    %172 = arith.addf %171, %170 : vector<8x128xf32>
    %173 = arith.divf %171, %172 : vector<8x128xf32>
    %174 = vector.extract_strided_slice %155 {offsets = [0, 256], sizes = [8, 128], strides = [1, 1]} : vector<8x384xf32> to vector<8x128xf32>
    %175 = vector.extract_strided_slice %157 {offsets = [0, 256], sizes = [8, 128], strides = [1, 1]} : vector<8x384xf32> to vector<8x128xf32>
    %176 = vector.broadcast %15 : vector<1x128xf32> to vector<8x128xf32>
    %177 = arith.addf %175, %176 : vector<8x128xf32>
    %178 = arith.mulf %165, %177 : vector<8x128xf32>
    %179 = arith.addf %174, %178 : vector<8x128xf32>
    %180 = math.tanh %179 : vector<8x128xf32>
    %cst_59 = arith.constant 1.000000e+00 : f32
    %181 = vector.broadcast %cst_59 : f32 to vector<8x128xf32>
    %182 = arith.subf %181, %173 : vector<8x128xf32>
    %183 = arith.mulf %182, %180 : vector<8x128xf32>
    %184 = arith.mulf %173, %120 : vector<8x128xf32>
    %185 = arith.addf %183, %184 : vector<8x128xf32>
    %186 = arith.subf %185, %120 : vector<8x128xf32>
    %187 = arith.mulf %156, %186 : vector<8x128xf32>
    %188 = arith.addf %120, %187 : vector<8x128xf32>
    %c40 = arith.constant 40 : index
    %c0_60 = arith.constant 0 : index
    %189 = vector.load %arg16[%c40, %c0_60] : memref<64x384xf32, #tpu.memory_space<vmem>>, vector<8x384xf32>
    %c40_61 = arith.constant 40 : index
    %c0_62 = arith.constant 0 : index
    %190 = vector.load %arg1[%c40_61, %c0_62] : memref<64x128xf32, #tpu.memory_space<vmem>>, vector<8x128xf32>
    %cst_63 = arith.constant dense<0.000000e+00> : vector<8x384xf32>
    %191 = tpu.matmul %154, %14, %cst_63 {dimension_numbers = #tpu.dot_dimension_numbers<[1], [0], [0], [1], [0, 0, 1, 1], [], []>} : vector<8x128xf32>, vector<128x384xf32>, vector<8x384xf32> -> vector<8x384xf32>
    %192 = vector.extract_strided_slice %189 {offsets = [0, 0], sizes = [8, 128], strides = [1, 1]} : vector<8x384xf32> to vector<8x128xf32>
    %193 = vector.extract_strided_slice %191 {offsets = [0, 0], sizes = [8, 128], strides = [1, 1]} : vector<8x384xf32> to vector<8x128xf32>
    %194 = arith.addf %192, %193 : vector<8x128xf32>
    %195 = arith.negf %194 : vector<8x128xf32>
    %196 = math.exp %195 : vector<8x128xf32>
    %cst_64 = arith.constant 1.000000e+00 : f32
    %197 = vector.broadcast %cst_64 : f32 to vector<8x128xf32>
    %198 = arith.addf %197, %196 : vector<8x128xf32>
    %199 = arith.divf %197, %198 : vector<8x128xf32>
    %200 = vector.extract_strided_slice %189 {offsets = [0, 128], sizes = [8, 128], strides = [1, 1]} : vector<8x384xf32> to vector<8x128xf32>
    %201 = vector.extract_strided_slice %191 {offsets = [0, 128], sizes = [8, 128], strides = [1, 1]} : vector<8x384xf32> to vector<8x128xf32>
    %202 = arith.addf %200, %201 : vector<8x128xf32>
    %203 = arith.negf %202 : vector<8x128xf32>
    %204 = math.exp %203 : vector<8x128xf32>
    %cst_65 = arith.constant 1.000000e+00 : f32
    %205 = vector.broadcast %cst_65 : f32 to vector<8x128xf32>
    %206 = arith.addf %205, %204 : vector<8x128xf32>
    %207 = arith.divf %205, %206 : vector<8x128xf32>
    %208 = vector.extract_strided_slice %189 {offsets = [0, 256], sizes = [8, 128], strides = [1, 1]} : vector<8x384xf32> to vector<8x128xf32>
    %209 = vector.extract_strided_slice %191 {offsets = [0, 256], sizes = [8, 128], strides = [1, 1]} : vector<8x384xf32> to vector<8x128xf32>
    %210 = vector.broadcast %16 : vector<1x128xf32> to vector<8x128xf32>
    %211 = arith.addf %209, %210 : vector<8x128xf32>
    %212 = arith.mulf %199, %211 : vector<8x128xf32>
    %213 = arith.addf %208, %212 : vector<8x128xf32>
    %214 = math.tanh %213 : vector<8x128xf32>
    %cst_66 = arith.constant 1.000000e+00 : f32
    %215 = vector.broadcast %cst_66 : f32 to vector<8x128xf32>
    %216 = arith.subf %215, %207 : vector<8x128xf32>
    %217 = arith.mulf %216, %214 : vector<8x128xf32>
    %218 = arith.mulf %207, %154 : vector<8x128xf32>
    %219 = arith.addf %217, %218 : vector<8x128xf32>
    %220 = arith.subf %219, %154 : vector<8x128xf32>
    %221 = arith.mulf %190, %220 : vector<8x128xf32>
    %222 = arith.addf %154, %221 : vector<8x128xf32>
    %c24 = arith.constant 24 : index
    %c0_67 = arith.constant 0 : index
    %223 = vector.load %arg15[%c24, %c0_67] : memref<64x384xf32, #tpu.memory_space<vmem>>, vector<8x384xf32>
    %c24_68 = arith.constant 24 : index
    %c0_69 = arith.constant 0 : index
    %224 = vector.load %arg1[%c24_68, %c0_69] : memref<64x128xf32, #tpu.memory_space<vmem>>, vector<8x128xf32>
    %cst_70 = arith.constant dense<0.000000e+00> : vector<8x384xf32>
    %225 = tpu.matmul %188, %13, %cst_70 {dimension_numbers = #tpu.dot_dimension_numbers<[1], [0], [0], [1], [0, 0, 1, 1], [], []>} : vector<8x128xf32>, vector<128x384xf32>, vector<8x384xf32> -> vector<8x384xf32>
    %226 = vector.extract_strided_slice %223 {offsets = [0, 0], sizes = [8, 128], strides = [1, 1]} : vector<8x384xf32> to vector<8x128xf32>
    %227 = vector.extract_strided_slice %225 {offsets = [0, 0], sizes = [8, 128], strides = [1, 1]} : vector<8x384xf32> to vector<8x128xf32>
    %228 = arith.addf %226, %227 : vector<8x128xf32>
    %229 = arith.negf %228 : vector<8x128xf32>
    %230 = math.exp %229 : vector<8x128xf32>
    %cst_71 = arith.constant 1.000000e+00 : f32
    %231 = vector.broadcast %cst_71 : f32 to vector<8x128xf32>
    %232 = arith.addf %231, %230 : vector<8x128xf32>
    %233 = arith.divf %231, %232 : vector<8x128xf32>
    %234 = vector.extract_strided_slice %223 {offsets = [0, 128], sizes = [8, 128], strides = [1, 1]} : vector<8x384xf32> to vector<8x128xf32>
    %235 = vector.extract_strided_slice %225 {offsets = [0, 128], sizes = [8, 128], strides = [1, 1]} : vector<8x384xf32> to vector<8x128xf32>
    %236 = arith.addf %234, %235 : vector<8x128xf32>
    %237 = arith.negf %236 : vector<8x128xf32>
    %238 = math.exp %237 : vector<8x128xf32>
    %cst_72 = arith.constant 1.000000e+00 : f32
    %239 = vector.broadcast %cst_72 : f32 to vector<8x128xf32>
    %240 = arith.addf %239, %238 : vector<8x128xf32>
    %241 = arith.divf %239, %240 : vector<8x128xf32>
    %242 = vector.extract_strided_slice %223 {offsets = [0, 256], sizes = [8, 128], strides = [1, 1]} : vector<8x384xf32> to vector<8x128xf32>
    %243 = vector.extract_strided_slice %225 {offsets = [0, 256], sizes = [8, 128], strides = [1, 1]} : vector<8x384xf32> to vector<8x128xf32>
    %244 = vector.broadcast %15 : vector<1x128xf32> to vector<8x128xf32>
    %245 = arith.addf %243, %244 : vector<8x128xf32>
    %246 = arith.mulf %233, %245 : vector<8x128xf32>
    %247 = arith.addf %242, %246 : vector<8x128xf32>
    %248 = math.tanh %247 : vector<8x128xf32>
    %cst_73 = arith.constant 1.000000e+00 : f32
    %249 = vector.broadcast %cst_73 : f32 to vector<8x128xf32>
    %250 = arith.subf %249, %241 : vector<8x128xf32>
    %251 = arith.mulf %250, %248 : vector<8x128xf32>
    %252 = arith.mulf %241, %188 : vector<8x128xf32>
    %253 = arith.addf %251, %252 : vector<8x128xf32>
    %254 = arith.subf %253, %188 : vector<8x128xf32>
    %255 = arith.mulf %224, %254 : vector<8x128xf32>
    %256 = arith.addf %188, %255 : vector<8x128xf32>
    %c32 = arith.constant 32 : index
    %c0_74 = arith.constant 0 : index
    %257 = vector.load %arg16[%c32, %c0_74] : memref<64x384xf32, #tpu.memory_space<vmem>>, vector<8x384xf32>
    %c32_75 = arith.constant 32 : index
    %c0_76 = arith.constant 0 : index
    %258 = vector.load %arg1[%c32_75, %c0_76] : memref<64x128xf32, #tpu.memory_space<vmem>>, vector<8x128xf32>
    %cst_77 = arith.constant dense<0.000000e+00> : vector<8x384xf32>
    %259 = tpu.matmul %222, %14, %cst_77 {dimension_numbers = #tpu.dot_dimension_numbers<[1], [0], [0], [1], [0, 0, 1, 1], [], []>} : vector<8x128xf32>, vector<128x384xf32>, vector<8x384xf32> -> vector<8x384xf32>
    %260 = vector.extract_strided_slice %257 {offsets = [0, 0], sizes = [8, 128], strides = [1, 1]} : vector<8x384xf32> to vector<8x128xf32>
    %261 = vector.extract_strided_slice %259 {offsets = [0, 0], sizes = [8, 128], strides = [1, 1]} : vector<8x384xf32> to vector<8x128xf32>
    %262 = arith.addf %260, %261 : vector<8x128xf32>
    %263 = arith.negf %262 : vector<8x128xf32>
    %264 = math.exp %263 : vector<8x128xf32>
    %cst_78 = arith.constant 1.000000e+00 : f32
    %265 = vector.broadcast %cst_78 : f32 to vector<8x128xf32>
    %266 = arith.addf %265, %264 : vector<8x128xf32>
    %267 = arith.divf %265, %266 : vector<8x128xf32>
    %268 = vector.extract_strided_slice %257 {offsets = [0, 128], sizes = [8, 128], strides = [1, 1]} : vector<8x384xf32> to vector<8x128xf32>
    %269 = vector.extract_strided_slice %259 {offsets = [0, 128], sizes = [8, 128], strides = [1, 1]} : vector<8x384xf32> to vector<8x128xf32>
    %270 = arith.addf %268, %269 : vector<8x128xf32>
    %271 = arith.negf %270 : vector<8x128xf32>
    %272 = math.exp %271 : vector<8x128xf32>
    %cst_79 = arith.constant 1.000000e+00 : f32
    %273 = vector.broadcast %cst_79 : f32 to vector<8x128xf32>
    %274 = arith.addf %273, %272 : vector<8x128xf32>
    %275 = arith.divf %273, %274 : vector<8x128xf32>
    %276 = vector.extract_strided_slice %257 {offsets = [0, 256], sizes = [8, 128], strides = [1, 1]} : vector<8x384xf32> to vector<8x128xf32>
    %277 = vector.extract_strided_slice %259 {offsets = [0, 256], sizes = [8, 128], strides = [1, 1]} : vector<8x384xf32> to vector<8x128xf32>
    %278 = vector.broadcast %16 : vector<1x128xf32> to vector<8x128xf32>
    %279 = arith.addf %277, %278 : vector<8x128xf32>
    %280 = arith.mulf %267, %279 : vector<8x128xf32>
    %281 = arith.addf %276, %280 : vector<8x128xf32>
    %282 = math.tanh %281 : vector<8x128xf32>
    %cst_80 = arith.constant 1.000000e+00 : f32
    %283 = vector.broadcast %cst_80 : f32 to vector<8x128xf32>
    %284 = arith.subf %283, %275 : vector<8x128xf32>
    %285 = arith.mulf %284, %282 : vector<8x128xf32>
    %286 = arith.mulf %275, %222 : vector<8x128xf32>
    %287 = arith.addf %285, %286 : vector<8x128xf32>
    %288 = arith.subf %287, %222 : vector<8x128xf32>
    %289 = arith.mulf %258, %288 : vector<8x128xf32>
    %290 = arith.addf %222, %289 : vector<8x128xf32>
    %c32_81 = arith.constant 32 : index
    %c0_82 = arith.constant 0 : index
    %291 = vector.load %arg15[%c32_81, %c0_82] : memref<64x384xf32, #tpu.memory_space<vmem>>, vector<8x384xf32>
    %c32_83 = arith.constant 32 : index
    %c0_84 = arith.constant 0 : index
    %292 = vector.load %arg1[%c32_83, %c0_84] : memref<64x128xf32, #tpu.memory_space<vmem>>, vector<8x128xf32>
    %cst_85 = arith.constant dense<0.000000e+00> : vector<8x384xf32>
    %293 = tpu.matmul %256, %13, %cst_85 {dimension_numbers = #tpu.dot_dimension_numbers<[1], [0], [0], [1], [0, 0, 1, 1], [], []>} : vector<8x128xf32>, vector<128x384xf32>, vector<8x384xf32> -> vector<8x384xf32>
    %294 = vector.extract_strided_slice %291 {offsets = [0, 0], sizes = [8, 128], strides = [1, 1]} : vector<8x384xf32> to vector<8x128xf32>
    %295 = vector.extract_strided_slice %293 {offsets = [0, 0], sizes = [8, 128], strides = [1, 1]} : vector<8x384xf32> to vector<8x128xf32>
    %296 = arith.addf %294, %295 : vector<8x128xf32>
    %297 = arith.negf %296 : vector<8x128xf32>
    %298 = math.exp %297 : vector<8x128xf32>
    %cst_86 = arith.constant 1.000000e+00 : f32
    %299 = vector.broadcast %cst_86 : f32 to vector<8x128xf32>
    %300 = arith.addf %299, %298 : vector<8x128xf32>
    %301 = arith.divf %299, %300 : vector<8x128xf32>
    %302 = vector.extract_strided_slice %291 {offsets = [0, 128], sizes = [8, 128], strides = [1, 1]} : vector<8x384xf32> to vector<8x128xf32>
    %303 = vector.extract_strided_slice %293 {offsets = [0, 128], sizes = [8, 128], strides = [1, 1]} : vector<8x384xf32> to vector<8x128xf32>
    %304 = arith.addf %302, %303 : vector<8x128xf32>
    %305 = arith.negf %304 : vector<8x128xf32>
    %306 = math.exp %305 : vector<8x128xf32>
    %cst_87 = arith.constant 1.000000e+00 : f32
    %307 = vector.broadcast %cst_87 : f32 to vector<8x128xf32>
    %308 = arith.addf %307, %306 : vector<8x128xf32>
    %309 = arith.divf %307, %308 : vector<8x128xf32>
    %310 = vector.extract_strided_slice %291 {offsets = [0, 256], sizes = [8, 128], strides = [1, 1]} : vector<8x384xf32> to vector<8x128xf32>
    %311 = vector.extract_strided_slice %293 {offsets = [0, 256], sizes = [8, 128], strides = [1, 1]} : vector<8x384xf32> to vector<8x128xf32>
    %312 = vector.broadcast %15 : vector<1x128xf32> to vector<8x128xf32>
    %313 = arith.addf %311, %312 : vector<8x128xf32>
    %314 = arith.mulf %301, %313 : vector<8x128xf32>
    %315 = arith.addf %310, %314 : vector<8x128xf32>
    %316 = math.tanh %315 : vector<8x128xf32>
    %cst_88 = arith.constant 1.000000e+00 : f32
    %317 = vector.broadcast %cst_88 : f32 to vector<8x128xf32>
    %318 = arith.subf %317, %309 : vector<8x128xf32>
    %319 = arith.mulf %318, %316 : vector<8x128xf32>
    %320 = arith.mulf %309, %256 : vector<8x128xf32>
    %321 = arith.addf %319, %320 : vector<8x128xf32>
    %322 = arith.subf %321, %256 : vector<8x128xf32>
    %323 = arith.mulf %292, %322 : vector<8x128xf32>
    %324 = arith.addf %256, %323 : vector<8x128xf32>
    %c24_89 = arith.constant 24 : index
    %c0_90 = arith.constant 0 : index
    %325 = vector.load %arg16[%c24_89, %c0_90] : memref<64x384xf32, #tpu.memory_space<vmem>>, vector<8x384xf32>
    %c24_91 = arith.constant 24 : index
    %c0_92 = arith.constant 0 : index
    %326 = vector.load %arg1[%c24_91, %c0_92] : memref<64x128xf32, #tpu.memory_space<vmem>>, vector<8x128xf32>
    %cst_93 = arith.constant dense<0.000000e+00> : vector<8x384xf32>
    %327 = tpu.matmul %290, %14, %cst_93 {dimension_numbers = #tpu.dot_dimension_numbers<[1], [0], [0], [1], [0, 0, 1, 1], [], []>} : vector<8x128xf32>, vector<128x384xf32>, vector<8x384xf32> -> vector<8x384xf32>
    %328 = vector.extract_strided_slice %325 {offsets = [0, 0], sizes = [8, 128], strides = [1, 1]} : vector<8x384xf32> to vector<8x128xf32>
    %329 = vector.extract_strided_slice %327 {offsets = [0, 0], sizes = [8, 128], strides = [1, 1]} : vector<8x384xf32> to vector<8x128xf32>
    %330 = arith.addf %328, %329 : vector<8x128xf32>
    %331 = arith.negf %330 : vector<8x128xf32>
    %332 = math.exp %331 : vector<8x128xf32>
    %cst_94 = arith.constant 1.000000e+00 : f32
    %333 = vector.broadcast %cst_94 : f32 to vector<8x128xf32>
    %334 = arith.addf %333, %332 : vector<8x128xf32>
    %335 = arith.divf %333, %334 : vector<8x128xf32>
    %336 = vector.extract_strided_slice %325 {offsets = [0, 128], sizes = [8, 128], strides = [1, 1]} : vector<8x384xf32> to vector<8x128xf32>
    %337 = vector.extract_strided_slice %327 {offsets = [0, 128], sizes = [8, 128], strides = [1, 1]} : vector<8x384xf32> to vector<8x128xf32>
    %338 = arith.addf %336, %337 : vector<8x128xf32>
    %339 = arith.negf %338 : vector<8x128xf32>
    %340 = math.exp %339 : vector<8x128xf32>
    %cst_95 = arith.constant 1.000000e+00 : f32
    %341 = vector.broadcast %cst_95 : f32 to vector<8x128xf32>
    %342 = arith.addf %341, %340 : vector<8x128xf32>
    %343 = arith.divf %341, %342 : vector<8x128xf32>
    %344 = vector.extract_strided_slice %325 {offsets = [0, 256], sizes = [8, 128], strides = [1, 1]} : vector<8x384xf32> to vector<8x128xf32>
    %345 = vector.extract_strided_slice %327 {offsets = [0, 256], sizes = [8, 128], strides = [1, 1]} : vector<8x384xf32> to vector<8x128xf32>
    %346 = vector.broadcast %16 : vector<1x128xf32> to vector<8x128xf32>
    %347 = arith.addf %345, %346 : vector<8x128xf32>
    %348 = arith.mulf %335, %347 : vector<8x128xf32>
    %349 = arith.addf %344, %348 : vector<8x128xf32>
    %350 = math.tanh %349 : vector<8x128xf32>
    %cst_96 = arith.constant 1.000000e+00 : f32
    %351 = vector.broadcast %cst_96 : f32 to vector<8x128xf32>
    %352 = arith.subf %351, %343 : vector<8x128xf32>
    %353 = arith.mulf %352, %350 : vector<8x128xf32>
    %354 = arith.mulf %343, %290 : vector<8x128xf32>
    %355 = arith.addf %353, %354 : vector<8x128xf32>
    %356 = arith.subf %355, %290 : vector<8x128xf32>
    %357 = arith.mulf %326, %356 : vector<8x128xf32>
    %358 = arith.addf %290, %357 : vector<8x128xf32>
    %c40_97 = arith.constant 40 : index
    %c0_98 = arith.constant 0 : index
    %359 = vector.load %arg15[%c40_97, %c0_98] : memref<64x384xf32, #tpu.memory_space<vmem>>, vector<8x384xf32>
    %c40_99 = arith.constant 40 : index
    %c0_100 = arith.constant 0 : index
    %360 = vector.load %arg1[%c40_99, %c0_100] : memref<64x128xf32, #tpu.memory_space<vmem>>, vector<8x128xf32>
    %cst_101 = arith.constant dense<0.000000e+00> : vector<8x384xf32>
    %361 = tpu.matmul %324, %13, %cst_101 {dimension_numbers = #tpu.dot_dimension_numbers<[1], [0], [0], [1], [0, 0, 1, 1], [], []>} : vector<8x128xf32>, vector<128x384xf32>, vector<8x384xf32> -> vector<8x384xf32>
    %362 = vector.extract_strided_slice %359 {offsets = [0, 0], sizes = [8, 128], strides = [1, 1]} : vector<8x384xf32> to vector<8x128xf32>
    %363 = vector.extract_strided_slice %361 {offsets = [0, 0], sizes = [8, 128], strides = [1, 1]} : vector<8x384xf32> to vector<8x128xf32>
    %364 = arith.addf %362, %363 : vector<8x128xf32>
    %365 = arith.negf %364 : vector<8x128xf32>
    %366 = math.exp %365 : vector<8x128xf32>
    %cst_102 = arith.constant 1.000000e+00 : f32
    %367 = vector.broadcast %cst_102 : f32 to vector<8x128xf32>
    %368 = arith.addf %367, %366 : vector<8x128xf32>
    %369 = arith.divf %367, %368 : vector<8x128xf32>
    %370 = vector.extract_strided_slice %359 {offsets = [0, 128], sizes = [8, 128], strides = [1, 1]} : vector<8x384xf32> to vector<8x128xf32>
    %371 = vector.extract_strided_slice %361 {offsets = [0, 128], sizes = [8, 128], strides = [1, 1]} : vector<8x384xf32> to vector<8x128xf32>
    %372 = arith.addf %370, %371 : vector<8x128xf32>
    %373 = arith.negf %372 : vector<8x128xf32>
    %374 = math.exp %373 : vector<8x128xf32>
    %cst_103 = arith.constant 1.000000e+00 : f32
    %375 = vector.broadcast %cst_103 : f32 to vector<8x128xf32>
    %376 = arith.addf %375, %374 : vector<8x128xf32>
    %377 = arith.divf %375, %376 : vector<8x128xf32>
    %378 = vector.extract_strided_slice %359 {offsets = [0, 256], sizes = [8, 128], strides = [1, 1]} : vector<8x384xf32> to vector<8x128xf32>
    %379 = vector.extract_strided_slice %361 {offsets = [0, 256], sizes = [8, 128], strides = [1, 1]} : vector<8x384xf32> to vector<8x128xf32>
    %380 = vector.broadcast %15 : vector<1x128xf32> to vector<8x128xf32>
    %381 = arith.addf %379, %380 : vector<8x128xf32>
    %382 = arith.mulf %369, %381 : vector<8x128xf32>
    %383 = arith.addf %378, %382 : vector<8x128xf32>
    %384 = math.tanh %383 : vector<8x128xf32>
    %cst_104 = arith.constant 1.000000e+00 : f32
    %385 = vector.broadcast %cst_104 : f32 to vector<8x128xf32>
    %386 = arith.subf %385, %377 : vector<8x128xf32>
    %387 = arith.mulf %386, %384 : vector<8x128xf32>
    %388 = arith.mulf %377, %324 : vector<8x128xf32>
    %389 = arith.addf %387, %388 : vector<8x128xf32>
    %390 = arith.subf %389, %324 : vector<8x128xf32>
    %391 = arith.mulf %360, %390 : vector<8x128xf32>
    %392 = arith.addf %324, %391 : vector<8x128xf32>
    %c16_105 = arith.constant 16 : index
    %c0_106 = arith.constant 0 : index
    %393 = vector.load %arg16[%c16_105, %c0_106] : memref<64x384xf32, #tpu.memory_space<vmem>>, vector<8x384xf32>
    %c16_107 = arith.constant 16 : index
    %c0_108 = arith.constant 0 : index
    %394 = vector.load %arg1[%c16_107, %c0_108] : memref<64x128xf32, #tpu.memory_space<vmem>>, vector<8x128xf32>
    %cst_109 = arith.constant dense<0.000000e+00> : vector<8x384xf32>
    %395 = tpu.matmul %358, %14, %cst_109 {dimension_numbers = #tpu.dot_dimension_numbers<[1], [0], [0], [1], [0, 0, 1, 1], [], []>} : vector<8x128xf32>, vector<128x384xf32>, vector<8x384xf32> -> vector<8x384xf32>
    %396 = vector.extract_strided_slice %393 {offsets = [0, 0], sizes = [8, 128], strides = [1, 1]} : vector<8x384xf32> to vector<8x128xf32>
    %397 = vector.extract_strided_slice %395 {offsets = [0, 0], sizes = [8, 128], strides = [1, 1]} : vector<8x384xf32> to vector<8x128xf32>
    %398 = arith.addf %396, %397 : vector<8x128xf32>
    %399 = arith.negf %398 : vector<8x128xf32>
    %400 = math.exp %399 : vector<8x128xf32>
    %cst_110 = arith.constant 1.000000e+00 : f32
    %401 = vector.broadcast %cst_110 : f32 to vector<8x128xf32>
    %402 = arith.addf %401, %400 : vector<8x128xf32>
    %403 = arith.divf %401, %402 : vector<8x128xf32>
    %404 = vector.extract_strided_slice %393 {offsets = [0, 128], sizes = [8, 128], strides = [1, 1]} : vector<8x384xf32> to vector<8x128xf32>
    %405 = vector.extract_strided_slice %395 {offsets = [0, 128], sizes = [8, 128], strides = [1, 1]} : vector<8x384xf32> to vector<8x128xf32>
    %406 = arith.addf %404, %405 : vector<8x128xf32>
    %407 = arith.negf %406 : vector<8x128xf32>
    %408 = math.exp %407 : vector<8x128xf32>
    %cst_111 = arith.constant 1.000000e+00 : f32
    %409 = vector.broadcast %cst_111 : f32 to vector<8x128xf32>
    %410 = arith.addf %409, %408 : vector<8x128xf32>
    %411 = arith.divf %409, %410 : vector<8x128xf32>
    %412 = vector.extract_strided_slice %393 {offsets = [0, 256], sizes = [8, 128], strides = [1, 1]} : vector<8x384xf32> to vector<8x128xf32>
    %413 = vector.extract_strided_slice %395 {offsets = [0, 256], sizes = [8, 128], strides = [1, 1]} : vector<8x384xf32> to vector<8x128xf32>
    %414 = vector.broadcast %16 : vector<1x128xf32> to vector<8x128xf32>
    %415 = arith.addf %413, %414 : vector<8x128xf32>
    %416 = arith.mulf %403, %415 : vector<8x128xf32>
    %417 = arith.addf %412, %416 : vector<8x128xf32>
    %418 = math.tanh %417 : vector<8x128xf32>
    %cst_112 = arith.constant 1.000000e+00 : f32
    %419 = vector.broadcast %cst_112 : f32 to vector<8x128xf32>
    %420 = arith.subf %419, %411 : vector<8x128xf32>
    %421 = arith.mulf %420, %418 : vector<8x128xf32>
    %422 = arith.mulf %411, %358 : vector<8x128xf32>
    %423 = arith.addf %421, %422 : vector<8x128xf32>
    %424 = arith.subf %423, %358 : vector<8x128xf32>
    %425 = arith.mulf %394, %424 : vector<8x128xf32>
    %426 = arith.addf %358, %425 : vector<8x128xf32>
    %c48_113 = arith.constant 48 : index
    %c0_114 = arith.constant 0 : index
    %427 = vector.load %arg15[%c48_113, %c0_114] : memref<64x384xf32, #tpu.memory_space<vmem>>, vector<8x384xf32>
    %c48_115 = arith.constant 48 : index
    %c0_116 = arith.constant 0 : index
    %428 = vector.load %arg1[%c48_115, %c0_116] : memref<64x128xf32, #tpu.memory_space<vmem>>, vector<8x128xf32>
    %cst_117 = arith.constant dense<0.000000e+00> : vector<8x384xf32>
    %429 = tpu.matmul %392, %13, %cst_117 {dimension_numbers = #tpu.dot_dimension_numbers<[1], [0], [0], [1], [0, 0, 1, 1], [], []>} : vector<8x128xf32>, vector<128x384xf32>, vector<8x384xf32> -> vector<8x384xf32>
    %430 = vector.extract_strided_slice %427 {offsets = [0, 0], sizes = [8, 128], strides = [1, 1]} : vector<8x384xf32> to vector<8x128xf32>
    %431 = vector.extract_strided_slice %429 {offsets = [0, 0], sizes = [8, 128], strides = [1, 1]} : vector<8x384xf32> to vector<8x128xf32>
    %432 = arith.addf %430, %431 : vector<8x128xf32>
    %433 = arith.negf %432 : vector<8x128xf32>
    %434 = math.exp %433 : vector<8x128xf32>
    %cst_118 = arith.constant 1.000000e+00 : f32
    %435 = vector.broadcast %cst_118 : f32 to vector<8x128xf32>
    %436 = arith.addf %435, %434 : vector<8x128xf32>
    %437 = arith.divf %435, %436 : vector<8x128xf32>
    %438 = vector.extract_strided_slice %427 {offsets = [0, 128], sizes = [8, 128], strides = [1, 1]} : vector<8x384xf32> to vector<8x128xf32>
    %439 = vector.extract_strided_slice %429 {offsets = [0, 128], sizes = [8, 128], strides = [1, 1]} : vector<8x384xf32> to vector<8x128xf32>
    %440 = arith.addf %438, %439 : vector<8x128xf32>
    %441 = arith.negf %440 : vector<8x128xf32>
    %442 = math.exp %441 : vector<8x128xf32>
    %cst_119 = arith.constant 1.000000e+00 : f32
    %443 = vector.broadcast %cst_119 : f32 to vector<8x128xf32>
    %444 = arith.addf %443, %442 : vector<8x128xf32>
    %445 = arith.divf %443, %444 : vector<8x128xf32>
    %446 = vector.extract_strided_slice %427 {offsets = [0, 256], sizes = [8, 128], strides = [1, 1]} : vector<8x384xf32> to vector<8x128xf32>
    %447 = vector.extract_strided_slice %429 {offsets = [0, 256], sizes = [8, 128], strides = [1, 1]} : vector<8x384xf32> to vector<8x128xf32>
    %448 = vector.broadcast %15 : vector<1x128xf32> to vector<8x128xf32>
    %449 = arith.addf %447, %448 : vector<8x128xf32>
    %450 = arith.mulf %437, %449 : vector<8x128xf32>
    %451 = arith.addf %446, %450 : vector<8x128xf32>
    %452 = math.tanh %451 : vector<8x128xf32>
    %cst_120 = arith.constant 1.000000e+00 : f32
    %453 = vector.broadcast %cst_120 : f32 to vector<8x128xf32>
    %454 = arith.subf %453, %445 : vector<8x128xf32>
    %455 = arith.mulf %454, %452 : vector<8x128xf32>
    %456 = arith.mulf %445, %392 : vector<8x128xf32>
    %457 = arith.addf %455, %456 : vector<8x128xf32>
    %458 = arith.subf %457, %392 : vector<8x128xf32>
    %459 = arith.mulf %428, %458 : vector<8x128xf32>
    %460 = arith.addf %392, %459 : vector<8x128xf32>
    %c8_121 = arith.constant 8 : index
    %c0_122 = arith.constant 0 : index
    %461 = vector.load %arg16[%c8_121, %c0_122] : memref<64x384xf32, #tpu.memory_space<vmem>>, vector<8x384xf32>
    %c8_123 = arith.constant 8 : index
    %c0_124 = arith.constant 0 : index
    %462 = vector.load %arg1[%c8_123, %c0_124] : memref<64x128xf32, #tpu.memory_space<vmem>>, vector<8x128xf32>
    %cst_125 = arith.constant dense<0.000000e+00> : vector<8x384xf32>
    %463 = tpu.matmul %426, %14, %cst_125 {dimension_numbers = #tpu.dot_dimension_numbers<[1], [0], [0], [1], [0, 0, 1, 1], [], []>} : vector<8x128xf32>, vector<128x384xf32>, vector<8x384xf32> -> vector<8x384xf32>
    %464 = vector.extract_strided_slice %461 {offsets = [0, 0], sizes = [8, 128], strides = [1, 1]} : vector<8x384xf32> to vector<8x128xf32>
    %465 = vector.extract_strided_slice %463 {offsets = [0, 0], sizes = [8, 128], strides = [1, 1]} : vector<8x384xf32> to vector<8x128xf32>
    %466 = arith.addf %464, %465 : vector<8x128xf32>
    %467 = arith.negf %466 : vector<8x128xf32>
    %468 = math.exp %467 : vector<8x128xf32>
    %cst_126 = arith.constant 1.000000e+00 : f32
    %469 = vector.broadcast %cst_126 : f32 to vector<8x128xf32>
    %470 = arith.addf %469, %468 : vector<8x128xf32>
    %471 = arith.divf %469, %470 : vector<8x128xf32>
    %472 = vector.extract_strided_slice %461 {offsets = [0, 128], sizes = [8, 128], strides = [1, 1]} : vector<8x384xf32> to vector<8x128xf32>
    %473 = vector.extract_strided_slice %463 {offsets = [0, 128], sizes = [8, 128], strides = [1, 1]} : vector<8x384xf32> to vector<8x128xf32>
    %474 = arith.addf %472, %473 : vector<8x128xf32>
    %475 = arith.negf %474 : vector<8x128xf32>
    %476 = math.exp %475 : vector<8x128xf32>
    %cst_127 = arith.constant 1.000000e+00 : f32
    %477 = vector.broadcast %cst_127 : f32 to vector<8x128xf32>
    %478 = arith.addf %477, %476 : vector<8x128xf32>
    %479 = arith.divf %477, %478 : vector<8x128xf32>
    %480 = vector.extract_strided_slice %461 {offsets = [0, 256], sizes = [8, 128], strides = [1, 1]} : vector<8x384xf32> to vector<8x128xf32>
    %481 = vector.extract_strided_slice %463 {offsets = [0, 256], sizes = [8, 128], strides = [1, 1]} : vector<8x384xf32> to vector<8x128xf32>
    %482 = vector.broadcast %16 : vector<1x128xf32> to vector<8x128xf32>
    %483 = arith.addf %481, %482 : vector<8x128xf32>
    %484 = arith.mulf %471, %483 : vector<8x128xf32>
    %485 = arith.addf %480, %484 : vector<8x128xf32>
    %486 = math.tanh %485 : vector<8x128xf32>
    %cst_128 = arith.constant 1.000000e+00 : f32
    %487 = vector.broadcast %cst_128 : f32 to vector<8x128xf32>
    %488 = arith.subf %487, %479 : vector<8x128xf32>
    %489 = arith.mulf %488, %486 : vector<8x128xf32>
    %490 = arith.mulf %479, %426 : vector<8x128xf32>
    %491 = arith.addf %489, %490 : vector<8x128xf32>
    %492 = arith.subf %491, %426 : vector<8x128xf32>
    %493 = arith.mulf %462, %492 : vector<8x128xf32>
    %494 = arith.addf %426, %493 : vector<8x128xf32>
    %c56_129 = arith.constant 56 : index
    %c0_130 = arith.constant 0 : index
    %495 = vector.load %arg15[%c56_129, %c0_130] : memref<64x384xf32, #tpu.memory_space<vmem>>, vector<8x384xf32>
    %c56_131 = arith.constant 56 : index
    %c0_132 = arith.constant 0 : index
    %496 = vector.load %arg1[%c56_131, %c0_132] : memref<64x128xf32, #tpu.memory_space<vmem>>, vector<8x128xf32>
    %cst_133 = arith.constant dense<0.000000e+00> : vector<8x384xf32>
    %497 = tpu.matmul %460, %13, %cst_133 {dimension_numbers = #tpu.dot_dimension_numbers<[1], [0], [0], [1], [0, 0, 1, 1], [], []>} : vector<8x128xf32>, vector<128x384xf32>, vector<8x384xf32> -> vector<8x384xf32>
    %498 = vector.extract_strided_slice %495 {offsets = [0, 0], sizes = [8, 128], strides = [1, 1]} : vector<8x384xf32> to vector<8x128xf32>
    %499 = vector.extract_strided_slice %497 {offsets = [0, 0], sizes = [8, 128], strides = [1, 1]} : vector<8x384xf32> to vector<8x128xf32>
    %500 = arith.addf %498, %499 : vector<8x128xf32>
    %501 = arith.negf %500 : vector<8x128xf32>
    %502 = math.exp %501 : vector<8x128xf32>
    %cst_134 = arith.constant 1.000000e+00 : f32
    %503 = vector.broadcast %cst_134 : f32 to vector<8x128xf32>
    %504 = arith.addf %503, %502 : vector<8x128xf32>
    %505 = arith.divf %503, %504 : vector<8x128xf32>
    %506 = vector.extract_strided_slice %495 {offsets = [0, 128], sizes = [8, 128], strides = [1, 1]} : vector<8x384xf32> to vector<8x128xf32>
    %507 = vector.extract_strided_slice %497 {offsets = [0, 128], sizes = [8, 128], strides = [1, 1]} : vector<8x384xf32> to vector<8x128xf32>
    %508 = arith.addf %506, %507 : vector<8x128xf32>
    %509 = arith.negf %508 : vector<8x128xf32>
    %510 = math.exp %509 : vector<8x128xf32>
    %cst_135 = arith.constant 1.000000e+00 : f32
    %511 = vector.broadcast %cst_135 : f32 to vector<8x128xf32>
    %512 = arith.addf %511, %510 : vector<8x128xf32>
    %513 = arith.divf %511, %512 : vector<8x128xf32>
    %514 = vector.extract_strided_slice %495 {offsets = [0, 256], sizes = [8, 128], strides = [1, 1]} : vector<8x384xf32> to vector<8x128xf32>
    %515 = vector.extract_strided_slice %497 {offsets = [0, 256], sizes = [8, 128], strides = [1, 1]} : vector<8x384xf32> to vector<8x128xf32>
    %516 = vector.broadcast %15 : vector<1x128xf32> to vector<8x128xf32>
    %517 = arith.addf %515, %516 : vector<8x128xf32>
    %518 = arith.mulf %505, %517 : vector<8x128xf32>
    %519 = arith.addf %514, %518 : vector<8x128xf32>
    %520 = math.tanh %519 : vector<8x128xf32>
    %cst_136 = arith.constant 1.000000e+00 : f32
    %521 = vector.broadcast %cst_136 : f32 to vector<8x128xf32>
    %522 = arith.subf %521, %513 : vector<8x128xf32>
    %523 = arith.mulf %522, %520 : vector<8x128xf32>
    %524 = arith.mulf %513, %460 : vector<8x128xf32>
    %525 = arith.addf %523, %524 : vector<8x128xf32>
    %526 = arith.subf %525, %460 : vector<8x128xf32>
    %527 = arith.mulf %496, %526 : vector<8x128xf32>
    %528 = arith.addf %460, %527 : vector<8x128xf32>
    %c0_137 = arith.constant 0 : index
    %c0_138 = arith.constant 0 : index
    %529 = vector.load %arg16[%c0_137, %c0_138] : memref<64x384xf32, #tpu.memory_space<vmem>>, vector<8x384xf32>
    %c0_139 = arith.constant 0 : index
    %c0_140 = arith.constant 0 : index
    %530 = vector.load %arg1[%c0_139, %c0_140] : memref<64x128xf32, #tpu.memory_space<vmem>>, vector<8x128xf32>
    %cst_141 = arith.constant dense<0.000000e+00> : vector<8x384xf32>
    %531 = tpu.matmul %494, %14, %cst_141 {dimension_numbers = #tpu.dot_dimension_numbers<[1], [0], [0], [1], [0, 0, 1, 1], [], []>} : vector<8x128xf32>, vector<128x384xf32>, vector<8x384xf32> -> vector<8x384xf32>
    %532 = vector.extract_strided_slice %529 {offsets = [0, 0], sizes = [8, 128], strides = [1, 1]} : vector<8x384xf32> to vector<8x128xf32>
    %533 = vector.extract_strided_slice %531 {offsets = [0, 0], sizes = [8, 128], strides = [1, 1]} : vector<8x384xf32> to vector<8x128xf32>
    %534 = arith.addf %532, %533 : vector<8x128xf32>
    %535 = arith.negf %534 : vector<8x128xf32>
    %536 = math.exp %535 : vector<8x128xf32>
    %cst_142 = arith.constant 1.000000e+00 : f32
    %537 = vector.broadcast %cst_142 : f32 to vector<8x128xf32>
    %538 = arith.addf %537, %536 : vector<8x128xf32>
    %539 = arith.divf %537, %538 : vector<8x128xf32>
    %540 = vector.extract_strided_slice %529 {offsets = [0, 128], sizes = [8, 128], strides = [1, 1]} : vector<8x384xf32> to vector<8x128xf32>
    %541 = vector.extract_strided_slice %531 {offsets = [0, 128], sizes = [8, 128], strides = [1, 1]} : vector<8x384xf32> to vector<8x128xf32>
    %542 = arith.addf %540, %541 : vector<8x128xf32>
    %543 = arith.negf %542 : vector<8x128xf32>
    %544 = math.exp %543 : vector<8x128xf32>
    %cst_143 = arith.constant 1.000000e+00 : f32
    %545 = vector.broadcast %cst_143 : f32 to vector<8x128xf32>
    %546 = arith.addf %545, %544 : vector<8x128xf32>
    %547 = arith.divf %545, %546 : vector<8x128xf32>
    %548 = vector.extract_strided_slice %529 {offsets = [0, 256], sizes = [8, 128], strides = [1, 1]} : vector<8x384xf32> to vector<8x128xf32>
    %549 = vector.extract_strided_slice %531 {offsets = [0, 256], sizes = [8, 128], strides = [1, 1]} : vector<8x384xf32> to vector<8x128xf32>
    %550 = vector.broadcast %16 : vector<1x128xf32> to vector<8x128xf32>
    %551 = arith.addf %549, %550 : vector<8x128xf32>
    %552 = arith.mulf %539, %551 : vector<8x128xf32>
    %553 = arith.addf %548, %552 : vector<8x128xf32>
    %554 = math.tanh %553 : vector<8x128xf32>
    %cst_144 = arith.constant 1.000000e+00 : f32
    %555 = vector.broadcast %cst_144 : f32 to vector<8x128xf32>
    %556 = arith.subf %555, %547 : vector<8x128xf32>
    %557 = arith.mulf %556, %554 : vector<8x128xf32>
    %558 = arith.mulf %547, %494 : vector<8x128xf32>
    %559 = arith.addf %557, %558 : vector<8x128xf32>
    %560 = arith.subf %559, %494 : vector<8x128xf32>
    %561 = arith.mulf %530, %560 : vector<8x128xf32>
    %562 = arith.addf %494, %561 : vector<8x128xf32>
    %c0_145 = arith.constant 0 : index
    %c0_146 = arith.constant 0 : index
    %563 = vector.load %arg12[%c0_145, %c0_146] : memref<8x128xf32, #tpu.memory_space<vmem>>, vector<8x128xf32>
    tpu.vector_store %arg12[%c0_145, %c0_146], %528 {strides = array<i32>} : memref<8x128xf32, #tpu.memory_space<vmem>>, vector<8x128xf32>,
    %c0_147 = arith.constant 0 : index
    %c0_148 = arith.constant 0 : index
    %564 = vector.load %arg13[%c0_147, %c0_148] : memref<8x128xf32, #tpu.memory_space<vmem>>, vector<8x128xf32>
    tpu.vector_store %arg13[%c0_147, %c0_148], %562 {strides = array<i32>} : memref<8x128xf32, #tpu.memory_space<vmem>>, vector<8x128xf32>,
    %c0_149 = arith.constant 0 : index
    %c0_150 = arith.constant 0 : index
    %565 = vector.load %arg10[%c0_149, %c0_150] : memref<128x128xf32, #tpu.memory_space<vmem>>, vector<128x128xf32>
    %cst_151 = arith.constant dense<0.000000e+00> : vector<8x128xf32>
    %566 = tpu.matmul %562, %565, %cst_151 {dimension_numbers = #tpu.dot_dimension_numbers<[1], [0], [0], [1], [0, 0, 1, 1], [], []>} : vector<8x128xf32>, vector<128x128xf32>, vector<8x128xf32> -> vector<8x128xf32>
    %c0_152 = arith.constant 0 : index
    %c0_153 = arith.constant 0 : index
    %567 = vector.load %arg11[%c0_152, %c0_153] : memref<1x128xf32, #tpu.memory_space<vmem>>, vector<1x128xf32>
    %568 = vector.broadcast %567 : vector<1x128xf32> to vector<8x128xf32>
    %569 = arith.addf %566, %568 : vector<8x128xf32>
    %c0_154 = arith.constant 0 : index
    %c0_155 = arith.constant 0 : index
    %570 = vector.load %arg14[%c0_154, %c0_155] : memref<8x128xf32, #tpu.memory_space<vmem>>, vector<8x128xf32>
    tpu.vector_store %arg14[%c0_154, %c0_155], %569 {strides = array<i32>} : memref<8x128xf32, #tpu.memory_space<vmem>>, vector<8x128xf32>,
    return
  }
}

</mosaic_0001>

<llo_original>
// kernel: tpu_custom_call.1
$region0: #{tpu_custom_call.1}
  #allocation0 [shape = 'u32[]', space=smem, size = 0x4, offset = 0x4, fixed_abs, tag = 'smem constant byte address 0x4 - core index']
  #allocation1 [shape = 'u32[144,128]{1,0:T(1,128)}', space=vmem, size = 0x12000, scoped, tag = 'internal scratch']
  #allocation2 [shape = 'f32[64,384]{1,0:T(8,128)}', space=vmem, size = 0x18000, scoped, tag = 'scratch operand']
  #allocation3 [shape = 'f32[64,384]{1,0:T(8,128)}', space=vmem, size = 0x18000, scoped, tag = 'scratch operand']
  %s0 = inlined_call_operand.vmem [shape: f32[64,32], index: 0, kind: input, shape index: {}]
  %s1 = inlined_call_operand.hbm [shape: f32[64,128], index: 1, kind: input, shape index: {}]
  %s2 = inlined_call_operand.vmem [shape: f32[32,384], index: 2, kind: input, shape index: {}]
  %s3 = inlined_call_operand.hbm [shape: f32[128,384], index: 3, kind: input, shape index: {}]
  %s4 = inlined_call_operand.vmem [shape: f32[1,384], index: 4, kind: input, shape index: {}]
  %s5 = inlined_call_operand.vmem [shape: f32[1,128], index: 5, kind: input, shape index: {}]
  %s6 = inlined_call_operand.hbm [shape: f32[32,384], index: 6, kind: input, shape index: {}]
  %s7 = inlined_call_operand.hbm [shape: f32[128,384], index: 7, kind: input, shape index: {}]
  %s8 = inlined_call_operand.vmem [shape: f32[1,384], index: 8, kind: input, shape index: {}]
  %s9 = inlined_call_operand.vmem [shape: f32[1,128], index: 9, kind: input, shape index: {}]
  %s10 = inlined_call_operand.hbm [shape: f32[128,128], index: 10, kind: input, shape index: {}]
  %s11 = inlined_call_operand.vmem [shape: f32[1,128], index: 11, kind: input, shape index: {}]
  %s12 = inlined_call_operand.hbm [shape: f32[8,128], index: 12, kind: output, shape index: {0}]
  %s13 = inlined_call_operand.hbm [shape: f32[8,128], index: 13, kind: output, shape index: {1}]
  %s14 = inlined_call_operand.hbm [shape: f32[8,128], index: 14, kind: output, shape index: {2}]
  %15 = xla_tuple %s12, %s13, %s14
  %s16 = sld [smem:[#allocation0]]
  $region94: #{tpu_custom_call.1} parent=0
    _
  %s18 = ssub.s32 1, %s16
  %s19 = scalar_select 0, %s18, %s16
  $region1: #{tpu_custom_call.1} parent=0
    #allocation4 [shape = 'u8[32768]{0}', space=vmem, size = 0x8000, scoped, tag = 'input window, operand 1, single buffered']
    #allocation5 [shape = 's32[1]{0}', space=sflag, size = 0x4, scoped, tag = 'scoped memory for tpu_custom_call.1']
    #allocation6 [shape = 's32[1]{0}', space=sflag, size = 0x4, scoped, tag = 'scoped memory for tpu_custom_call.1']
    #allocation7 [shape = 'u8[196608]{0}', space=vmem, size = 0x30000, scoped, tag = 'input window, operand 3, single buffered']
    #allocation8 [shape = 's32[1]{0}', space=sflag, size = 0x4, scoped, tag = 'scoped memory for tpu_custom_call.1']
    #allocation9 [shape = 'u8[49152]{0}', space=vmem, size = 0xc000, scoped, tag = 'input window, operand 6, single buffered']
    #allocation10 [shape = 'u8[196608]{0}', space=vmem, size = 0x30000, scoped, tag = 'input window, operand 7, single buffered']
    #allocation11 [shape = 's32[1]{0}', space=sflag, size = 0x4, scoped, tag = 'scoped memory for tpu_custom_call.1']
    #allocation12 [shape = 'u8[65536]{0}', space=vmem, size = 0x10000, scoped, tag = 'input window, operand 10, single buffered']
    #allocation13 [shape = 'u8[4096]{0}', space=vmem, size = 0x1000, scoped, tag = 'output window, operand 0, single buffered']
    #allocation14 [shape = 'u8[4096]{0}', space=vmem, size = 0x1000, scoped, tag = 'output window, operand 1, single buffered']
    #allocation15 [shape = 's32[1]{0}', space=sflag, size = 0x4, scoped, tag = 'scoped memory for tpu_custom_call.1']
    #allocation16 [shape = 'u8[4096]{0}', space=vmem, size = 0x1000, scoped, tag = 'output window, operand 2, single buffered']
    %20 = vsyncpa [#allocation5], 0
    %21 = vsyncpa [#allocation8], 0
    %22 = vsyncpa [#allocation11], 0
    %23 = vsyncpa [#allocation6], 0
    %24 = vsyncpa [#allocation15], 0
    // Predicated region
    $region2: #{tpu_custom_call.1} parent=1 // pred_check
      _
    $region3: #{tpu_custom_call.1} parent=1 // pred_check_branch
      %26 = sbr.rel (0) target = $region5
    $region4: #{tpu_custom_call.1} parent=1 // pred_region
      _
    $region5: #{tpu_custom_call.1} parent=1 // pred_fallthru
      _
    // Predicated region
    $region6: #{tpu_custom_call.1} parent=1 // pred_check
      _
    $region7: #{tpu_custom_call.1} parent=1 // pred_check_branch
      %28 = sbr.rel (0) target = $region9
    $region8: #{tpu_custom_call.1} parent=1 // pred_region
      %s30 = ssub.s32 1024, 1024
      %31 = vsyncadd [#allocation5], %s30
      %s32 = sshll.u32 [#allocation4], 4
      %s33 = int_to_ptr.vmem [resolvable:$true] %s32
      %38 = dma.hbm_to_vmem [thread:$0]  %s1, 1024, %s33, [#allocation5], 128, 128, 8
    $region9: #{tpu_custom_call.1} parent=1 // pred_fallthru
      _
    // Predicated region
    $region10: #{tpu_custom_call.1} parent=1 // pred_check
      _
    $region11: #{tpu_custom_call.1} parent=1 // pred_check_branch
      %40 = sbr.rel (0) target = $region13
    $region12: #{tpu_custom_call.1} parent=1 // pred_region
      _
    $region13: #{tpu_custom_call.1} parent=1 // pred_fallthru
      _
    // Predicated region
    $region14: #{tpu_custom_call.1} parent=1 // pred_check
      _
    $region15: #{tpu_custom_call.1} parent=1 // pred_check_branch
      %42 = sbr.rel (0) target = $region17
    $region16: #{tpu_custom_call.1} parent=1 // pred_region
      %s44 = ssub.s32 6144, 6144
      %45 = vsyncadd [#allocation8], %s44
      %s46 = sshll.u32 [#allocation7], 4
      %s47 = int_to_ptr.vmem [resolvable:$true] %s46
      %52 = dma.hbm_to_vmem [thread:$0]  %s3, 6144, %s47, [#allocation8], 384, 384, 24
    $region17: #{tpu_custom_call.1} parent=1 // pred_fallthru
      _
    // Predicated region
    $region18: #{tpu_custom_call.1} parent=1 // pred_check
      _
    $region19: #{tpu_custom_call.1} parent=1 // pred_check_branch
      %54 = sbr.rel (0) target = $region21
    $region20: #{tpu_custom_call.1} parent=1 // pred_region
      _
    $region21: #{tpu_custom_call.1} parent=1 // pred_fallthru
      _
    // Predicated region
    $region22: #{tpu_custom_call.1} parent=1 // pred_check
      _
    $region23: #{tpu_custom_call.1} parent=1 // pred_check_branch
      %56 = sbr.rel (0) target = $region25
    $region24: #{tpu_custom_call.1} parent=1 // pred_region
      _
    $region25: #{tpu_custom_call.1} parent=1 // pred_fallthru
      _
    // Predicated region
    $region26: #{tpu_custom_call.1} parent=1 // pred_check
      _
    $region27: #{tpu_custom_call.1} parent=1 // pred_check_branch
      %58 = sbr.rel (0) target = $region29
    $region28: #{tpu_custom_call.1} parent=1 // pred_region
      %s60 = ssub.s32 1536, 1536
      %61 = vsyncadd [#allocation8], %s60
      %s62 = sshll.u32 [#allocation9], 4
      %s63 = int_to_ptr.vmem [resolvable:$true] %s62
      %68 = dma.hbm_to_vmem [thread:$0]  %s6, 1536, %s63, [#allocation8], 384, 384, 24
    $region29: #{tpu_custom_call.1} parent=1 // pred_fallthru
      _
    // Predicated region
    $region30: #{tpu_custom_call.1} parent=1 // pred_check
      _
    $region31: #{tpu_custom_call.1} parent=1 // pred_check_branch
      %70 = sbr.rel (0) target = $region33
    $region32: #{tpu_custom_call.1} parent=1 // pred_region
      %s72 = ssub.s32 6144, 6144
      %73 = vsyncadd [#allocation11], %s72
      %s74 = sshll.u32 [#allocation10], 4
      %s75 = int_to_ptr.vmem [resolvable:$true] %s74
      %80 = dma.hbm_to_vmem [thread:$0]  %s7, 6144, %s75, [#allocation11], 384, 384, 24
    $region33: #{tpu_custom_call.1} parent=1 // pred_fallthru
      _
    // Predicated region
    $region34: #{tpu_custom_call.1} parent=1 // pred_check
      _
    $region35: #{tpu_custom_call.1} parent=1 // pred_check_branch
      %82 = sbr.rel (0) target = $region37
    $region36: #{tpu_custom_call.1} parent=1 // pred_region
      _
    $region37: #{tpu_custom_call.1} parent=1 // pred_fallthru
      _
    // Predicated region
    $region38: #{tpu_custom_call.1} parent=1 // pred_check
      _
    $region39: #{tpu_custom_call.1} parent=1 // pred_check_branch
      %84 = sbr.rel (0) target = $region41
    $region40: #{tpu_custom_call.1} parent=1 // pred_region
      _
    $region41: #{tpu_custom_call.1} parent=1 // pred_fallthru
      _
    // Predicated region
    $region42: #{tpu_custom_call.1} parent=1 // pred_check
      _
    $region43: #{tpu_custom_call.1} parent=1 // pred_check_branch
      %86 = sbr.rel (0) target = $region45
    $region44: #{tpu_custom_call.1} parent=1 // pred_region
      %s88 = ssub.s32 2048, 2048
      %89 = vsyncadd [#allocation11], %s88
      %s90 = sshll.u32 [#allocation12], 4
      %s91 = int_to_ptr.vmem [resolvable:$true] %s90
      %96 = dma.hbm_to_vmem [thread:$0]  %s10, 2048, %s91, [#allocation11], 128, 128, 8
    $region45: #{tpu_custom_call.1} parent=1 // pred_fallthru
      _
    // Predicated region
    $region46: #{tpu_custom_call.1} parent=1 // pred_check
      _
    $region47: #{tpu_custom_call.1} parent=1 // pred_check_branch
      %98 = sbr.rel (0) target = $region49
    $region48: #{tpu_custom_call.1} parent=1 // pred_region
      _
    $region49: #{tpu_custom_call.1} parent=1 // pred_fallthru
      _
    // Predicated region
    $region50: #{tpu_custom_call.1} parent=1 // pred_check
      _
    $region51: #{tpu_custom_call.1} parent=1 // pred_check_branch
      %100 = sbr.rel (0) target = $region53
    $region52: #{tpu_custom_call.1} parent=1 // pred_region
      %101 = dma.done [#allocation5], 1024
    $region53: #{tpu_custom_call.1} parent=1 // pred_fallthru
      _
    // Predicated region
    $region54: #{tpu_custom_call.1} parent=1 // pred_check
      _
    $region55: #{tpu_custom_call.1} parent=1 // pred_check_branch
      %103 = sbr.rel (0) target = $region57
    $region56: #{tpu_custom_call.1} parent=1 // pred_region
      %104 = dma.done [#allocation8], 6144
    $region57: #{tpu_custom_call.1} parent=1 // pred_fallthru
      _
    // Predicated region
    $region58: #{tpu_custom_call.1} parent=1 // pred_check
      _
    $region59: #{tpu_custom_call.1} parent=1 // pred_check_branch
      %106 = sbr.rel (0) target = $region61
    $region60: #{tpu_custom_call.1} parent=1 // pred_region
      %107 = dma.done [#allocation8], 1536
    $region61: #{tpu_custom_call.1} parent=1 // pred_fallthru
      _
    // Predicated region
    $region62: #{tpu_custom_call.1} parent=1 // pred_check
      _
    $region63: #{tpu_custom_call.1} parent=1 // pred_check_branch
      %109 = sbr.rel (0) target = $region65
    $region64: #{tpu_custom_call.1} parent=1 // pred_region
      %110 = dma.done [#allocation11], 6144
    $region65: #{tpu_custom_call.1} parent=1 // pred_fallthru
      _
    // Predicated region
    $region66: #{tpu_custom_call.1} parent=1 // pred_check
      _
    $region67: #{tpu_custom_call.1} parent=1 // pred_check_branch
      %112 = sbr.rel (0) target = $region69
    $region68: #{tpu_custom_call.1} parent=1 // pred_region
      %113 = dma.done [#allocation11], 2048
    $region69: #{tpu_custom_call.1} parent=1 // pred_fallthru
      _
    %v114 = vld [vmem:[%s0] sm:$0xff]
    %v115 = vld [vmem:[%s0 + $0x8] sm:$0xff]
    %v116 = vld [vmem:[%s0 + $0x10] sm:$0xff]
    %v117 = vld [vmem:[%s0 + $0x18] sm:$0xff]
    %v118 = vld [vmem:[%s0 + $0x20] sm:$0xff]
    %v119 = vld [vmem:[%s0 + $0x28] sm:$0xff]
    %v120 = vld [vmem:[%s0 + $0x30] sm:$0xff]
    %v121 = vld [vmem:[%s0 + $0x38] sm:$0xff]
    %v122 = vld [vmem:[%s2] sm:$0xff]
    %v123 = vld [vmem:[%s2 + $0x8] sm:$0xff]
    %v124 = vld [vmem:[%s2 + $0x10] sm:$0xff]
    %v125 = vld [vmem:[%s2 + $0x18] sm:$0xff]
    %v126 = vld [vmem:[%s2 + $0x20] sm:$0xff]
    %v127 = vld [vmem:[%s2 + $0x28] sm:$0xff]
    %v128 = vld [vmem:[%s2 + $0x30] sm:$0xff]
    %v129 = vld [vmem:[%s2 + $0x38] sm:$0xff]
    %v130 = vld [vmem:[%s2 + $0x40] sm:$0xff]
    %v131 = vld [vmem:[%s2 + $0x48] sm:$0xff]
    %v132 = vld [vmem:[%s2 + $0x50] sm:$0xff]
    %v133 = vld [vmem:[%s2 + $0x58] sm:$0xff]
    %v134 = vld [vmem:[%s4] sm:$0x7]
    %v136 = vlaneseq
    %v137 = vshrl.u32 %v136, 7
    %v138 = vsub.s32 0, %v137
    %v139 = vrot.slane %v134, %v138
    %v140 = vlaneseq
    %v141 = vshrl.u32 %v140, 7
    %v142 = vsub.s32 1, %v141
    %v143 = vrot.slane %v134, %v142
    %v144 = vlaneseq
    %v145 = vshrl.u32 %v144, 7
    %v146 = vsub.s32 2, %v145
    %v147 = vrot.slane %v134, %v146
    %vm151 = vcmask 261120
    %v153 = vsel %vm151, %v114, 0
    %v156 = vsel %vm151, %v115, 0
    %v159 = vsel %vm151, %v116, 0
    %v162 = vsel %vm151, %v117, 0
    %v165 = vsel %vm151, %v118, 0
    %v168 = vsel %vm151, %v119, 0
    %v171 = vsel %vm151, %v120, 0
    %v174 = vsel %vm151, %v121, 0
    %176 = vmatprep.subr.mxu0 0.0
    %177 = vmatpush1.msra.mxu0 0.0
    %178 = vmatprep.subr.mxu0 0.0
    %179 = vmatpush1.msra.mxu0 0.0
    %180 = vmatprep.subr.mxu0 0.0
    %181 = vmatpush1.msra.mxu0 0.0
    %182 = vmatprep.subr.mxu0 0.0
    %183 = vmatpush1.msra.mxu0 0.0
    %184 = vmatprep.subr.mxu0 0.0
    %185 = vmatpush1.msra.mxu0 0.0
    %186 = vmatprep.subr.mxu0 0.0
    %187 = vmatpush1.msra.mxu0 0.0
    %188 = vmatprep.subr.mxu0 0.0
    %189 = vmatpush1.msra.mxu0 0.0
    %190 = vmatprep.subr.mxu0 0.0
    %191 = vmatpush1.msra.mxu0 0.0
    %192 = vmatprep.subr.mxu0 0.0
    %193 = vmatpush1.msra.mxu0 0.0
    %194 = vmatprep.subr.mxu0 0.0
    %195 = vmatpush1.msra.mxu0 0.0
    %196 = vmatprep.subr.mxu0 0.0
    %197 = vmatpush1.msra.mxu0 0.0
    %198 = vmatprep.subr.mxu0 0.0
    %199 = vmatpush1.msra.mxu0 0.0
    %200 = vmatprep.subr.mxu0 %v132
    %201 = vmatpush1.msra.mxu0 %v131
    %202 = vmatprep.subr.mxu0 %v129
    %203 = vmatpush1.msra.mxu0 %v128
    %204 = vmatprep.subr.mxu0 %v126
    %205 = vmatpush1.msra.mxu0 %v125
    %206 = vmatprep.subr.mxu0 %v123
    %207 = vmatpush1.msra.mxu0 %v122
    %208 = vmatprep.subr.mxu0 0.0
    %209 = vmatpush2.msra.mxu0 0.0
    %210 = vmatprep.subr.mxu0 0.0
    %211 = vmatpush2.msra.mxu0 0.0
    %212 = vmatprep.subr.mxu0 0.0
    %213 = vmatpush2.msra.mxu0 0.0
    %214 = vmatprep.subr.mxu0 0.0
    %215 = vmatpush2.msra.mxu0 0.0
    %216 = vmatprep.subr.mxu0 0.0
    %217 = vmatpush2.msra.mxu0 0.0
    %218 = vmatprep.subr.mxu0 0.0
    %219 = vmatpush2.msra.mxu0 0.0
    %220 = vmatprep.subr.mxu0 0.0
    %221 = vmatpush2.msra.mxu0 0.0
    %222 = vmatprep.subr.mxu0 0.0
    %223 = vmatpush2.msra.mxu0 0.0
    %224 = vmatprep.subr.mxu0 0.0
    %225 = vmatpush2.msra.mxu0 0.0
    %226 = vmatprep.subr.mxu0 0.0
    %227 = vmatpush2.msra.mxu0 0.0
    %228 = vmatprep.subr.mxu0 0.0
    %229 = vmatpush2.msra.mxu0 0.0
    %230 = vmatprep.subr.mxu0 0.0
    %231 = vmatpush2.msra.mxu0 0.0
    %232 = vmatprep.subr.mxu0 0.0
    %233 = vmatpush2.msra.mxu0 0.0
    %234 = vmatprep.subr.mxu0 0.0
    %235 = vmatpush2.msra.mxu0 0.0
    %236 = vmatprep.subr.mxu0 0.0
    %237 = vmatpush2.msra.mxu0 0.0
    %238 = vmatprep.subr.mxu0 0.0
    %239 = vmatpush2.msra.mxu0 0.0
    %240 = vmatprep.mubr.f32.mxu0 0.0
    %241 = vmatmul.mubr.f32.gmra.mxu0 %v153
    %v242 = vpop.f32.mrf.mxu0
    %v243 = vadd.f32 %v139, %v242
    %v244 = vpop.f32.mrf.mxu0
    %v245 = vadd.f32 %v143, %v244
    %246 = vmatprep.mubr.f32.mxu0 0.0
    %247 = vmatmul.mubr.f32.gmra.mxu0 %v156
    %v248 = vpop.f32.mrf.mxu0
    %v249 = vadd.f32 %v139, %v248
    %v250 = vpop.f32.mrf.mxu0
    %v251 = vadd.f32 %v143, %v250
    %252 = vmatprep.mubr.f32.mxu0 0.0
    %253 = vmatmul.mubr.f32.gmra.mxu0 %v159
    %v254 = vpop.f32.mrf.mxu0
    %v255 = vadd.f32 %v139, %v254
    %v256 = vpop.f32.mrf.mxu0
    %v257 = vadd.f32 %v143, %v256
    %258 = vmatprep.mubr.f32.mxu0 0.0
    %259 = vmatmul.mubr.f32.gmra.mxu0 %v162
    %v260 = vpop.f32.mrf.mxu0
    %v261 = vadd.f32 %v139, %v260
    %v262 = vpop.f32.mrf.mxu0
    %v263 = vadd.f32 %v143, %v262
    %264 = vmatprep.mubr.f32.mxu0 0.0
    %265 = vmatmul.mubr.f32.gmra.mxu0 %v165
    %v266 = vpop.f32.mrf.mxu0
    %v267 = vadd.f32 %v139, %v266
    %v268 = vpop.f32.mrf.mxu0
    %v269 = vadd.f32 %v143, %v268
    %270 = vmatprep.mubr.f32.mxu0 0.0
    %271 = vmatmul.mubr.f32.gmra.mxu0 %v168
    %v272 = vpop.f32.mrf.mxu0
    %v273 = vadd.f32 %v139, %v272
    %v274 = vpop.f32.mrf.mxu0
    %v275 = vadd.f32 %v143, %v274
    %276 = vmatprep.mubr.f32.mxu0 0.0
    %277 = vmatmul.mubr.f32.gmra.mxu0 %v171
    %v278 = vpop.f32.mrf.mxu0
    %v279 = vadd.f32 %v139, %v278
    %v280 = vpop.f32.mrf.mxu0
    %v281 = vadd.f32 %v143, %v280
    %282 = vmatprep.mubr.f32.mxu0 0.0
    %283 = vmatmul.mubr.f32.gmra.mxu0 %v174
    %v284 = vpop.f32.mrf.mxu0
    %v285 = vadd.f32 %v139, %v284
    %v286 = vpop.f32.mrf.mxu0
    %v287 = vadd.f32 %v143, %v286
    %288 = vdwg.mxu0
    %289 = vmatprep.subr.mxu0 0.0
    %290 = vmatpush1.msra.mxu0 0.0
    %291 = vmatprep.subr.mxu0 0.0
    %292 = vmatpush1.msra.mxu0 0.0
    %293 = vmatprep.subr.mxu0 0.0
    %294 = vmatpush1.msra.mxu0 0.0
    %295 = vmatprep.subr.mxu0 0.0
    %296 = vmatpush1.msra.mxu0 0.0
    %297 = vmatprep.subr.mxu0 0.0
    %298 = vmatpush1.msra.mxu0 0.0
    %299 = vmatprep.subr.mxu0 0.0
    %300 = vmatpush1.msra.mxu0 0.0
    %301 = vmatprep.subr.mxu0 0.0
    %302 = vmatpush1.msra.mxu0 0.0
    %303 = vmatprep.subr.mxu0 0.0
    %304 = vmatpush1.msra.mxu0 0.0
    %305 = vmatprep.subr.mxu0 0.0
    %306 = vmatpush1.msra.mxu0 0.0
    %307 = vmatprep.subr.mxu0 0.0
    %308 = vmatpush1.msra.mxu0 0.0
    %309 = vmatprep.subr.mxu0 0.0
    %310 = vmatpush1.msra.mxu0 0.0
    %311 = vmatprep.subr.mxu0 0.0
    %312 = vmatpush1.msra.mxu0 0.0
    %313 = vmatprep.subr.mxu0 0.0
    %314 = vmatpush1.msra.mxu0 %v133
    %315 = vmatprep.subr.mxu0 0.0
    %316 = vmatpush1.msra.mxu0 %v130
    %317 = vmatprep.subr.mxu0 0.0
    %318 = vmatpush1.msra.mxu0 %v127
    %319 = vmatprep.subr.mxu0 0.0
    %320 = vmatpush1.msra.mxu0 %v124
    %321 = vmatprep.subr.mxu0 0.0
    %322 = vmatpush2.msra.mxu0 0.0
    %323 = vmatprep.subr.mxu0 0.0
    %324 = vmatpush2.msra.mxu0 0.0
    %325 = vmatprep.subr.mxu0 0.0
    %326 = vmatpush2.msra.mxu0 0.0
    %327 = vmatprep.subr.mxu0 0.0
    %328 = vmatpush2.msra.mxu0 0.0
    %329 = vmatprep.subr.mxu0 0.0
    %330 = vmatpush2.msra.mxu0 0.0
    %331 = vmatprep.subr.mxu0 0.0
    %332 = vmatpush2.msra.mxu0 0.0
    %333 = vmatprep.subr.mxu0 0.0
    %334 = vmatpush2.msra.mxu0 0.0
    %335 = vmatprep.subr.mxu0 0.0
    %336 = vmatpush2.msra.mxu0 0.0
    %337 = vmatprep.subr.mxu0 0.0
    %338 = vmatpush2.msra.mxu0 0.0
    %339 = vmatprep.subr.mxu0 0.0
    %340 = vmatpush2.msra.mxu0 0.0
    %341 = vmatprep.subr.mxu0 0.0
    %342 = vmatpush2.msra.mxu0 0.0
    %343 = vmatprep.subr.mxu0 0.0
    %344 = vmatpush2.msra.mxu0 0.0
    %345 = vmatprep.subr.mxu0 0.0
    %346 = vmatpush2.msra.mxu0 0.0
    %347 = vmatprep.subr.mxu0 0.0
    %348 = vmatpush2.msra.mxu0 0.0
    %349 = vmatprep.subr.mxu0 0.0
    %350 = vmatpush2.msra.mxu0 0.0
    %351 = vmatprep.subr.mxu0 0.0
    %352 = vmatpush2.msra.mxu0 0.0
    %353 = vmatprep.mubr.f32.mxu0 0.0
    %354 = vmatmul.mubr.f32.gmra.mxu0 %v153
    %v355 = vpop.f32.mrf.mxu0
    %v356 = vadd.f32 %v147, %v355
    %v357 = vpop.f32.mrf.mxu0
    %358 = vmatprep.mubr.f32.mxu0 0.0
    %359 = vmatmul.mubr.f32.gmra.mxu0 %v156
    %v360 = vpop.f32.mrf.mxu0
    %v361 = vadd.f32 %v147, %v360
    %v362 = vpop.f32.mrf.mxu0
    %363 = vmatprep.mubr.f32.mxu0 0.0
    %364 = vmatmul.mubr.f32.gmra.mxu0 %v159
    %v365 = vpop.f32.mrf.mxu0
    %v366 = vadd.f32 %v147, %v365
    %v367 = vpop.f32.mrf.mxu0
    %368 = vmatprep.mubr.f32.mxu0 0.0
    %369 = vmatmul.mubr.f32.gmra.mxu0 %v162
    %v370 = vpop.f32.mrf.mxu0
    %v371 = vadd.f32 %v147, %v370
    %v372 = vpop.f32.mrf.mxu0
    %373 = vmatprep.mubr.f32.mxu0 0.0
    %374 = vmatmul.mubr.f32.gmra.mxu0 %v165
    %v375 = vpop.f32.mrf.mxu0
    %v376 = vadd.f32 %v147, %v375
    %v377 = vpop.f32.mrf.mxu0
    %378 = vmatprep.mubr.f32.mxu0 0.0
    %379 = vmatmul.mubr.f32.gmra.mxu0 %v168
    %v380 = vpop.f32.mrf.mxu0
    %v381 = vadd.f32 %v147, %v380
    %v382 = vpop.f32.mrf.mxu0
    %383 = vmatprep.mubr.f32.mxu0 0.0
    %384 = vmatmul.mubr.f32.gmra.mxu0 %v171
    %v385 = vpop.f32.mrf.mxu0
    %v386 = vadd.f32 %v147, %v385
    %v387 = vpop.f32.mrf.mxu0
    %388 = vmatprep.mubr.f32.mxu0 0.0
    %389 = vmatmul.mubr.f32.gmra.mxu0 %v174
    %v390 = vpop.f32.mrf.mxu0
    %v391 = vadd.f32 %v147, %v390
    %v392 = vpop.f32.mrf.mxu0
    %393 = vdwg.mxu0
    %394 = vst [vmem:[#allocation2] sm:$0xff] %v243
    %395 = vst [vmem:[#allocation2 + $0x8] sm:$0xff] %v245
    %396 = vst [vmem:[#allocation2 + $0x10] sm:$0xff] %v356
    %397 = vst [vmem:[#allocation2 + $0x18] sm:$0xff] %v249
    %398 = vst [vmem:[#allocation2 + $0x20] sm:$0xff] %v251
    %399 = vst [vmem:[#allocation2 + $0x28] sm:$0xff] %v361
    %400 = vst [vmem:[#allocation2 + $0x30] sm:$0xff] %v255
    %401 = vst [vmem:[#allocation2 + $0x38] sm:$0xff] %v257
    %402 = vst [vmem:[#allocation2 + $0x40] sm:$0xff] %v366
    %403 = vst [vmem:[#allocation2 + $0x48] sm:$0xff] %v261
    %404 = vst [vmem:[#allocation2 + $0x50] sm:$0xff] %v263
    %405 = vst [vmem:[#allocation2 + $0x58] sm:$0xff] %v371
    %406 = vst [vmem:[#allocation2 + $0x60] sm:$0xff] %v267
    %407 = vst [vmem:[#allocation2 + $0x68] sm:$0xff] %v269
    %408 = vst [vmem:[#allocation2 + $0x70] sm:$0xff] %v376
    %409 = vst [vmem:[#allocation2 + $0x78] sm:$0xff] %v273
    %410 = vst [vmem:[#allocation2 + $0x80] sm:$0xff] %v275
    %411 = vst [vmem:[#allocation2 + $0x88] sm:$0xff] %v381
    %412 = vst [vmem:[#allocation2 + $0x90] sm:$0xff] %v279
    %413 = vst [vmem:[#allocation2 + $0x98] sm:$0xff] %v281
    %414 = vst [vmem:[#allocation2 + $0xa0] sm:$0xff] %v386
    %415 = vst [vmem:[#allocation2 + $0xa8] sm:$0xff] %v285
    %416 = vst [vmem:[#allocation2 + $0xb0] sm:$0xff] %v287
    %417 = vst [vmem:[#allocation2 + $0xb8] sm:$0xff] %v391
    %v418 = vld [vmem:[#allocation9] sm:$0xff]
    %v419 = vld [vmem:[#allocation9 + $0x8] sm:$0xff]
    %v420 = vld [vmem:[#allocation9 + $0x10] sm:$0xff]
    %v421 = vld [vmem:[#allocation9 + $0x18] sm:$0xff]
    %v422 = vld [vmem:[#allocation9 + $0x20] sm:$0xff]
    %v423 = vld [vmem:[#allocation9 + $0x28] sm:$0xff]
    %v424 = vld [vmem:[#allocation9 + $0x30] sm:$0xff]
    %v425 = vld [vmem:[#allocation9 + $0x38] sm:$0xff]
    %v426 = vld [vmem:[#allocation9 + $0x40] sm:$0xff]
    %v427 = vld [vmem:[#allocation9 + $0x48] sm:$0xff]
    %v428 = vld [vmem:[#allocation9 + $0x50] sm:$0xff]
    %v429 = vld [vmem:[#allocation9 + $0x58] sm:$0xff]
    %v430 = vld [vmem:[%s8] sm:$0x7]
    %v432 = vlaneseq
    %v433 = vshrl.u32 %v432, 7
    %v434 = vsub.s32 0, %v433
    %v435 = vrot.slane %v430, %v434
    %v436 = vlaneseq
    %v437 = vshrl.u32 %v436, 7
    %v438 = vsub.s32 1, %v437
    %v439 = vrot.slane %v430, %v438
    %v440 = vlaneseq
    %v441 = vshrl.u32 %v440, 7
    %v442 = vsub.s32 2, %v441
    %v443 = vrot.slane %v430, %v442
    %447 = vmatprep.subr.mxu0 0.0
    %448 = vmatpush1.msra.mxu0 0.0
    %449 = vmatprep.subr.mxu0 0.0
    %450 = vmatpush1.msra.mxu0 0.0
    %451 = vmatprep.subr.mxu0 0.0
    %452 = vmatpush1.msra.mxu0 0.0
    %453 = vmatprep.subr.mxu0 0.0
    %454 = vmatpush1.msra.mxu0 0.0
    %455 = vmatprep.subr.mxu0 0.0
    %456 = vmatpush1.msra.mxu0 0.0
    %457 = vmatprep.subr.mxu0 0.0
    %458 = vmatpush1.msra.mxu0 0.0
    %459 = vmatprep.subr.mxu0 0.0
    %460 = vmatpush1.msra.mxu0 0.0
    %461 = vmatprep.subr.mxu0 0.0
    %462 = vmatpush1.msra.mxu0 0.0
    %463 = vmatprep.subr.mxu0 0.0
    %464 = vmatpush1.msra.mxu0 0.0
    %465 = vmatprep.subr.mxu0 0.0
    %466 = vmatpush1.msra.mxu0 0.0
    %467 = vmatprep.subr.mxu0 0.0
    %468 = vmatpush1.msra.mxu0 0.0
    %469 = vmatprep.subr.mxu0 0.0
    %470 = vmatpush1.msra.mxu0 0.0
    %471 = vmatprep.subr.mxu0 %v428
    %472 = vmatpush1.msra.mxu0 %v427
    %473 = vmatprep.subr.mxu0 %v425
    %474 = vmatpush1.msra.mxu0 %v424
    %475 = vmatprep.subr.mxu0 %v422
    %476 = vmatpush1.msra.mxu0 %v421
    %477 = vmatprep.subr.mxu0 %v419
    %478 = vmatpush1.msra.mxu0 %v418
    %479 = vmatprep.subr.mxu0 0.0
    %480 = vmatpush2.msra.mxu0 0.0
    %481 = vmatprep.subr.mxu0 0.0
    %482 = vmatpush2.msra.mxu0 0.0
    %483 = vmatprep.subr.mxu0 0.0
    %484 = vmatpush2.msra.mxu0 0.0
    %485 = vmatprep.subr.mxu0 0.0
    %486 = vmatpush2.msra.mxu0 0.0
    %487 = vmatprep.subr.mxu0 0.0
    %488 = vmatpush2.msra.mxu0 0.0
    %489 = vmatprep.subr.mxu0 0.0
    %490 = vmatpush2.msra.mxu0 0.0
    %491 = vmatprep.subr.mxu0 0.0
    %492 = vmatpush2.msra.mxu0 0.0
    %493 = vmatprep.subr.mxu0 0.0
    %494 = vmatpush2.msra.mxu0 0.0
    %495 = vmatprep.subr.mxu0 0.0
    %496 = vmatpush2.msra.mxu0 0.0
    %497 = vmatprep.subr.mxu0 0.0
    %498 = vmatpush2.msra.mxu0 0.0
    %499 = vmatprep.subr.mxu0 0.0
    %500 = vmatpush2.msra.mxu0 0.0
    %501 = vmatprep.subr.mxu0 0.0
    %502 = vmatpush2.msra.mxu0 0.0
    %503 = vmatprep.subr.mxu0 0.0
    %504 = vmatpush2.msra.mxu0 0.0
    %505 = vmatprep.subr.mxu0 0.0
    %506 = vmatpush2.msra.mxu0 0.0
    %507 = vmatprep.subr.mxu0 0.0
    %508 = vmatpush2.msra.mxu0 0.0
    %509 = vmatprep.subr.mxu0 0.0
    %510 = vmatpush2.msra.mxu0 0.0
    %511 = vmatprep.mubr.f32.mxu0 0.0
    %512 = vmatmul.mubr.f32.gmra.mxu0 %v153
    %v513 = vpop.f32.mrf.mxu0
    %v514 = vadd.f32 %v435, %v513
    %v515 = vpop.f32.mrf.mxu0
    %v516 = vadd.f32 %v439, %v515
    %517 = vmatprep.mubr.f32.mxu0 0.0
    %518 = vmatmul.mubr.f32.gmra.mxu0 %v156
    %v519 = vpop.f32.mrf.mxu0
    %v520 = vadd.f32 %v435, %v519
    %v521 = vpop.f32.mrf.mxu0
    %v522 = vadd.f32 %v439, %v521
    %523 = vmatprep.mubr.f32.mxu0 0.0
    %524 = vmatmul.mubr.f32.gmra.mxu0 %v159
    %v525 = vpop.f32.mrf.mxu0
    %v526 = vadd.f32 %v435, %v525
    %v527 = vpop.f32.mrf.mxu0
    %v528 = vadd.f32 %v439, %v527
    %529 = vmatprep.mubr.f32.mxu0 0.0
    %530 = vmatmul.mubr.f32.gmra.mxu0 %v162
    %v531 = vpop.f32.mrf.mxu0
    %v532 = vadd.f32 %v435, %v531
    %v533 = vpop.f32.mrf.mxu0
    %v534 = vadd.f32 %v439, %v533
    %535 = vmatprep.mubr.f32.mxu0 0.0
    %536 = vmatmul.mubr.f32.gmra.mxu0 %v165
    %v537 = vpop.f32.mrf.mxu0
    %v538 = vadd.f32 %v435, %v537
    %v539 = vpop.f32.mrf.mxu0
    %v540 = vadd.f32 %v439, %v539
    %541 = vmatprep.mubr.f32.mxu0 0.0
    %542 = vmatmul.mubr.f32.gmra.mxu0 %v168
    %v543 = vpop.f32.mrf.mxu0
    %v544 = vadd.f32 %v435, %v543
    %v545 = vpop.f32.mrf.mxu0
    %v546 = vadd.f32 %v439, %v545
    %547 = vmatprep.mubr.f32.mxu0 0.0
    %548 = vmatmul.mubr.f32.gmra.mxu0 %v171
    %v549 = vpop.f32.mrf.mxu0
    %v550 = vadd.f32 %v435, %v549
    %v551 = vpop.f32.mrf.mxu0
    %v552 = vadd.f32 %v439, %v551
    %553 = vmatprep.mubr.f32.mxu0 0.0
    %554 = vmatmul.mubr.f32.gmra.mxu0 %v174
    %v555 = vpop.f32.mrf.mxu0
    %v556 = vadd.f32 %v435, %v555
    %v557 = vpop.f32.mrf.mxu0
    %v558 = vadd.f32 %v439, %v557
    %559 = vdwg.mxu0
    %560 = vmatprep.subr.mxu0 0.0
    %561 = vmatpush1.msra.mxu0 0.0
    %562 = vmatprep.subr.mxu0 0.0
    %563 = vmatpush1.msra.mxu0 0.0
    %564 = vmatprep.subr.mxu0 0.0
    %565 = vmatpush1.msra.mxu0 0.0
    %566 = vmatprep.subr.mxu0 0.0
    %567 = vmatpush1.msra.mxu0 0.0
    %568 = vmatprep.subr.mxu0 0.0
    %569 = vmatpush1.msra.mxu0 0.0
    %570 = vmatprep.subr.mxu0 0.0
    %571 = vmatpush1.msra.mxu0 0.0
    %572 = vmatprep.subr.mxu0 0.0
    %573 = vmatpush1.msra.mxu0 0.0
    %574 = vmatprep.subr.mxu0 0.0
    %575 = vmatpush1.msra.mxu0 0.0
    %576 = vmatprep.subr.mxu0 0.0
    %577 = vmatpush1.msra.mxu0 0.0
    %578 = vmatprep.subr.mxu0 0.0
    %579 = vmatpush1.msra.mxu0 0.0
    %580 = vmatprep.subr.mxu0 0.0
    %581 = vmatpush1.msra.mxu0 0.0
    %582 = vmatprep.subr.mxu0 0.0
    %583 = vmatpush1.msra.mxu0 0.0
    %584 = vmatprep.subr.mxu0 0.0
    %585 = vmatpush1.msra.mxu0 %v429
    %586 = vmatprep.subr.mxu0 0.0
    %587 = vmatpush1.msra.mxu0 %v426
    %588 = vmatprep.subr.mxu0 0.0
    %589 = vmatpush1.msra.mxu0 %v423
    %590 = vmatprep.subr.mxu0 0.0
    %591 = vmatpush1.msra.mxu0 %v420
    %592 = vmatprep.subr.mxu0 0.0
    %593 = vmatpush2.msra.mxu0 0.0
    %594 = vmatprep.subr.mxu0 0.0
    %595 = vmatpush2.msra.mxu0 0.0
    %596 = vmatprep.subr.mxu0 0.0
    %597 = vmatpush2.msra.mxu0 0.0
    %598 = vmatprep.subr.mxu0 0.0
    %599 = vmatpush2.msra.mxu0 0.0
    %600 = vmatprep.subr.mxu0 0.0
    %601 = vmatpush2.msra.mxu0 0.0
    %602 = vmatprep.subr.mxu0 0.0
    %603 = vmatpush2.msra.mxu0 0.0
    %604 = vmatprep.subr.mxu0 0.0
    %605 = vmatpush2.msra.mxu0 0.0
    %606 = vmatprep.subr.mxu0 0.0
    %607 = vmatpush2.msra.mxu0 0.0
    %608 = vmatprep.subr.mxu0 0.0
    %609 = vmatpush2.msra.mxu0 0.0
    %610 = vmatprep.subr.mxu0 0.0
    %611 = vmatpush2.msra.mxu0 0.0
    %612 = vmatprep.subr.mxu0 0.0
    %613 = vmatpush2.msra.mxu0 0.0
    %614 = vmatprep.subr.mxu0 0.0
    %615 = vmatpush2.msra.mxu0 0.0
    %616 = vmatprep.subr.mxu0 0.0
    %617 = vmatpush2.msra.mxu0 0.0
    %618 = vmatprep.subr.mxu0 0.0
    %619 = vmatpush2.msra.mxu0 0.0
    %620 = vmatprep.subr.mxu0 0.0
    %621 = vmatpush2.msra.mxu0 0.0
    %622 = vmatprep.subr.mxu0 0.0
    %623 = vmatpush2.msra.mxu0 0.0
    %624 = vmatprep.mubr.f32.mxu0 0.0
    %625 = vmatmul.mubr.f32.gmra.mxu0 %v153
    %v626 = vpop.f32.mrf.mxu0
    %v627 = vadd.f32 %v443, %v626
    %v628 = vpop.f32.mrf.mxu0
    %629 = vmatprep.mubr.f32.mxu0 0.0
    %630 = vmatmul.mubr.f32.gmra.mxu0 %v156
    %v631 = vpop.f32.mrf.mxu0
    %v632 = vadd.f32 %v443, %v631
    %v633 = vpop.f32.mrf.mxu0
    %634 = vmatprep.mubr.f32.mxu0 0.0
    %635 = vmatmul.mubr.f32.gmra.mxu0 %v159
    %v636 = vpop.f32.mrf.mxu0
    %v637 = vadd.f32 %v443, %v636
    %v638 = vpop.f32.mrf.mxu0
    %639 = vmatprep.mubr.f32.mxu0 0.0
    %640 = vmatmul.mubr.f32.gmra.mxu0 %v162
    %v641 = vpop.f32.mrf.mxu0
    %v642 = vadd.f32 %v443, %v641
    %v643 = vpop.f32.mrf.mxu0
    %644 = vmatprep.mubr.f32.mxu0 0.0
    %645 = vmatmul.mubr.f32.gmra.mxu0 %v165
    %v646 = vpop.f32.mrf.mxu0
    %v647 = vadd.f32 %v443, %v646
    %v648 = vpop.f32.mrf.mxu0
    %649 = vmatprep.mubr.f32.mxu0 0.0
    %650 = vmatmul.mubr.f32.gmra.mxu0 %v168
    %v651 = vpop.f32.mrf.mxu0
    %v652 = vadd.f32 %v443, %v651
    %v653 = vpop.f32.mrf.mxu0
    %654 = vmatprep.mubr.f32.mxu0 0.0
    %655 = vmatmul.mubr.f32.gmra.mxu0 %v171
    %v656 = vpop.f32.mrf.mxu0
    %v657 = vadd.f32 %v443, %v656
    %v658 = vpop.f32.mrf.mxu0
    %659 = vmatprep.mubr.f32.mxu0 0.0
    %660 = vmatmul.mubr.f32.gmra.mxu0 %v174
    %v661 = vpop.f32.mrf.mxu0
    %v662 = vadd.f32 %v443, %v661
    %v663 = vpop.f32.mrf.mxu0
    %664 = vdwg.mxu0
    %665 = vst [vmem:[#allocation3] sm:$0xff] %v514
    %666 = vst [vmem:[#allocation3 + $0x8] sm:$0xff] %v516
    %667 = vst [vmem:[#allocation3 + $0x10] sm:$0xff] %v627
    %668 = vst [vmem:[#allocation3 + $0x18] sm:$0xff] %v520
    %669 = vst [vmem:[#allocation3 + $0x20] sm:$0xff] %v522
    %670 = vst [vmem:[#allocation3 + $0x28] sm:$0xff] %v632
    %671 = vst [vmem:[#allocation3 + $0x30] sm:$0xff] %v526
    %672 = vst [vmem:[#allocation3 + $0x38] sm:$0xff] %v528
    %673 = vst [vmem:[#allocation3 + $0x40] sm:$0xff] %v637
    %674 = vst [vmem:[#allocation3 + $0x48] sm:$0xff] %v532
    %675 = vst [vmem:[#allocation3 + $0x50] sm:$0xff] %v534
    %676 = vst [vmem:[#allocation3 + $0x58] sm:$0xff] %v642
    %677 = vst [vmem:[#allocation3 + $0x60] sm:$0xff] %v538
    %678 = vst [vmem:[#allocation3 + $0x68] sm:$0xff] %v540
    %679 = vst [vmem:[#allocation3 + $0x70] sm:$0xff] %v647
    %680 = vst [vmem:[#allocation3 + $0x78] sm:$0xff] %v544
    %681 = vst [vmem:[#allocation3 + $0x80] sm:$0xff] %v546
    %682 = vst [vmem:[#allocation3 + $0x88] sm:$0xff] %v652
    %683 = vst [vmem:[#allocation3 + $0x90] sm:$0xff] %v550
    %684 = vst [vmem:[#allocation3 + $0x98] sm:$0xff] %v552
    %685 = vst [vmem:[#allocation3 + $0xa0] sm:$0xff] %v657
    %686 = vst [vmem:[#allocation3 + $0xa8] sm:$0xff] %v556
    %687 = vst [vmem:[#allocation3 + $0xb0] sm:$0xff] %v558
    %688 = vst [vmem:[#allocation3 + $0xb8] sm:$0xff] %v662
    %v689 = vld [vmem:[#allocation7] sm:$0xff]
    %v690 = vld [vmem:[#allocation7 + $0x8] sm:$0xff]
    %v691 = vld [vmem:[#allocation7 + $0x10] sm:$0xff]
    %v692 = vld [vmem:[#allocation7 + $0x18] sm:$0xff]
    %v693 = vld [vmem:[#allocation7 + $0x20] sm:$0xff]
    %v694 = vld [vmem:[#allocation7 + $0x28] sm:$0xff]
    %v695 = vld [vmem:[#allocation7 + $0x30] sm:$0xff]
    %v696 = vld [vmem:[#allocation7 + $0x38] sm:$0xff]
    %v697 = vld [vmem:[#allocation7 + $0x40] sm:$0xff]
    %v698 = vld [vmem:[#allocation7 + $0x48] sm:$0xff]
    %v699 = vld [vmem:[#allocation7 + $0x50] sm:$0xff]
    %v700 = vld [vmem:[#allocation7 + $0x58] sm:$0xff]
    %v701 = vld [vmem:[#allocation7 + $0x60] sm:$0xff]
    %v702 = vld [vmem:[#allocation7 + $0x68] sm:$0xff]
    %v703 = vld [vmem:[#allocation7 + $0x70] sm:$0xff]
    %v704 = vld [vmem:[#allocation7 + $0x78] sm:$0xff]
    %v705 = vld [vmem:[#allocation7 + $0x80] sm:$0xff]
    %v706 = vld [vmem:[#allocation7 + $0x88] sm:$0xff]
    %v707 = vld [vmem:[#allocation7 + $0x90] sm:$0xff]
    %v708 = vld [vmem:[#allocation7 + $0x98] sm:$0xff]
    %v709 = vld [vmem:[#allocation7 + $0xa0] sm:$0xff]
    %v710 = vld [vmem:[#allocation7 + $0xa8] sm:$0xff]
    %v711 = vld [vmem:[#allocation7 + $0xb0] sm:$0xff]
    %v712 = vld [vmem:[#allocation7 + $0xb8] sm:$0xff]
    %v713 = vld [vmem:[#allocation7 + $0xc0] sm:$0xff]
    %v714 = vld [vmem:[#allocation7 + $0xc8] sm:$0xff]
    %v715 = vld [vmem:[#allocation7 + $0xd0] sm:$0xff]
    %v716 = vld [vmem:[#allocation7 + $0xd8] sm:$0xff]
    %v717 = vld [vmem:[#allocation7 + $0xe0] sm:$0xff]
    %v718 = vld [vmem:[#allocation7 + $0xe8] sm:$0xff]
    %v719 = vld [vmem:[#allocation7 + $0xf0] sm:$0xff]
    %v720 = vld [vmem:[#allocation7 + $0xf8] sm:$0xff]
    %v721 = vld [vmem:[#allocation7 + $0x100] sm:$0xff]
    %v722 = vld [vmem:[#allocation7 + $0x108] sm:$0xff]
    %v723 = vld [vmem:[#allocation7 + $0x110] sm:$0xff]
    %v724 = vld [vmem:[#allocation7 + $0x118] sm:$0xff]
    %v725 = vld [vmem:[#allocation7 + $0x120] sm:$0xff]
    %v726 = vld [vmem:[#allocation7 + $0x128] sm:$0xff]
    %v727 = vld [vmem:[#allocation7 + $0x130] sm:$0xff]
    %v728 = vld [vmem:[#allocation7 + $0x138] sm:$0xff]
    %v729 = vld [vmem:[#allocation7 + $0x140] sm:$0xff]
    %v730 = vld [vmem:[#allocation7 + $0x148] sm:$0xff]
    %v731 = vld [vmem:[#allocation7 + $0x150] sm:$0xff]
    %v732 = vld [vmem:[#allocation7 + $0x158] sm:$0xff]
    %v733 = vld [vmem:[#allocation7 + $0x160] sm:$0xff]
    %v734 = vld [vmem:[#allocation7 + $0x168] sm:$0xff]
    %v735 = vld [vmem:[#allocation7 + $0x170] sm:$0xff]
    %v736 = vld [vmem:[#allocation7 + $0x178] sm:$0xff]
    %v737 = vld [vmem:[#allocation10] sm:$0xff]
    %v738 = vld [vmem:[#allocation10 + $0x8] sm:$0xff]
    %v739 = vld [vmem:[#allocation10 + $0x10] sm:$0xff]
    %v740 = vld [vmem:[#allocation10 + $0x18] sm:$0xff]
    %v741 = vld [vmem:[#allocation10 + $0x20] sm:$0xff]
    %v742 = vld [vmem:[#allocation10 + $0x28] sm:$0xff]
    %v743 = vld [vmem:[#allocation10 + $0x30] sm:$0xff]
    %v744 = vld [vmem:[#allocation10 + $0x38] sm:$0xff]
    %v745 = vld [vmem:[#allocation10 + $0x40] sm:$0xff]
    %v746 = vld [vmem:[#allocation10 + $0x48] sm:$0xff]
    %v747 = vld [vmem:[#allocation10 + $0x50] sm:$0xff]
    %v748 = vld [vmem:[#allocation10 + $0x58] sm:$0xff]
    %v749 = vld [vmem:[#allocation10 + $0x60] sm:$0xff]
    %v750 = vld [vmem:[#allocation10 + $0x68] sm:$0xff]
    %v751 = vld [vmem:[#allocation10 + $0x70] sm:$0xff]
    %v752 = vld [vmem:[#allocation10 + $0x78] sm:$0xff]
    %v753 = vld [vmem:[#allocation10 + $0x80] sm:$0xff]
    %v754 = vld [vmem:[#allocation10 + $0x88] sm:$0xff]
    %v755 = vld [vmem:[#allocation10 + $0x90] sm:$0xff]
    %v756 = vld [vmem:[#allocation10 + $0x98] sm:$0xff]
    %v757 = vld [vmem:[#allocation10 + $0xa0] sm:$0xff]
    %v758 = vld [vmem:[#allocation10 + $0xa8] sm:$0xff]
    %v759 = vld [vmem:[#allocation10 + $0xb0] sm:$0xff]
    %v760 = vld [vmem:[#allocation10 + $0xb8] sm:$0xff]
    %v761 = vld [vmem:[#allocation10 + $0xc0] sm:$0xff]
    %v762 = vld [vmem:[#allocation10 + $0xc8] sm:$0xff]
    %v763 = vld [vmem:[#allocation10 + $0xd0] sm:$0xff]
    %v764 = vld [vmem:[#allocation10 + $0xd8] sm:$0xff]
    %v765 = vld [vmem:[#allocation10 + $0xe0] sm:$0xff]
    %v766 = vld [vmem:[#allocation10 + $0xe8] sm:$0xff]
    %v767 = vld [vmem:[#allocation10 + $0xf0] sm:$0xff]
    %v768 = vld [vmem:[#allocation10 + $0xf8] sm:$0xff]
    %v769 = vld [vmem:[#allocation10 + $0x100] sm:$0xff]
    %v770 = vld [vmem:[#allocation10 + $0x108] sm:$0xff]
    %v771 = vld [vmem:[#allocation10 + $0x110] sm:$0xff]
    %v772 = vld [vmem:[#allocation10 + $0x118] sm:$0xff]
    %v773 = vld [vmem:[#allocation10 + $0x120] sm:$0xff]
    %v774 = vld [vmem:[#allocation10 + $0x128] sm:$0xff]
    %v775 = vld [vmem:[#allocation10 + $0x130] sm:$0xff]
    %v776 = vld [vmem:[#allocation10 + $0x138] sm:$0xff]
    %v777 = vld [vmem:[#allocation10 + $0x140] sm:$0xff]
    %v778 = vld [vmem:[#allocation10 + $0x148] sm:$0xff]
    %v779 = vld [vmem:[#allocation10 + $0x150] sm:$0xff]
    %v780 = vld [vmem:[#allocation10 + $0x158] sm:$0xff]
    %v781 = vld [vmem:[#allocation10 + $0x160] sm:$0xff]
    %v782 = vld [vmem:[#allocation10 + $0x168] sm:$0xff]
    %v783 = vld [vmem:[#allocation10 + $0x170] sm:$0xff]
    %v784 = vld [vmem:[#allocation10 + $0x178] sm:$0xff]
    %v785 = vld [vmem:[%s5] sm:$0x1]
    %v786 = vld [vmem:[%s9] sm:$0x1]
    %v787 = vld [vmem:[#allocation2] sm:$0xff]
    %v788 = vld [vmem:[#allocation2 + $0x8] sm:$0xff]
    %v789 = vld [vmem:[#allocation2 + $0x10] sm:$0xff]
    %v790 = vld [vmem:[#allocation4] sm:$0xff]
    %791 = vmatprep.subr.mxu0 %v735
    %792 = vmatpush1.msra.mxu0 %v734
    %793 = vmatprep.subr.mxu0 %v732
    %794 = vmatpush1.msra.mxu0 %v731
    %795 = vmatprep.subr.mxu0 %v729
    %796 = vmatpush1.msra.mxu0 %v728
    %797 = vmatprep.subr.mxu0 %v726
    %798 = vmatpush1.msra.mxu0 %v725
    %799 = vmatprep.subr.mxu0 %v723
    %800 = vmatpush1.msra.mxu0 %v722
    %801 = vmatprep.subr.mxu0 %v720
    %802 = vmatpush1.msra.mxu0 %v719
    %803 = vmatprep.subr.mxu0 %v717
    %804 = vmatpush1.msra.mxu0 %v716
    %805 = vmatprep.subr.mxu0 %v714
    %806 = vmatpush1.msra.mxu0 %v713
    %807 = vmatprep.subr.mxu0 %v711
    %808 = vmatpush1.msra.mxu0 %v710
    %809 = vmatprep.subr.mxu0 %v708
    %810 = vmatpush1.msra.mxu0 %v707
    %811 = vmatprep.subr.mxu0 %v705
    %812 = vmatpush1.msra.mxu0 %v704
    %813 = vmatprep.subr.mxu0 %v702
    %814 = vmatpush1.msra.mxu0 %v701
    %815 = vmatprep.subr.mxu0 %v699
    %816 = vmatpush1.msra.mxu0 %v698
    %817 = vmatprep.subr.mxu0 %v696
    %818 = vmatpush1.msra.mxu0 %v695
    %819 = vmatprep.subr.mxu0 %v693
    %820 = vmatpush1.msra.mxu0 %v692
    %821 = vmatprep.subr.mxu0 %v690
    %822 = vmatpush1.msra.mxu0 %v689
    %823 = vmatprep.subr.mxu0 0.0
    %824 = vmatpush2.msra.mxu0 0.0
    %825 = vmatprep.subr.mxu0 0.0
    %826 = vmatpush2.msra.mxu0 0.0
    %827 = vmatprep.subr.mxu0 0.0
    %828 = vmatpush2.msra.mxu0 0.0
    %829 = vmatprep.subr.mxu0 0.0
    %830 = vmatpush2.msra.mxu0 0.0
    %831 = vmatprep.subr.mxu0 0.0
    %832 = vmatpush2.msra.mxu0 0.0
    %833 = vmatprep.subr.mxu0 0.0
    %834 = vmatpush2.msra.mxu0 0.0
    %835 = vmatprep.subr.mxu0 0.0
    %836 = vmatpush2.msra.mxu0 0.0
    %837 = vmatprep.subr.mxu0 0.0
    %838 = vmatpush2.msra.mxu0 0.0
    %839 = vmatprep.subr.mxu0 0.0
    %840 = vmatpush2.msra.mxu0 0.0
    %841 = vmatprep.subr.mxu0 0.0
    %842 = vmatpush2.msra.mxu0 0.0
    %843 = vmatprep.subr.mxu0 0.0
    %844 = vmatpush2.msra.mxu0 0.0
    %845 = vmatprep.subr.mxu0 0.0
    %846 = vmatpush2.msra.mxu0 0.0
    %847 = vmatprep.subr.mxu0 0.0
    %848 = vmatpush2.msra.mxu0 0.0
    %849 = vmatprep.subr.mxu0 0.0
    %850 = vmatpush2.msra.mxu0 0.0
    %851 = vmatprep.subr.mxu0 0.0
    %852 = vmatpush2.msra.mxu0 0.0
    %853 = vmatprep.subr.mxu0 0.0
    %854 = vmatpush2.msra.mxu0 0.0
    %855 = vmatprep.mubr.f32.mxu0 0.0
    %856 = vmatmul.mubr.f32.gmra.mxu0 0.0
    %v857 = vpop.f32.mrf.mxu0
    %v858 = vadd.f32 0.0, %v857
    %v859 = vpop.f32.mrf.mxu0
    %v860 = vadd.f32 0.0, %v859
    %861 = vdwg.mxu0
    %862 = vmatprep.subr.mxu0 0.0
    %863 = vmatpush1.msra.mxu0 %v736
    %864 = vmatprep.subr.mxu0 0.0
    %865 = vmatpush1.msra.mxu0 %v733
    %866 = vmatprep.subr.mxu0 0.0
    %867 = vmatpush1.msra.mxu0 %v730
    %868 = vmatprep.subr.mxu0 0.0
    %869 = vmatpush1.msra.mxu0 %v727
    %870 = vmatprep.subr.mxu0 0.0
    %871 = vmatpush1.msra.mxu0 %v724
    %872 = vmatprep.subr.mxu0 0.0
    %873 = vmatpush1.msra.mxu0 %v721
    %874 = vmatprep.subr.mxu0 0.0
    %875 = vmatpush1.msra.mxu0 %v718
    %876 = vmatprep.subr.mxu0 0.0
    %877 = vmatpush1.msra.mxu0 %v715
    %878 = vmatprep.subr.mxu0 0.0
    %879 = vmatpush1.msra.mxu0 %v712
    %880 = vmatprep.subr.mxu0 0.0
    %881 = vmatpush1.msra.mxu0 %v709
    %882 = vmatprep.subr.mxu0 0.0
    %883 = vmatpush1.msra.mxu0 %v706
    %884 = vmatprep.subr.mxu0 0.0
    %885 = vmatpush1.msra.mxu0 %v703
    %886 = vmatprep.subr.mxu0 0.0
    %887 = vmatpush1.msra.mxu0 %v700
    %888 = vmatprep.subr.mxu0 0.0
    %889 = vmatpush1.msra.mxu0 %v697
    %890 = vmatprep.subr.mxu0 0.0
    %891 = vmatpush1.msra.mxu0 %v694
    %892 = vmatprep.subr.mxu0 0.0
    %893 = vmatpush1.msra.mxu0 %v691
    %894 = vmatprep.subr.mxu0 0.0
    %895 = vmatpush2.msra.mxu0 0.0
    %896 = vmatprep.subr.mxu0 0.0
    %897 = vmatpush2.msra.mxu0 0.0
    %898 = vmatprep.subr.mxu0 0.0
    %899 = vmatpush2.msra.mxu0 0.0
    %900 = vmatprep.subr.mxu0 0.0
    %901 = vmatpush2.msra.mxu0 0.0
    %902 = vmatprep.subr.mxu0 0.0
    %903 = vmatpush2.msra.mxu0 0.0
    %904 = vmatprep.subr.mxu0 0.0
    %905 = vmatpush2.msra.mxu0 0.0
    %906 = vmatprep.subr.mxu0 0.0
    %907 = vmatpush2.msra.mxu0 0.0
    %908 = vmatprep.subr.mxu0 0.0
    %909 = vmatpush2.msra.mxu0 0.0
    %910 = vmatprep.subr.mxu0 0.0
    %911 = vmatpush2.msra.mxu0 0.0
    %912 = vmatprep.subr.mxu0 0.0
    %913 = vmatpush2.msra.mxu0 0.0
    %914 = vmatprep.subr.mxu0 0.0
    %915 = vmatpush2.msra.mxu0 0.0
    %916 = vmatprep.subr.mxu0 0.0
    %917 = vmatpush2.msra.mxu0 0.0
    %918 = vmatprep.subr.mxu0 0.0
    %919 = vmatpush2.msra.mxu0 0.0
    %920 = vmatprep.subr.mxu0 0.0
    %921 = vmatpush2.msra.mxu0 0.0
    %922 = vmatprep.subr.mxu0 0.0
    %923 = vmatpush2.msra.mxu0 0.0
    %924 = vmatprep.subr.mxu0 0.0
    %925 = vmatpush2.msra.mxu0 0.0
    %926 = vmatprep.mubr.f32.mxu0 0.0
    %927 = vmatmul.mubr.f32.gmra.mxu0 0.0
    %v928 = vpop.f32.mrf.mxu0
    %v929 = vadd.f32 0.0, %v928
    %v930 = vpop.f32.mrf.mxu0
    %931 = vdwg.mxu0
    %v932 = vadd.f32 %v787, %v858
    %v933 = vxor.u32 %v932, 2147483648
    %v934 = vmul.f32 %v933, 1.442695
    %v935 = vpow.pop %v934
    %v936 = vadd.f32 %v935, 1.0
    %v937 = vrcp.pop %v936
    %v938 = vmul.f32 1.0, %v937
    %v939 = vadd.f32 %v788, %v860
    %v940 = vxor.u32 %v939, 2147483648
    %v941 = vmul.f32 %v940, 1.442695
    %v942 = vpow.pop %v941
    %v943 = vadd.f32 %v942, 1.0
    %v944 = vrcp.pop %v943
    %v945 = vmul.f32 1.0, %v944
    %v947 = vlaneseq
    %v948 = vshrl.u32 %v947, 7
    %v949 = vsub.s32 0, %v948
    %v950 = vrot.slane %v785, %v949
    %v952 = vadd.f32 %v929, %v950
    %v953 = vmul.f32 %v938, %v952
    %v954 = vadd.f32 %v789, %v953
    %v955 = vtanh.pop %v954
    %v956 = vsub.f32 1.0, %v945
    %v957 = vmul.f32 %v956, %v955
    %v958 = vmul.f32 %v945, 0.0
    %v959 = vadd.f32 %v957, %v958
    %v960 = vmul.f32 %v790, %v959
    %v961 = vadd.f32 %v960, 0.0
    %v962 = vld [vmem:[#allocation3 + $0xa8] sm:$0xff]
    %v963 = vld [vmem:[#allocation3 + $0xb0] sm:$0xff]
    %v964 = vld [vmem:[#allocation3 + $0xb8] sm:$0xff]
    %v965 = vld [vmem:[#allocation4 + $0x38] sm:$0xff]
    %966 = vmatprep.subr.mxu0 %v783
    %967 = vmatpush1.msra.mxu0 %v782
    %968 = vmatprep.subr.mxu0 %v780
    %969 = vmatpush1.msra.mxu0 %v779
    %970 = vmatprep.subr.mxu0 %v777
    %971 = vmatpush1.msra.mxu0 %v776
    %972 = vmatprep.subr.mxu0 %v774
    %973 = vmatpush1.msra.mxu0 %v773
    %974 = vmatprep.subr.mxu0 %v771
    %975 = vmatpush1.msra.mxu0 %v770
    %976 = vmatprep.subr.mxu0 %v768
    %977 = vmatpush1.msra.mxu0 %v767
    %978 = vmatprep.subr.mxu0 %v765
    %979 = vmatpush1.msra.mxu0 %v764
    %980 = vmatprep.subr.mxu0 %v762
    %981 = vmatpush1.msra.mxu0 %v761
    %982 = vmatprep.subr.mxu0 %v759
    %983 = vmatpush1.msra.mxu0 %v758
    %984 = vmatprep.subr.mxu0 %v756
    %985 = vmatpush1.msra.mxu0 %v755
    %986 = vmatprep.subr.mxu0 %v753
    %987 = vmatpush1.msra.mxu0 %v752
    %988 = vmatprep.subr.mxu0 %v750
    %989 = vmatpush1.msra.mxu0 %v749
    %990 = vmatprep.subr.mxu0 %v747
    %991 = vmatpush1.msra.mxu0 %v746
    %992 = vmatprep.subr.mxu0 %v744
    %993 = vmatpush1.msra.mxu0 %v743
    %994 = vmatprep.subr.mxu0 %v741
    %995 = vmatpush1.msra.mxu0 %v740
    %996 = vmatprep.subr.mxu0 %v738
    %997 = vmatpush1.msra.mxu0 %v737
    %998 = vmatprep.subr.mxu0 0.0
    %999 = vmatpush2.msra.mxu0 0.0
    %1000 = vmatprep.subr.mxu0 0.0
    %1001 = vmatpush2.msra.mxu0 0.0
    %1002 = vmatprep.subr.mxu0 0.0
    %1003 = vmatpush2.msra.mxu0 0.0
    %1004 = vmatprep.subr.mxu0 0.0
    %1005 = vmatpush2.msra.mxu0 0.0
    %1006 = vmatprep.subr.mxu0 0.0
    %1007 = vmatpush2.msra.mxu0 0.0
    %1008 = vmatprep.subr.mxu0 0.0
    %1009 = vmatpush2.msra.mxu0 0.0
    %1010 = vmatprep.subr.mxu0 0.0
    %1011 = vmatpush2.msra.mxu0 0.0
    %1012 = vmatprep.subr.mxu0 0.0
    %1013 = vmatpush2.msra.mxu0 0.0
    %1014 = vmatprep.subr.mxu0 0.0
    %1015 = vmatpush2.msra.mxu0 0.0
    %1016 = vmatprep.subr.mxu0 0.0
    %1017 = vmatpush2.msra.mxu0 0.0
    %1018 = vmatprep.subr.mxu0 0.0
    %1019 = vmatpush2.msra.mxu0 0.0
    %1020 = vmatprep.subr.mxu0 0.0
    %1021 = vmatpush2.msra.mxu0 0.0
    %1022 = vmatprep.subr.mxu0 0.0
    %1023 = vmatpush2.msra.mxu0 0.0
    %1024 = vmatprep.subr.mxu0 0.0
    %1025 = vmatpush2.msra.mxu0 0.0
    %1026 = vmatprep.subr.mxu0 0.0
    %1027 = vmatpush2.msra.mxu0 0.0
    %1028 = vmatprep.subr.mxu0 0.0
    %1029 = vmatpush2.msra.mxu0 0.0
    %1030 = vmatprep.mubr.f32.mxu0 0.0
    %1031 = vmatmul.mubr.f32.gmra.mxu0 0.0
    %v1032 = vpop.f32.mrf.mxu0
    %v1033 = vadd.f32 0.0, %v1032
    %v1034 = vpop.f32.mrf.mxu0
    %v1035 = vadd.f32 0.0, %v1034
    %1036 = vdwg.mxu0
    %1037 = vmatprep.subr.mxu0 0.0
    %1038 = vmatpush1.msra.mxu0 %v784
    %1039 = vmatprep.subr.mxu0 0.0
    %1040 = vmatpush1.msra.mxu0 %v781
    %1041 = vmatprep.subr.mxu0 0.0
    %1042 = vmatpush1.msra.mxu0 %v778
    %1043 = vmatprep.subr.mxu0 0.0
    %1044 = vmatpush1.msra.mxu0 %v775
    %1045 = vmatprep.subr.mxu0 0.0
    %1046 = vmatpush1.msra.mxu0 %v772
    %1047 = vmatprep.subr.mxu0 0.0
    %1048 = vmatpush1.msra.mxu0 %v769
    %1049 = vmatprep.subr.mxu0 0.0
    %1050 = vmatpush1.msra.mxu0 %v766
    %1051 = vmatprep.subr.mxu0 0.0
    %1052 = vmatpush1.msra.mxu0 %v763
    %1053 = vmatprep.subr.mxu0 0.0
    %1054 = vmatpush1.msra.mxu0 %v760
    %1055 = vmatprep.subr.mxu0 0.0
    %1056 = vmatpush1.msra.mxu0 %v757
    %1057 = vmatprep.subr.mxu0 0.0
    %1058 = vmatpush1.msra.mxu0 %v754
    %1059 = vmatprep.subr.mxu0 0.0
    %1060 = vmatpush1.msra.mxu0 %v751
    %1061 = vmatprep.subr.mxu0 0.0
    %1062 = vmatpush1.msra.mxu0 %v748
    %1063 = vmatprep.subr.mxu0 0.0
    %1064 = vmatpush1.msra.mxu0 %v745
    %1065 = vmatprep.subr.mxu0 0.0
    %1066 = vmatpush1.msra.mxu0 %v742
    %1067 = vmatprep.subr.mxu0 0.0
    %1068 = vmatpush1.msra.mxu0 %v739
    %1069 = vmatprep.subr.mxu0 0.0
    %1070 = vmatpush2.msra.mxu0 0.0
    %1071 = vmatprep.subr.mxu0 0.0
    %1072 = vmatpush2.msra.mxu0 0.0
    %1073 = vmatprep.subr.mxu0 0.0
    %1074 = vmatpush2.msra.mxu0 0.0
    %1075 = vmatprep.subr.mxu0 0.0
    %1076 = vmatpush2.msra.mxu0 0.0
    %1077 = vmatprep.subr.mxu0 0.0
    %1078 = vmatpush2.msra.mxu0 0.0
    %1079 = vmatprep.subr.mxu0 0.0
    %1080 = vmatpush2.msra.mxu0 0.0
    %1081 = vmatprep.subr.mxu0 0.0
    %1082 = vmatpush2.msra.mxu0 0.0
    %1083 = vmatprep.subr.mxu0 0.0
    %1084 = vmatpush2.msra.mxu0 0.0
    %1085 = vmatprep.subr.mxu0 0.0
    %1086 = vmatpush2.msra.mxu0 0.0
    %1087 = vmatprep.subr.mxu0 0.0
    %1088 = vmatpush2.msra.mxu0 0.0
    %1089 = vmatprep.subr.mxu0 0.0
    %1090 = vmatpush2.msra.mxu0 0.0
    %1091 = vmatprep.subr.mxu0 0.0
    %1092 = vmatpush2.msra.mxu0 0.0
    %1093 = vmatprep.subr.mxu0 0.0
    %1094 = vmatpush2.msra.mxu0 0.0
    %1095 = vmatprep.subr.mxu0 0.0
    %1096 = vmatpush2.msra.mxu0 0.0
    %1097 = vmatprep.subr.mxu0 0.0
    %1098 = vmatpush2.msra.mxu0 0.0
    %1099 = vmatprep.subr.mxu0 0.0
    %1100 = vmatpush2.msra.mxu0 0.0
    %1101 = vmatprep.mubr.f32.mxu0 0.0
    %1102 = vmatmul.mubr.f32.gmra.mxu0 0.0
    %v1103 = vpop.f32.mrf.mxu0
    %v1104 = vadd.f32 0.0, %v1103
    %v1105 = vpop.f32.mrf.mxu0
    %1106 = vdwg.mxu0
    %v1107 = vadd.f32 %v962, %v1033
    %v1108 = vxor.u32 %v1107, 2147483648
    %v1109 = vmul.f32 %v1108, 1.442695
    %v1110 = vpow.pop %v1109
    %v1111 = vadd.f32 %v1110, 1.0
    %v1112 = vrcp.pop %v1111
    %v1113 = vmul.f32 1.0, %v1112
    %v1114 = vadd.f32 %v963, %v1035
    %v1115 = vxor.u32 %v1114, 2147483648
    %v1116 = vmul.f32 %v1115, 1.442695
    %v1117 = vpow.pop %v1116
    %v1118 = vadd.f32 %v1117, 1.0
    %v1119 = vrcp.pop %v1118
    %v1120 = vmul.f32 1.0, %v1119
    %v1122 = vlaneseq
    %v1123 = vshrl.u32 %v1122, 7
    %v1124 = vsub.s32 0, %v1123
    %v1125 = vrot.slane %v786, %v1124
    %v1127 = vadd.f32 %v1104, %v1125
    %v1128 = vmul.f32 %v1113, %v1127
    %v1129 = vadd.f32 %v964, %v1128
    %v1130 = vtanh.pop %v1129
    %v1131 = vsub.f32 1.0, %v1120
    %v1132 = vmul.f32 %v1131, %v1130
    %v1133 = vmul.f32 %v1120, 0.0
    %v1134 = vadd.f32 %v1132, %v1133
    %v1135 = vmul.f32 %v965, %v1134
    %v1136 = vadd.f32 %v1135, 0.0
    %v1137 = vld [vmem:[#allocation2 + $0x18] sm:$0xff]
    %v1138 = vld [vmem:[#allocation2 + $0x20] sm:$0xff]
    %v1139 = vld [vmem:[#allocation2 + $0x28] sm:$0xff]
    %v1140 = vld [vmem:[#allocation4 + $0x8] sm:$0xff]
    %1141 = vmatprep.subr.mxu0 %v735
    %1142 = vmatpush1.msra.mxu0 %v734
    %1143 = vmatprep.subr.mxu0 %v732
    %1144 = vmatpush1.msra.mxu0 %v731
    %1145 = vmatprep.subr.mxu0 %v729
    %1146 = vmatpush1.msra.mxu0 %v728
    %1147 = vmatprep.subr.mxu0 %v726
    %1148 = vmatpush1.msra.mxu0 %v725
    %1149 = vmatprep.subr.mxu0 %v723
    %1150 = vmatpush1.msra.mxu0 %v722
    %1151 = vmatprep.subr.mxu0 %v720
    %1152 = vmatpush1.msra.mxu0 %v719
    %1153 = vmatprep.subr.mxu0 %v717
    %1154 = vmatpush1.msra.mxu0 %v716
    %1155 = vmatprep.subr.mxu0 %v714
    %1156 = vmatpush1.msra.mxu0 %v713
    %1157 = vmatprep.subr.mxu0 %v711
    %1158 = vmatpush1.msra.mxu0 %v710
    %1159 = vmatprep.subr.mxu0 %v708
    %1160 = vmatpush1.msra.mxu0 %v707
    %1161 = vmatprep.subr.mxu0 %v705
    %1162 = vmatpush1.msra.mxu0 %v704
    %1163 = vmatprep.subr.mxu0 %v702
    %1164 = vmatpush1.msra.mxu0 %v701
    %1165 = vmatprep.subr.mxu0 %v699
    %1166 = vmatpush1.msra.mxu0 %v698
    %1167 = vmatprep.subr.mxu0 %v696
    %1168 = vmatpush1.msra.mxu0 %v695
    %1169 = vmatprep.subr.mxu0 %v693
    %1170 = vmatpush1.msra.mxu0 %v692
    %1171 = vmatprep.subr.mxu0 %v690
    %1172 = vmatpush1.msra.mxu0 %v689
    %1173 = vmatprep.subr.mxu0 0.0
    %1174 = vmatpush2.msra.mxu0 0.0
    %1175 = vmatprep.subr.mxu0 0.0
    %1176 = vmatpush2.msra.mxu0 0.0
    %1177 = vmatprep.subr.mxu0 0.0
    %1178 = vmatpush2.msra.mxu0 0.0
    %1179 = vmatprep.subr.mxu0 0.0
    %1180 = vmatpush2.msra.mxu0 0.0
    %1181 = vmatprep.subr.mxu0 0.0
    %1182 = vmatpush2.msra.mxu0 0.0
    %1183 = vmatprep.subr.mxu0 0.0
    %1184 = vmatpush2.msra.mxu0 0.0
    %1185 = vmatprep.subr.mxu0 0.0
    %1186 = vmatpush2.msra.mxu0 0.0
    %1187 = vmatprep.subr.mxu0 0.0
    %1188 = vmatpush2.msra.mxu0 0.0
    %1189 = vmatprep.subr.mxu0 0.0
    %1190 = vmatpush2.msra.mxu0 0.0
    %1191 = vmatprep.subr.mxu0 0.0
    %1192 = vmatpush2.msra.mxu0 0.0
    %1193 = vmatprep.subr.mxu0 0.0
    %1194 = vmatpush2.msra.mxu0 0.0
    %1195 = vmatprep.subr.mxu0 0.0
    %1196 = vmatpush2.msra.mxu0 0.0
    %1197 = vmatprep.subr.mxu0 0.0
    %1198 = vmatpush2.msra.mxu0 0.0
    %1199 = vmatprep.subr.mxu0 0.0
    %1200 = vmatpush2.msra.mxu0 0.0
    %1201 = vmatprep.subr.mxu0 0.0
    %1202 = vmatpush2.msra.mxu0 0.0
    %1203 = vmatprep.subr.mxu0 0.0
    %1204 = vmatpush2.msra.mxu0 0.0
    %1205 = vmatprep.mubr.f32.mxu0 0.0
    %1206 = vmatmul.mubr.f32.gmra.mxu0 %v961
    %v1207 = vpop.f32.mrf.mxu0
    %v1208 = vadd.f32 0.0, %v1207
    %v1209 = vpop.f32.mrf.mxu0
    %v1210 = vadd.f32 0.0, %v1209
    %1211 = vdwg.mxu0
    %1212 = vmatprep.subr.mxu0 0.0
    %1213 = vmatpush1.msra.mxu0 %v736
    %1214 = vmatprep.subr.mxu0 0.0
    %1215 = vmatpush1.msra.mxu0 %v733
    %1216 = vmatprep.subr.mxu0 0.0
    %1217 = vmatpush1.msra.mxu0 %v730
    %1218 = vmatprep.subr.mxu0 0.0
    %1219 = vmatpush1.msra.mxu0 %v727
    %1220 = vmatprep.subr.mxu0 0.0
    %1221 = vmatpush1.msra.mxu0 %v724
    %1222 = vmatprep.subr.mxu0 0.0
    %1223 = vmatpush1.msra.mxu0 %v721
    %1224 = vmatprep.subr.mxu0 0.0
    %1225 = vmatpush1.msra.mxu0 %v718
    %1226 = vmatprep.subr.mxu0 0.0
    %1227 = vmatpush1.msra.mxu0 %v715
    %1228 = vmatprep.subr.mxu0 0.0
    %1229 = vmatpush1.msra.mxu0 %v712
    %1230 = vmatprep.subr.mxu0 0.0
    %1231 = vmatpush1.msra.mxu0 %v709
    %1232 = vmatprep.subr.mxu0 0.0
    %1233 = vmatpush1.msra.mxu0 %v706
    %1234 = vmatprep.subr.mxu0 0.0
    %1235 = vmatpush1.msra.mxu0 %v703
    %1236 = vmatprep.subr.mxu0 0.0
    %1237 = vmatpush1.msra.mxu0 %v700
    %1238 = vmatprep.subr.mxu0 0.0
    %1239 = vmatpush1.msra.mxu0 %v697
    %1240 = vmatprep.subr.mxu0 0.0
    %1241 = vmatpush1.msra.mxu0 %v694
    %1242 = vmatprep.subr.mxu0 0.0
    %1243 = vmatpush1.msra.mxu0 %v691
    %1244 = vmatprep.subr.mxu0 0.0
    %1245 = vmatpush2.msra.mxu0 0.0
    %1246 = vmatprep.subr.mxu0 0.0
    %1247 = vmatpush2.msra.mxu0 0.0
    %1248 = vmatprep.subr.mxu0 0.0
    %1249 = vmatpush2.msra.mxu0 0.0
    %1250 = vmatprep.subr.mxu0 0.0
    %1251 = vmatpush2.msra.mxu0 0.0
    %1252 = vmatprep.subr.mxu0 0.0
    %1253 = vmatpush2.msra.mxu0 0.0
    %1254 = vmatprep.subr.mxu0 0.0
    %1255 = vmatpush2.msra.mxu0 0.0
    %1256 = vmatprep.subr.mxu0 0.0
    %1257 = vmatpush2.msra.mxu0 0.0
    %1258 = vmatprep.subr.mxu0 0.0
    %1259 = vmatpush2.msra.mxu0 0.0
    %1260 = vmatprep.subr.mxu0 0.0
    %1261 = vmatpush2.msra.mxu0 0.0
    %1262 = vmatprep.subr.mxu0 0.0
    %1263 = vmatpush2.msra.mxu0 0.0
    %1264 = vmatprep.subr.mxu0 0.0
    %1265 = vmatpush2.msra.mxu0 0.0
    %1266 = vmatprep.subr.mxu0 0.0
    %1267 = vmatpush2.msra.mxu0 0.0
    %1268 = vmatprep.subr.mxu0 0.0
    %1269 = vmatpush2.msra.mxu0 0.0
    %1270 = vmatprep.subr.mxu0 0.0
    %1271 = vmatpush2.msra.mxu0 0.0
    %1272 = vmatprep.subr.mxu0 0.0
    %1273 = vmatpush2.msra.mxu0 0.0
    %1274 = vmatprep.subr.mxu0 0.0
    %1275 = vmatpush2.msra.mxu0 0.0
    %1276 = vmatprep.mubr.f32.mxu0 0.0
    %1277 = vmatmul.mubr.f32.gmra.mxu0 %v961
    %v1278 = vpop.f32.mrf.mxu0
    %v1279 = vadd.f32 0.0, %v1278
    %v1280 = vpop.f32.mrf.mxu0
    %1281 = vdwg.mxu0
    %v1282 = vadd.f32 %v1137, %v1208
    %v1283 = vxor.u32 %v1282, 2147483648
    %v1284 = vmul.f32 %v1283, 1.442695
    %v1285 = vpow.pop %v1284
    %v1286 = vadd.f32 %v1285, 1.0
    %v1287 = vrcp.pop %v1286
    %v1288 = vmul.f32 1.0, %v1287
    %v1289 = vadd.f32 %v1138, %v1210
    %v1290 = vxor.u32 %v1289, 2147483648
    %v1291 = vmul.f32 %v1290, 1.442695
    %v1292 = vpow.pop %v1291
    %v1293 = vadd.f32 %v1292, 1.0
    %v1294 = vrcp.pop %v1293
    %v1295 = vmul.f32 1.0, %v1294
    %v1296 = vadd.f32 %v1279, %v950
    %v1297 = vmul.f32 %v1288, %v1296
    %v1298 = vadd.f32 %v1139, %v1297
    %v1299 = vtanh.pop %v1298
    %v1300 = vsub.f32 1.0, %v1295
    %v1301 = vmul.f32 %v1300, %v1299
    %v1302 = vmul.f32 %v1295, %v961
    %v1303 = vadd.f32 %v1301, %v1302
    %v1304 = vsub.f32 %v1303, %v961
    %v1305 = vmul.f32 %v1140, %v1304
    %v1306 = vadd.f32 %v961, %v1305
    %v1307 = vld [vmem:[#allocation3 + $0x90] sm:$0xff]
    %v1308 = vld [vmem:[#allocation3 + $0x98] sm:$0xff]
    %v1309 = vld [vmem:[#allocation3 + $0xa0] sm:$0xff]
    %v1310 = vld [vmem:[#allocation4 + $0x30] sm:$0xff]
    %1311 = vmatprep.subr.mxu0 %v783
    %1312 = vmatpush1.msra.mxu0 %v782
    %1313 = vmatprep.subr.mxu0 %v780
    %1314 = vmatpush1.msra.mxu0 %v779
    %1315 = vmatprep.subr.mxu0 %v777
    %1316 = vmatpush1.msra.mxu0 %v776
    %1317 = vmatprep.subr.mxu0 %v774
    %1318 = vmatpush1.msra.mxu0 %v773
    %1319 = vmatprep.subr.mxu0 %v771
    %1320 = vmatpush1.msra.mxu0 %v770
    %1321 = vmatprep.subr.mxu0 %v768
    %1322 = vmatpush1.msra.mxu0 %v767
    %1323 = vmatprep.subr.mxu0 %v765
    %1324 = vmatpush1.msra.mxu0 %v764
    %1325 = vmatprep.subr.mxu0 %v762
    %1326 = vmatpush1.msra.mxu0 %v761
    %1327 = vmatprep.subr.mxu0 %v759
    %1328 = vmatpush1.msra.mxu0 %v758
    %1329 = vmatprep.subr.mxu0 %v756
    %1330 = vmatpush1.msra.mxu0 %v755
    %1331 = vmatprep.subr.mxu0 %v753
    %1332 = vmatpush1.msra.mxu0 %v752
    %1333 = vmatprep.subr.mxu0 %v750
    %1334 = vmatpush1.msra.mxu0 %v749
    %1335 = vmatprep.subr.mxu0 %v747
    %1336 = vmatpush1.msra.mxu0 %v746
    %1337 = vmatprep.subr.mxu0 %v744
    %1338 = vmatpush1.msra.mxu0 %v743
    %1339 = vmatprep.subr.mxu0 %v741
    %1340 = vmatpush1.msra.mxu0 %v740
    %1341 = vmatprep.subr.mxu0 %v738
    %1342 = vmatpush1.msra.mxu0 %v737
    %1343 = vmatprep.subr.mxu0 0.0
    %1344 = vmatpush2.msra.mxu0 0.0
    %1345 = vmatprep.subr.mxu0 0.0
    %1346 = vmatpush2.msra.mxu0 0.0
    %1347 = vmatprep.subr.mxu0 0.0
    %1348 = vmatpush2.msra.mxu0 0.0
    %1349 = vmatprep.subr.mxu0 0.0
    %1350 = vmatpush2.msra.mxu0 0.0
    %1351 = vmatprep.subr.mxu0 0.0
    %1352 = vmatpush2.msra.mxu0 0.0
    %1353 = vmatprep.subr.mxu0 0.0
    %1354 = vmatpush2.msra.mxu0 0.0
    %1355 = vmatprep.subr.mxu0 0.0
    %1356 = vmatpush2.msra.mxu0 0.0
    %1357 = vmatprep.subr.mxu0 0.0
    %1358 = vmatpush2.msra.mxu0 0.0
    %1359 = vmatprep.subr.mxu0 0.0
    %1360 = vmatpush2.msra.mxu0 0.0
    %1361 = vmatprep.subr.mxu0 0.0
    %1362 = vmatpush2.msra.mxu0 0.0
    %1363 = vmatprep.subr.mxu0 0.0
    %1364 = vmatpush2.msra.mxu0 0.0
    %1365 = vmatprep.subr.mxu0 0.0
    %1366 = vmatpush2.msra.mxu0 0.0
    %1367 = vmatprep.subr.mxu0 0.0
    %1368 = vmatpush2.msra.mxu0 0.0
    %1369 = vmatprep.subr.mxu0 0.0
    %1370 = vmatpush2.msra.mxu0 0.0
    %1371 = vmatprep.subr.mxu0 0.0
    %1372 = vmatpush2.msra.mxu0 0.0
    %1373 = vmatprep.subr.mxu0 0.0
    %1374 = vmatpush2.msra.mxu0 0.0
    %1375 = vmatprep.mubr.f32.mxu0 0.0
    %1376 = vmatmul.mubr.f32.gmra.mxu0 %v1136
    %v1377 = vpop.f32.mrf.mxu0
    %v1378 = vadd.f32 0.0, %v1377
    %v1379 = vpop.f32.mrf.mxu0
    %v1380 = vadd.f32 0.0, %v1379
    %1381 = vdwg.mxu0
    %1382 = vmatprep.subr.mxu0 0.0
    %1383 = vmatpush1.msra.mxu0 %v784
    %1384 = vmatprep.subr.mxu0 0.0
    %1385 = vmatpush1.msra.mxu0 %v781
    %1386 = vmatprep.subr.mxu0 0.0
    %1387 = vmatpush1.msra.mxu0 %v778
    %1388 = vmatprep.subr.mxu0 0.0
    %1389 = vmatpush1.msra.mxu0 %v775
    %1390 = vmatprep.subr.mxu0 0.0
    %1391 = vmatpush1.msra.mxu0 %v772
    %1392 = vmatprep.subr.mxu0 0.0
    %1393 = vmatpush1.msra.mxu0 %v769
    %1394 = vmatprep.subr.mxu0 0.0
    %1395 = vmatpush1.msra.mxu0 %v766
    %1396 = vmatprep.subr.mxu0 0.0
    %1397 = vmatpush1.msra.mxu0 %v763
    %1398 = vmatprep.subr.mxu0 0.0
    %1399 = vmatpush1.msra.mxu0 %v760
    %1400 = vmatprep.subr.mxu0 0.0
    %1401 = vmatpush1.msra.mxu0 %v757
    %1402 = vmatprep.subr.mxu0 0.0
    %1403 = vmatpush1.msra.mxu0 %v754
    %1404 = vmatprep.subr.mxu0 0.0
    %1405 = vmatpush1.msra.mxu0 %v751
    %1406 = vmatprep.subr.mxu0 0.0
    %1407 = vmatpush1.msra.mxu0 %v748
    %1408 = vmatprep.subr.mxu0 0.0
    %1409 = vmatpush1.msra.mxu0 %v745
    %1410 = vmatprep.subr.mxu0 0.0
    %1411 = vmatpush1.msra.mxu0 %v742
    %1412 = vmatprep.subr.mxu0 0.0
    %1413 = vmatpush1.msra.mxu0 %v739
    %1414 = vmatprep.subr.mxu0 0.0
    %1415 = vmatpush2.msra.mxu0 0.0
    %1416 = vmatprep.subr.mxu0 0.0
    %1417 = vmatpush2.msra.mxu0 0.0
    %1418 = vmatprep.subr.mxu0 0.0
    %1419 = vmatpush2.msra.mxu0 0.0
    %1420 = vmatprep.subr.mxu0 0.0
    %1421 = vmatpush2.msra.mxu0 0.0
    %1422 = vmatprep.subr.mxu0 0.0
    %1423 = vmatpush2.msra.mxu0 0.0
    %1424 = vmatprep.subr.mxu0 0.0
    %1425 = vmatpush2.msra.mxu0 0.0
    %1426 = vmatprep.subr.mxu0 0.0
    %1427 = vmatpush2.msra.mxu0 0.0
    %1428 = vmatprep.subr.mxu0 0.0
    %1429 = vmatpush2.msra.mxu0 0.0
    %1430 = vmatprep.subr.mxu0 0.0
    %1431 = vmatpush2.msra.mxu0 0.0
    %1432 = vmatprep.subr.mxu0 0.0
    %1433 = vmatpush2.msra.mxu0 0.0
    %1434 = vmatprep.subr.mxu0 0.0
    %1435 = vmatpush2.msra.mxu0 0.0
    %1436 = vmatprep.subr.mxu0 0.0
    %1437 = vmatpush2.msra.mxu0 0.0
    %1438 = vmatprep.subr.mxu0 0.0
    %1439 = vmatpush2.msra.mxu0 0.0
    %1440 = vmatprep.subr.mxu0 0.0
    %1441 = vmatpush2.msra.mxu0 0.0
    %1442 = vmatprep.subr.mxu0 0.0
    %1443 = vmatpush2.msra.mxu0 0.0
    %1444 = vmatprep.subr.mxu0 0.0
    %1445 = vmatpush2.msra.mxu0 0.0
    %1446 = vmatprep.mubr.f32.mxu0 0.0
    %1447 = vmatmul.mubr.f32.gmra.mxu0 %v1136
    %v1448 = vpop.f32.mrf.mxu0
    %v1449 = vadd.f32 0.0, %v1448
    %v1450 = vpop.f32.mrf.mxu0
    %1451 = vdwg.mxu0
    %v1452 = vadd.f32 %v1307, %v1378
    %v1453 = vxor.u32 %v1452, 2147483648
    %v1454 = vmul.f32 %v1453, 1.442695
    %v1455 = vpow.pop %v1454
    %v1456 = vadd.f32 %v1455, 1.0
    %v1457 = vrcp.pop %v1456
    %v1458 = vmul.f32 1.0, %v1457
    %v1459 = vadd.f32 %v1308, %v1380
    %v1460 = vxor.u32 %v1459, 2147483648
    %v1461 = vmul.f32 %v1460, 1.442695
    %v1462 = vpow.pop %v1461
    %v1463 = vadd.f32 %v1462, 1.0
    %v1464 = vrcp.pop %v1463
    %v1465 = vmul.f32 1.0, %v1464
    %v1466 = vadd.f32 %v1449, %v1125
    %v1467 = vmul.f32 %v1458, %v1466
    %v1468 = vadd.f32 %v1309, %v1467
    %v1469 = vtanh.pop %v1468
    %v1470 = vsub.f32 1.0, %v1465
    %v1471 = vmul.f32 %v1470, %v1469
    %v1472 = vmul.f32 %v1465, %v1136
    %v1473 = vadd.f32 %v1471, %v1472
    %v1474 = vsub.f32 %v1473, %v1136
    %v1475 = vmul.f32 %v1310, %v1474
    %v1476 = vadd.f32 %v1136, %v1475
    %v1477 = vld [vmem:[#allocation2 + $0x30] sm:$0xff]
    %v1478 = vld [vmem:[#allocation2 + $0x38] sm:$0xff]
    %v1479 = vld [vmem:[#allocation2 + $0x40] sm:$0xff]
    %v1480 = vld [vmem:[#allocation4 + $0x10] sm:$0xff]
    %1481 = vmatprep.subr.mxu0 %v735
    %1482 = vmatpush1.msra.mxu0 %v734
    %1483 = vmatprep.subr.mxu0 %v732
    %1484 = vmatpush1.msra.mxu0 %v731
    %1485 = vmatprep.subr.mxu0 %v729
    %1486 = vmatpush1.msra.mxu0 %v728
    %1487 = vmatprep.subr.mxu0 %v726
    %1488 = vmatpush1.msra.mxu0 %v725
    %1489 = vmatprep.subr.mxu0 %v723
    %1490 = vmatpush1.msra.mxu0 %v722
    %1491 = vmatprep.subr.mxu0 %v720
    %1492 = vmatpush1.msra.mxu0 %v719
    %1493 = vmatprep.subr.mxu0 %v717
    %1494 = vmatpush1.msra.mxu0 %v716
    %1495 = vmatprep.subr.mxu0 %v714
    %1496 = vmatpush1.msra.mxu0 %v713
    %1497 = vmatprep.subr.mxu0 %v711
    %1498 = vmatpush1.msra.mxu0 %v710
    %1499 = vmatprep.subr.mxu0 %v708
    %1500 = vmatpush1.msra.mxu0 %v707
    %1501 = vmatprep.subr.mxu0 %v705
    %1502 = vmatpush1.msra.mxu0 %v704
    %1503 = vmatprep.subr.mxu0 %v702
    %1504 = vmatpush1.msra.mxu0 %v701
    %1505 = vmatprep.subr.mxu0 %v699
    %1506 = vmatpush1.msra.mxu0 %v698
    %1507 = vmatprep.subr.mxu0 %v696
    %1508 = vmatpush1.msra.mxu0 %v695
    %1509 = vmatprep.subr.mxu0 %v693
    %1510 = vmatpush1.msra.mxu0 %v692
    %1511 = vmatprep.subr.mxu0 %v690
    %1512 = vmatpush1.msra.mxu0 %v689
    %1513 = vmatprep.subr.mxu0 0.0
    %1514 = vmatpush2.msra.mxu0 0.0
    %1515 = vmatprep.subr.mxu0 0.0
    %1516 = vmatpush2.msra.mxu0 0.0
    %1517 = vmatprep.subr.mxu0 0.0
    %1518 = vmatpush2.msra.mxu0 0.0
    %1519 = vmatprep.subr.mxu0 0.0
    %1520 = vmatpush2.msra.mxu0 0.0
    %1521 = vmatprep.subr.mxu0 0.0
    %1522 = vmatpush2.msra.mxu0 0.0
    %1523 = vmatprep.subr.mxu0 0.0
    %1524 = vmatpush2.msra.mxu0 0.0
    %1525 = vmatprep.subr.mxu0 0.0
    %1526 = vmatpush2.msra.mxu0 0.0
    %1527 = vmatprep.subr.mxu0 0.0
    %1528 = vmatpush2.msra.mxu0 0.0
    %1529 = vmatprep.subr.mxu0 0.0
    %1530 = vmatpush2.msra.mxu0 0.0
    %1531 = vmatprep.subr.mxu0 0.0
    %1532 = vmatpush2.msra.mxu0 0.0
    %1533 = vmatprep.subr.mxu0 0.0
    %1534 = vmatpush2.msra.mxu0 0.0
    %1535 = vmatprep.subr.mxu0 0.0
    %1536 = vmatpush2.msra.mxu0 0.0
    %1537 = vmatprep.subr.mxu0 0.0
    %1538 = vmatpush2.msra.mxu0 0.0
    %1539 = vmatprep.subr.mxu0 0.0
    %1540 = vmatpush2.msra.mxu0 0.0
    %1541 = vmatprep.subr.mxu0 0.0
    %1542 = vmatpush2.msra.mxu0 0.0
    %1543 = vmatprep.subr.mxu0 0.0
    %1544 = vmatpush2.msra.mxu0 0.0
    %1545 = vmatprep.mubr.f32.mxu0 0.0
    %1546 = vmatmul.mubr.f32.gmra.mxu0 %v1306
    %v1547 = vpop.f32.mrf.mxu0
    %v1548 = vadd.f32 0.0, %v1547
    %v1549 = vpop.f32.mrf.mxu0
    %v1550 = vadd.f32 0.0, %v1549
    %1551 = vdwg.mxu0
    %1552 = vmatprep.subr.mxu0 0.0
    %1553 = vmatpush1.msra.mxu0 %v736
    %1554 = vmatprep.subr.mxu0 0.0
    %1555 = vmatpush1.msra.mxu0 %v733
    %1556 = vmatprep.subr.mxu0 0.0
    %1557 = vmatpush1.msra.mxu0 %v730
    %1558 = vmatprep.subr.mxu0 0.0
    %1559 = vmatpush1.msra.mxu0 %v727
    %1560 = vmatprep.subr.mxu0 0.0
    %1561 = vmatpush1.msra.mxu0 %v724
    %1562 = vmatprep.subr.mxu0 0.0
    %1563 = vmatpush1.msra.mxu0 %v721
    %1564 = vmatprep.subr.mxu0 0.0
    %1565 = vmatpush1.msra.mxu0 %v718
    %1566 = vmatprep.subr.mxu0 0.0
    %1567 = vmatpush1.msra.mxu0 %v715
    %1568 = vmatprep.subr.mxu0 0.0
    %1569 = vmatpush1.msra.mxu0 %v712
    %1570 = vmatprep.subr.mxu0 0.0
    %1571 = vmatpush1.msra.mxu0 %v709
    %1572 = vmatprep.subr.mxu0 0.0
    %1573 = vmatpush1.msra.mxu0 %v706
    %1574 = vmatprep.subr.mxu0 0.0
    %1575 = vmatpush1.msra.mxu0 %v703
    %1576 = vmatprep.subr.mxu0 0.0
    %1577 = vmatpush1.msra.mxu0 %v700
    %1578 = vmatprep.subr.mxu0 0.0
    %1579 = vmatpush1.msra.mxu0 %v697
    %1580 = vmatprep.subr.mxu0 0.0
    %1581 = vmatpush1.msra.mxu0 %v694
    %1582 = vmatprep.subr.mxu0 0.0
    %1583 = vmatpush1.msra.mxu0 %v691
    %1584 = vmatprep.subr.mxu0 0.0
    %1585 = vmatpush2.msra.mxu0 0.0
    %1586 = vmatprep.subr.mxu0 0.0
    %1587 = vmatpush2.msra.mxu0 0.0
    %1588 = vmatprep.subr.mxu0 0.0
    %1589 = vmatpush2.msra.mxu0 0.0
    %1590 = vmatprep.subr.mxu0 0.0
    %1591 = vmatpush2.msra.mxu0 0.0
    %1592 = vmatprep.subr.mxu0 0.0
    %1593 = vmatpush2.msra.mxu0 0.0
    %1594 = vmatprep.subr.mxu0 0.0
    %1595 = vmatpush2.msra.mxu0 0.0
    %1596 = vmatprep.subr.mxu0 0.0
    %1597 = vmatpush2.msra.mxu0 0.0
    %1598 = vmatprep.subr.mxu0 0.0
    %1599 = vmatpush2.msra.mxu0 0.0
    %1600 = vmatprep.subr.mxu0 0.0
    %1601 = vmatpush2.msra.mxu0 0.0
    %1602 = vmatprep.subr.mxu0 0.0
    %1603 = vmatpush2.msra.mxu0 0.0
    %1604 = vmatprep.subr.mxu0 0.0
    %1605 = vmatpush2.msra.mxu0 0.0
    %1606 = vmatprep.subr.mxu0 0.0
    %1607 = vmatpush2.msra.mxu0 0.0
    %1608 = vmatprep.subr.mxu0 0.0
    %1609 = vmatpush2.msra.mxu0 0.0
    %1610 = vmatprep.subr.mxu0 0.0
    %1611 = vmatpush2.msra.mxu0 0.0
    %1612 = vmatprep.subr.mxu0 0.0
    %1613 = vmatpush2.msra.mxu0 0.0
    %1614 = vmatprep.subr.mxu0 0.0
    %1615 = vmatpush2.msra.mxu0 0.0
    %1616 = vmatprep.mubr.f32.mxu0 0.0
    %1617 = vmatmul.mubr.f32.gmra.mxu0 %v1306
    %v1618 = vpop.f32.mrf.mxu0
    %v1619 = vadd.f32 0.0, %v1618
    %v1620 = vpop.f32.mrf.mxu0
    %1621 = vdwg.mxu0
    %v1622 = vadd.f32 %v1477, %v1548
    %v1623 = vxor.u32 %v1622, 2147483648
    %v1624 = vmul.f32 %v1623, 1.442695
    %v1625 = vpow.pop %v1624
    %v1626 = vadd.f32 %v1625, 1.0
    %v1627 = vrcp.pop %v1626
    %v1628 = vmul.f32 1.0, %v1627
    %v1629 = vadd.f32 %v1478, %v1550
    %v1630 = vxor.u32 %v1629, 2147483648
    %v1631 = vmul.f32 %v1630, 1.442695
    %v1632 = vpow.pop %v1631
    %v1633 = vadd.f32 %v1632, 1.0
    %v1634 = vrcp.pop %v1633
    %v1635 = vmul.f32 1.0, %v1634
    %v1636 = vadd.f32 %v1619, %v950
    %v1637 = vmul.f32 %v1628, %v1636
    %v1638 = vadd.f32 %v1479, %v1637
    %v1639 = vtanh.pop %v1638
    %v1640 = vsub.f32 1.0, %v1635
    %v1641 = vmul.f32 %v1640, %v1639
    %v1642 = vmul.f32 %v1635, %v1306
    %v1643 = vadd.f32 %v1641, %v1642
    %v1644 = vsub.f32 %v1643, %v1306
    %v1645 = vmul.f32 %v1480, %v1644
    %v1646 = vadd.f32 %v1306, %v1645
    %v1647 = vld [vmem:[#allocation3 + $0x78] sm:$0xff]
    %v1648 = vld [vmem:[#allocation3 + $0x80] sm:$0xff]
    %v1649 = vld [vmem:[#allocation3 + $0x88] sm:$0xff]
    %v1650 = vld [vmem:[#allocation4 + $0x28] sm:$0xff]
    %1651 = vmatprep.subr.mxu0 %v783
    %1652 = vmatpush1.msra.mxu0 %v782
    %1653 = vmatprep.subr.mxu0 %v780
    %1654 = vmatpush1.msra.mxu0 %v779
    %1655 = vmatprep.subr.mxu0 %v777
    %1656 = vmatpush1.msra.mxu0 %v776
    %1657 = vmatprep.subr.mxu0 %v774
    %1658 = vmatpush1.msra.mxu0 %v773
    %1659 = vmatprep.subr.mxu0 %v771
    %1660 = vmatpush1.msra.mxu0 %v770
    %1661 = vmatprep.subr.mxu0 %v768
    %1662 = vmatpush1.msra.mxu0 %v767
    %1663 = vmatprep.subr.mxu0 %v765
    %1664 = vmatpush1.msra.mxu0 %v764
    %1665 = vmatprep.subr.mxu0 %v762
    %1666 = vmatpush1.msra.mxu0 %v761
    %1667 = vmatprep.subr.mxu0 %v759
    %1668 = vmatpush1.msra.mxu0 %v758
    %1669 = vmatprep.subr.mxu0 %v756
    %1670 = vmatpush1.msra.mxu0 %v755
    %1671 = vmatprep.subr.mxu0 %v753
    %1672 = vmatpush1.msra.mxu0 %v752
    %1673 = vmatprep.subr.mxu0 %v750
    %1674 = vmatpush1.msra.mxu0 %v749
    %1675 = vmatprep.subr.mxu0 %v747
    %1676 = vmatpush1.msra.mxu0 %v746
    %1677 = vmatprep.subr.mxu0 %v744
    %1678 = vmatpush1.msra.mxu0 %v743
    %1679 = vmatprep.subr.mxu0 %v741
    %1680 = vmatpush1.msra.mxu0 %v740
    %1681 = vmatprep.subr.mxu0 %v738
    %1682 = vmatpush1.msra.mxu0 %v737
    %1683 = vmatprep.subr.mxu0 0.0
    %1684 = vmatpush2.msra.mxu0 0.0
    %1685 = vmatprep.subr.mxu0 0.0
    %1686 = vmatpush2.msra.mxu0 0.0
    %1687 = vmatprep.subr.mxu0 0.0
    %1688 = vmatpush2.msra.mxu0 0.0
    %1689 = vmatprep.subr.mxu0 0.0
    %1690 = vmatpush2.msra.mxu0 0.0
    %1691 = vmatprep.subr.mxu0 0.0
    %1692 = vmatpush2.msra.mxu0 0.0
    %1693 = vmatprep.subr.mxu0 0.0
    %1694 = vmatpush2.msra.mxu0 0.0
    %1695 = vmatprep.subr.mxu0 0.0
    %1696 = vmatpush2.msra.mxu0 0.0
    %1697 = vmatprep.subr.mxu0 0.0
    %1698 = vmatpush2.msra.mxu0 0.0
    %1699 = vmatprep.subr.mxu0 0.0
    %1700 = vmatpush2.msra.mxu0 0.0
    %1701 = vmatprep.subr.mxu0 0.0
    %1702 = vmatpush2.msra.mxu0 0.0
    %1703 = vmatprep.subr.mxu0 0.0
    %1704 = vmatpush2.msra.mxu0 0.0
    %1705 = vmatprep.subr.mxu0 0.0
    %1706 = vmatpush2.msra.mxu0 0.0
    %1707 = vmatprep.subr.mxu0 0.0
    %1708 = vmatpush2.msra.mxu0 0.0
    %1709 = vmatprep.subr.mxu0 0.0
    %1710 = vmatpush2.msra.mxu0 0.0
    %1711 = vmatprep.subr.mxu0 0.0
    %1712 = vmatpush2.msra.mxu0 0.0
    %1713 = vmatprep.subr.mxu0 0.0
    %1714 = vmatpush2.msra.mxu0 0.0
    %1715 = vmatprep.mubr.f32.mxu0 0.0
    %1716 = vmatmul.mubr.f32.gmra.mxu0 %v1476
    %v1717 = vpop.f32.mrf.mxu0
    %v1718 = vadd.f32 0.0, %v1717
    %v1719 = vpop.f32.mrf.mxu0
    %v1720 = vadd.f32 0.0, %v1719
    %1721 = vdwg.mxu0
    %1722 = vmatprep.subr.mxu0 0.0
    %1723 = vmatpush1.msra.mxu0 %v784
    %1724 = vmatprep.subr.mxu0 0.0
    %1725 = vmatpush1.msra.mxu0 %v781
    %1726 = vmatprep.subr.mxu0 0.0
    %1727 = vmatpush1.msra.mxu0 %v778
    %1728 = vmatprep.subr.mxu0 0.0
    %1729 = vmatpush1.msra.mxu0 %v775
    %1730 = vmatprep.subr.mxu0 0.0
    %1731 = vmatpush1.msra.mxu0 %v772
    %1732 = vmatprep.subr.mxu0 0.0
    %1733 = vmatpush1.msra.mxu0 %v769
    %1734 = vmatprep.subr.mxu0 0.0
    %1735 = vmatpush1.msra.mxu0 %v766
    %1736 = vmatprep.subr.mxu0 0.0
    %1737 = vmatpush1.msra.mxu0 %v763
    %1738 = vmatprep.subr.mxu0 0.0
    %1739 = vmatpush1.msra.mxu0 %v760
    %1740 = vmatprep.subr.mxu0 0.0
    %1741 = vmatpush1.msra.mxu0 %v757
    %1742 = vmatprep.subr.mxu0 0.0
    %1743 = vmatpush1.msra.mxu0 %v754
    %1744 = vmatprep.subr.mxu0 0.0
    %1745 = vmatpush1.msra.mxu0 %v751
    %1746 = vmatprep.subr.mxu0 0.0
    %1747 = vmatpush1.msra.mxu0 %v748
    %1748 = vmatprep.subr.mxu0 0.0
    %1749 = vmatpush1.msra.mxu0 %v745
    %1750 = vmatprep.subr.mxu0 0.0
    %1751 = vmatpush1.msra.mxu0 %v742
    %1752 = vmatprep.subr.mxu0 0.0
    %1753 = vmatpush1.msra.mxu0 %v739
    %1754 = vmatprep.subr.mxu0 0.0
    %1755 = vmatpush2.msra.mxu0 0.0
    %1756 = vmatprep.subr.mxu0 0.0
    %1757 = vmatpush2.msra.mxu0 0.0
    %1758 = vmatprep.subr.mxu0 0.0
    %1759 = vmatpush2.msra.mxu0 0.0
    %1760 = vmatprep.subr.mxu0 0.0
    %1761 = vmatpush2.msra.mxu0 0.0
    %1762 = vmatprep.subr.mxu0 0.0
    %1763 = vmatpush2.msra.mxu0 0.0
    %1764 = vmatprep.subr.mxu0 0.0
    %1765 = vmatpush2.msra.mxu0 0.0
    %1766 = vmatprep.subr.mxu0 0.0
    %1767 = vmatpush2.msra.mxu0 0.0
    %1768 = vmatprep.subr.mxu0 0.0
    %1769 = vmatpush2.msra.mxu0 0.0
    %1770 = vmatprep.subr.mxu0 0.0
    %1771 = vmatpush2.msra.mxu0 0.0
    %1772 = vmatprep.subr.mxu0 0.0
    %1773 = vmatpush2.msra.mxu0 0.0
    %1774 = vmatprep.subr.mxu0 0.0
    %1775 = vmatpush2.msra.mxu0 0.0
    %1776 = vmatprep.subr.mxu0 0.0
    %1777 = vmatpush2.msra.mxu0 0.0
    %1778 = vmatprep.subr.mxu0 0.0
    %1779 = vmatpush2.msra.mxu0 0.0
    %1780 = vmatprep.subr.mxu0 0.0
    %1781 = vmatpush2.msra.mxu0 0.0
    %1782 = vmatprep.subr.mxu0 0.0
    %1783 = vmatpush2.msra.mxu0 0.0
    %1784 = vmatprep.subr.mxu0 0.0
    %1785 = vmatpush2.msra.mxu0 0.0
    %1786 = vmatprep.mubr.f32.mxu0 0.0
    %1787 = vmatmul.mubr.f32.gmra.mxu0 %v1476
    %v1788 = vpop.f32.mrf.mxu0
    %v1789 = vadd.f32 0.0, %v1788
    %v1790 = vpop.f32.mrf.mxu0
    %1791 = vdwg.mxu0
    %v1792 = vadd.f32 %v1647, %v1718
    %v1793 = vxor.u32 %v1792, 2147483648
    %v1794 = vmul.f32 %v1793, 1.442695
    %v1795 = vpow.pop %v1794
    %v1796 = vadd.f32 %v1795, 1.0
    %v1797 = vrcp.pop %v1796
    %v1798 = vmul.f32 1.0, %v1797
    %v1799 = vadd.f32 %v1648, %v1720
    %v1800 = vxor.u32 %v1799, 2147483648
    %v1801 = vmul.f32 %v1800, 1.442695
    %v1802 = vpow.pop %v1801
    %v1803 = vadd.f32 %v1802, 1.0
    %v1804 = vrcp.pop %v1803
    %v1805 = vmul.f32 1.0, %v1804
    %v1806 = vadd.f32 %v1789, %v1125
    %v1807 = vmul.f32 %v1798, %v1806
    %v1808 = vadd.f32 %v1649, %v1807
    %v1809 = vtanh.pop %v1808
    %v1810 = vsub.f32 1.0, %v1805
    %v1811 = vmul.f32 %v1810, %v1809
    %v1812 = vmul.f32 %v1805, %v1476
    %v1813 = vadd.f32 %v1811, %v1812
    %v1814 = vsub.f32 %v1813, %v1476
    %v1815 = vmul.f32 %v1650, %v1814
    %v1816 = vadd.f32 %v1476, %v1815
    %v1817 = vld [vmem:[#allocation2 + $0x48] sm:$0xff]
    %v1818 = vld [vmem:[#allocation2 + $0x50] sm:$0xff]
    %v1819 = vld [vmem:[#allocation2 + $0x58] sm:$0xff]
    %v1820 = vld [vmem:[#allocation4 + $0x18] sm:$0xff]
    %1821 = vmatprep.subr.mxu0 %v735
    %1822 = vmatpush1.msra.mxu0 %v734
    %1823 = vmatprep.subr.mxu0 %v732
    %1824 = vmatpush1.msra.mxu0 %v731
    %1825 = vmatprep.subr.mxu0 %v729
    %1826 = vmatpush1.msra.mxu0 %v728
    %1827 = vmatprep.subr.mxu0 %v726
    %1828 = vmatpush1.msra.mxu0 %v725
    %1829 = vmatprep.subr.mxu0 %v723
    %1830 = vmatpush1.msra.mxu0 %v722
    %1831 = vmatprep.subr.mxu0 %v720
    %1832 = vmatpush1.msra.mxu0 %v719
    %1833 = vmatprep.subr.mxu0 %v717
    %1834 = vmatpush1.msra.mxu0 %v716
    %1835 = vmatprep.subr.mxu0 %v714
    %1836 = vmatpush1.msra.mxu0 %v713
    %1837 = vmatprep.subr.mxu0 %v711
    %1838 = vmatpush1.msra.mxu0 %v710
    %1839 = vmatprep.subr.mxu0 %v708
    %1840 = vmatpush1.msra.mxu0 %v707
    %1841 = vmatprep.subr.mxu0 %v705
    %1842 = vmatpush1.msra.mxu0 %v704
    %1843 = vmatprep.subr.mxu0 %v702
    %1844 = vmatpush1.msra.mxu0 %v701
    %1845 = vmatprep.subr.mxu0 %v699
    %1846 = vmatpush1.msra.mxu0 %v698
    %1847 = vmatprep.subr.mxu0 %v696
    %1848 = vmatpush1.msra.mxu0 %v695
    %1849 = vmatprep.subr.mxu0 %v693
    %1850 = vmatpush1.msra.mxu0 %v692
    %1851 = vmatprep.subr.mxu0 %v690
    %1852 = vmatpush1.msra.mxu0 %v689
    %1853 = vmatprep.subr.mxu0 0.0
    %1854 = vmatpush2.msra.mxu0 0.0
    %1855 = vmatprep.subr.mxu0 0.0
    %1856 = vmatpush2.msra.mxu0 0.0
    %1857 = vmatprep.subr.mxu0 0.0
    %1858 = vmatpush2.msra.mxu0 0.0
    %1859 = vmatprep.subr.mxu0 0.0
    %1860 = vmatpush2.msra.mxu0 0.0
    %1861 = vmatprep.subr.mxu0 0.0
    %1862 = vmatpush2.msra.mxu0 0.0
    %1863 = vmatprep.subr.mxu0 0.0
    %1864 = vmatpush2.msra.mxu0 0.0
    %1865 = vmatprep.subr.mxu0 0.0
    %1866 = vmatpush2.msra.mxu0 0.0
    %1867 = vmatprep.subr.mxu0 0.0
    %1868 = vmatpush2.msra.mxu0 0.0
    %1869 = vmatprep.subr.mxu0 0.0
    %1870 = vmatpush2.msra.mxu0 0.0
    %1871 = vmatprep.subr.mxu0 0.0
    %1872 = vmatpush2.msra.mxu0 0.0
    %1873 = vmatprep.subr.mxu0 0.0
    %1874 = vmatpush2.msra.mxu0 0.0
    %1875 = vmatprep.subr.mxu0 0.0
    %1876 = vmatpush2.msra.mxu0 0.0
    %1877 = vmatprep.subr.mxu0 0.0
    %1878 = vmatpush2.msra.mxu0 0.0
    %1879 = vmatprep.subr.mxu0 0.0
    %1880 = vmatpush2.msra.mxu0 0.0
    %1881 = vmatprep.subr.mxu0 0.0
    %1882 = vmatpush2.msra.mxu0 0.0
    %1883 = vmatprep.subr.mxu0 0.0
    %1884 = vmatpush2.msra.mxu0 0.0
    %1885 = vmatprep.mubr.f32.mxu0 0.0
    %1886 = vmatmul.mubr.f32.gmra.mxu0 %v1646
    %v1887 = vpop.f32.mrf.mxu0
    %v1888 = vadd.f32 0.0, %v1887
    %v1889 = vpop.f32.mrf.mxu0
    %v1890 = vadd.f32 0.0, %v1889
    %1891 = vdwg.mxu0
    %1892 = vmatprep.subr.mxu0 0.0
    %1893 = vmatpush1.msra.mxu0 %v736
    %1894 = vmatprep.subr.mxu0 0.0
    %1895 = vmatpush1.msra.mxu0 %v733
    %1896 = vmatprep.subr.mxu0 0.0
    %1897 = vmatpush1.msra.mxu0 %v730
    %1898 = vmatprep.subr.mxu0 0.0
    %1899 = vmatpush1.msra.mxu0 %v727
    %1900 = vmatprep.subr.mxu0 0.0
    %1901 = vmatpush1.msra.mxu0 %v724
    %1902 = vmatprep.subr.mxu0 0.0
    %1903 = vmatpush1.msra.mxu0 %v721
    %1904 = vmatprep.subr.mxu0 0.0
    %1905 = vmatpush1.msra.mxu0 %v718
    %1906 = vmatprep.subr.mxu0 0.0
    %1907 = vmatpush1.msra.mxu0 %v715
    %1908 = vmatprep.subr.mxu0 0.0
    %1909 = vmatpush1.msra.mxu0 %v712
    %1910 = vmatprep.subr.mxu0 0.0
    %1911 = vmatpush1.msra.mxu0 %v709
    %1912 = vmatprep.subr.mxu0 0.0
    %1913 = vmatpush1.msra.mxu0 %v706
    %1914 = vmatprep.subr.mxu0 0.0
    %1915 = vmatpush1.msra.mxu0 %v703
    %1916 = vmatprep.subr.mxu0 0.0
    %1917 = vmatpush1.msra.mxu0 %v700
    %1918 = vmatprep.subr.mxu0 0.0
    %1919 = vmatpush1.msra.mxu0 %v697
    %1920 = vmatprep.subr.mxu0 0.0
    %1921 = vmatpush1.msra.mxu0 %v694
    %1922 = vmatprep.subr.mxu0 0.0
    %1923 = vmatpush1.msra.mxu0 %v691
    %1924 = vmatprep.subr.mxu0 0.0
    %1925 = vmatpush2.msra.mxu0 0.0
    %1926 = vmatprep.subr.mxu0 0.0
    %1927 = vmatpush2.msra.mxu0 0.0
    %1928 = vmatprep.subr.mxu0 0.0
    %1929 = vmatpush2.msra.mxu0 0.0
    %1930 = vmatprep.subr.mxu0 0.0
    %1931 = vmatpush2.msra.mxu0 0.0
    %1932 = vmatprep.subr.mxu0 0.0
    %1933 = vmatpush2.msra.mxu0 0.0
    %1934 = vmatprep.subr.mxu0 0.0
    %1935 = vmatpush2.msra.mxu0 0.0
    %1936 = vmatprep.subr.mxu0 0.0
    %1937 = vmatpush2.msra.mxu0 0.0
    %1938 = vmatprep.subr.mxu0 0.0
    %1939 = vmatpush2.msra.mxu0 0.0
    %1940 = vmatprep.subr.mxu0 0.0
    %1941 = vmatpush2.msra.mxu0 0.0
    %1942 = vmatprep.subr.mxu0 0.0
    %1943 = vmatpush2.msra.mxu0 0.0
    %1944 = vmatprep.subr.mxu0 0.0
    %1945 = vmatpush2.msra.mxu0 0.0
    %1946 = vmatprep.subr.mxu0 0.0
    %1947 = vmatpush2.msra.mxu0 0.0
    %1948 = vmatprep.subr.mxu0 0.0
    %1949 = vmatpush2.msra.mxu0 0.0
    %1950 = vmatprep.subr.mxu0 0.0
    %1951 = vmatpush2.msra.mxu0 0.0
    %1952 = vmatprep.subr.mxu0 0.0
    %1953 = vmatpush2.msra.mxu0 0.0
    %1954 = vmatprep.subr.mxu0 0.0
    %1955 = vmatpush2.msra.mxu0 0.0
    %1956 = vmatprep.mubr.f32.mxu0 0.0
    %1957 = vmatmul.mubr.f32.gmra.mxu0 %v1646
    %v1958 = vpop.f32.mrf.mxu0
    %v1959 = vadd.f32 0.0, %v1958
    %v1960 = vpop.f32.mrf.mxu0
    %1961 = vdwg.mxu0
    %v1962 = vadd.f32 %v1817, %v1888
    %v1963 = vxor.u32 %v1962, 2147483648
    %v1964 = vmul.f32 %v1963, 1.442695
    %v1965 = vpow.pop %v1964
    %v1966 = vadd.f32 %v1965, 1.0
    %v1967 = vrcp.pop %v1966
    %v1968 = vmul.f32 1.0, %v1967
    %v1969 = vadd.f32 %v1818, %v1890
    %v1970 = vxor.u32 %v1969, 2147483648
    %v1971 = vmul.f32 %v1970, 1.442695
    %v1972 = vpow.pop %v1971
    %v1973 = vadd.f32 %v1972, 1.0
    %v1974 = vrcp.pop %v1973
    %v1975 = vmul.f32 1.0, %v1974
    %v1976 = vadd.f32 %v1959, %v950
    %v1977 = vmul.f32 %v1968, %v1976
    %v1978 = vadd.f32 %v1819, %v1977
    %v1979 = vtanh.pop %v1978
    %v1980 = vsub.f32 1.0, %v1975
    %v1981 = vmul.f32 %v1980, %v1979
    %v1982 = vmul.f32 %v1975, %v1646
    %v1983 = vadd.f32 %v1981, %v1982
    %v1984 = vsub.f32 %v1983, %v1646
    %v1985 = vmul.f32 %v1820, %v1984
    %v1986 = vadd.f32 %v1646, %v1985
    %v1987 = vld [vmem:[#allocation3 + $0x60] sm:$0xff]
    %v1988 = vld [vmem:[#allocation3 + $0x68] sm:$0xff]
    %v1989 = vld [vmem:[#allocation3 + $0x70] sm:$0xff]
    %v1990 = vld [vmem:[#allocation4 + $0x20] sm:$0xff]
    %1991 = vmatprep.subr.mxu0 %v783
    %1992 = vmatpush1.msra.mxu0 %v782
    %1993 = vmatprep.subr.mxu0 %v780
    %1994 = vmatpush1.msra.mxu0 %v779
    %1995 = vmatprep.subr.mxu0 %v777
    %1996 = vmatpush1.msra.mxu0 %v776
    %1997 = vmatprep.subr.mxu0 %v774
    %1998 = vmatpush1.msra.mxu0 %v773
    %1999 = vmatprep.subr.mxu0 %v771
    %2000 = vmatpush1.msra.mxu0 %v770
    %2001 = vmatprep.subr.mxu0 %v768
    %2002 = vmatpush1.msra.mxu0 %v767
    %2003 = vmatprep.subr.mxu0 %v765
    %2004 = vmatpush1.msra.mxu0 %v764
    %2005 = vmatprep.subr.mxu0 %v762
    %2006 = vmatpush1.msra.mxu0 %v761
    %2007 = vmatprep.subr.mxu0 %v759
    %2008 = vmatpush1.msra.mxu0 %v758
    %2009 = vmatprep.subr.mxu0 %v756
    %2010 = vmatpush1.msra.mxu0 %v755
    %2011 = vmatprep.subr.mxu0 %v753
    %2012 = vmatpush1.msra.mxu0 %v752
    %2013 = vmatprep.subr.mxu0 %v750
    %2014 = vmatpush1.msra.mxu0 %v749
    %2015 = vmatprep.subr.mxu0 %v747
    %2016 = vmatpush1.msra.mxu0 %v746
    %2017 = vmatprep.subr.mxu0 %v744
    %2018 = vmatpush1.msra.mxu0 %v743
    %2019 = vmatprep.subr.mxu0 %v741
    %2020 = vmatpush1.msra.mxu0 %v740
    %2021 = vmatprep.subr.mxu0 %v738
    %2022 = vmatpush1.msra.mxu0 %v737
    %2023 = vmatprep.subr.mxu0 0.0
    %2024 = vmatpush2.msra.mxu0 0.0
    %2025 = vmatprep.subr.mxu0 0.0
    %2026 = vmatpush2.msra.mxu0 0.0
    %2027 = vmatprep.subr.mxu0 0.0
    %2028 = vmatpush2.msra.mxu0 0.0
    %2029 = vmatprep.subr.mxu0 0.0
    %2030 = vmatpush2.msra.mxu0 0.0
    %2031 = vmatprep.subr.mxu0 0.0
    %2032 = vmatpush2.msra.mxu0 0.0
    %2033 = vmatprep.subr.mxu0 0.0
    %2034 = vmatpush2.msra.mxu0 0.0
    %2035 = vmatprep.subr.mxu0 0.0
    %2036 = vmatpush2.msra.mxu0 0.0
    %2037 = vmatprep.subr.mxu0 0.0
    %2038 = vmatpush2.msra.mxu0 0.0
    %2039 = vmatprep.subr.mxu0 0.0
    %2040 = vmatpush2.msra.mxu0 0.0
    %2041 = vmatprep.subr.mxu0 0.0
    %2042 = vmatpush2.msra.mxu0 0.0
    %2043 = vmatprep.subr.mxu0 0.0
    %2044 = vmatpush2.msra.mxu0 0.0
    %2045 = vmatprep.subr.mxu0 0.0
    %2046 = vmatpush2.msra.mxu0 0.0
    %2047 = vmatprep.subr.mxu0 0.0
    %2048 = vmatpush2.msra.mxu0 0.0
    %2049 = vmatprep.subr.mxu0 0.0
    %2050 = vmatpush2.msra.mxu0 0.0
    %2051 = vmatprep.subr.mxu0 0.0
    %2052 = vmatpush2.msra.mxu0 0.0
    %2053 = vmatprep.subr.mxu0 0.0
    %2054 = vmatpush2.msra.mxu0 0.0
    %2055 = vmatprep.mubr.f32.mxu0 0.0
    %2056 = vmatmul.mubr.f32.gmra.mxu0 %v1816
    %v2057 = vpop.f32.mrf.mxu0
    %v2058 = vadd.f32 0.0, %v2057
    %v2059 = vpop.f32.mrf.mxu0
    %v2060 = vadd.f32 0.0, %v2059
    %2061 = vdwg.mxu0
    %2062 = vmatprep.subr.mxu0 0.0
    %2063 = vmatpush1.msra.mxu0 %v784
    %2064 = vmatprep.subr.mxu0 0.0
    %2065 = vmatpush1.msra.mxu0 %v781
    %2066 = vmatprep.subr.mxu0 0.0
    %2067 = vmatpush1.msra.mxu0 %v778
    %2068 = vmatprep.subr.mxu0 0.0
    %2069 = vmatpush1.msra.mxu0 %v775
    %2070 = vmatprep.subr.mxu0 0.0
    %2071 = vmatpush1.msra.mxu0 %v772
    %2072 = vmatprep.subr.mxu0 0.0
    %2073 = vmatpush1.msra.mxu0 %v769
    %2074 = vmatprep.subr.mxu0 0.0
    %2075 = vmatpush1.msra.mxu0 %v766
    %2076 = vmatprep.subr.mxu0 0.0
    %2077 = vmatpush1.msra.mxu0 %v763
    %2078 = vmatprep.subr.mxu0 0.0
    %2079 = vmatpush1.msra.mxu0 %v760
    %2080 = vmatprep.subr.mxu0 0.0
    %2081 = vmatpush1.msra.mxu0 %v757
    %2082 = vmatprep.subr.mxu0 0.0
    %2083 = vmatpush1.msra.mxu0 %v754
    %2084 = vmatprep.subr.mxu0 0.0
    %2085 = vmatpush1.msra.mxu0 %v751
    %2086 = vmatprep.subr.mxu0 0.0
    %2087 = vmatpush1.msra.mxu0 %v748
    %2088 = vmatprep.subr.mxu0 0.0
    %2089 = vmatpush1.msra.mxu0 %v745
    %2090 = vmatprep.subr.mxu0 0.0
    %2091 = vmatpush1.msra.mxu0 %v742
    %2092 = vmatprep.subr.mxu0 0.0
    %2093 = vmatpush1.msra.mxu0 %v739
    %2094 = vmatprep.subr.mxu0 0.0
    %2095 = vmatpush2.msra.mxu0 0.0
    %2096 = vmatprep.subr.mxu0 0.0
    %2097 = vmatpush2.msra.mxu0 0.0
    %2098 = vmatprep.subr.mxu0 0.0
    %2099 = vmatpush2.msra.mxu0 0.0
    %2100 = vmatprep.subr.mxu0 0.0
    %2101 = vmatpush2.msra.mxu0 0.0
    %2102 = vmatprep.subr.mxu0 0.0
    %2103 = vmatpush2.msra.mxu0 0.0
    %2104 = vmatprep.subr.mxu0 0.0
    %2105 = vmatpush2.msra.mxu0 0.0
    %2106 = vmatprep.subr.mxu0 0.0
    %2107 = vmatpush2.msra.mxu0 0.0
    %2108 = vmatprep.subr.mxu0 0.0
    %2109 = vmatpush2.msra.mxu0 0.0
    %2110 = vmatprep.subr.mxu0 0.0
    %2111 = vmatpush2.msra.mxu0 0.0
    %2112 = vmatprep.subr.mxu0 0.0
    %2113 = vmatpush2.msra.mxu0 0.0
    %2114 = vmatprep.subr.mxu0 0.0
    %2115 = vmatpush2.msra.mxu0 0.0
    %2116 = vmatprep.subr.mxu0 0.0
    %2117 = vmatpush2.msra.mxu0 0.0
    %2118 = vmatprep.subr.mxu0 0.0
    %2119 = vmatpush2.msra.mxu0 0.0
    %2120 = vmatprep.subr.mxu0 0.0
    %2121 = vmatpush2.msra.mxu0 0.0
    %2122 = vmatprep.subr.mxu0 0.0
    %2123 = vmatpush2.msra.mxu0 0.0
    %2124 = vmatprep.subr.mxu0 0.0
    %2125 = vmatpush2.msra.mxu0 0.0
    %2126 = vmatprep.mubr.f32.mxu0 0.0
    %2127 = vmatmul.mubr.f32.gmra.mxu0 %v1816
    %v2128 = vpop.f32.mrf.mxu0
    %v2129 = vadd.f32 0.0, %v2128
    %v2130 = vpop.f32.mrf.mxu0
    %2131 = vdwg.mxu0
    %v2132 = vadd.f32 %v1987, %v2058
    %v2133 = vxor.u32 %v2132, 2147483648
    %v2134 = vmul.f32 %v2133, 1.442695
    %v2135 = vpow.pop %v2134
    %v2136 = vadd.f32 %v2135, 1.0
    %v2137 = vrcp.pop %v2136
    %v2138 = vmul.f32 1.0, %v2137
    %v2139 = vadd.f32 %v1988, %v2060
    %v2140 = vxor.u32 %v2139, 2147483648
    %v2141 = vmul.f32 %v2140, 1.442695
    %v2142 = vpow.pop %v2141
    %v2143 = vadd.f32 %v2142, 1.0
    %v2144 = vrcp.pop %v2143
    %v2145 = vmul.f32 1.0, %v2144
    %v2146 = vadd.f32 %v2129, %v1125
    %v2147 = vmul.f32 %v2138, %v2146
    %v2148 = vadd.f32 %v1989, %v2147
    %v2149 = vtanh.pop %v2148
    %v2150 = vsub.f32 1.0, %v2145
    %v2151 = vmul.f32 %v2150, %v2149
    %v2152 = vmul.f32 %v2145, %v1816
    %v2153 = vadd.f32 %v2151, %v2152
    %v2154 = vsub.f32 %v2153, %v1816
    %v2155 = vmul.f32 %v1990, %v2154
    %v2156 = vadd.f32 %v1816, %v2155
    %v2157 = vld [vmem:[#allocation2 + $0x60] sm:$0xff]
    %v2158 = vld [vmem:[#allocation2 + $0x68] sm:$0xff]
    %v2159 = vld [vmem:[#allocation2 + $0x70] sm:$0xff]
    %2160 = vmatprep.subr.mxu0 %v735
    %2161 = vmatpush1.msra.mxu0 %v734
    %2162 = vmatprep.subr.mxu0 %v732
    %2163 = vmatpush1.msra.mxu0 %v731
    %2164 = vmatprep.subr.mxu0 %v729
    %2165 = vmatpush1.msra.mxu0 %v728
    %2166 = vmatprep.subr.mxu0 %v726
    %2167 = vmatpush1.msra.mxu0 %v725
    %2168 = vmatprep.subr.mxu0 %v723
    %2169 = vmatpush1.msra.mxu0 %v722
    %2170 = vmatprep.subr.mxu0 %v720
    %2171 = vmatpush1.msra.mxu0 %v719
    %2172 = vmatprep.subr.mxu0 %v717
    %2173 = vmatpush1.msra.mxu0 %v716
    %2174 = vmatprep.subr.mxu0 %v714
    %2175 = vmatpush1.msra.mxu0 %v713
    %2176 = vmatprep.subr.mxu0 %v711
    %2177 = vmatpush1.msra.mxu0 %v710
    %2178 = vmatprep.subr.mxu0 %v708
    %2179 = vmatpush1.msra.mxu0 %v707
    %2180 = vmatprep.subr.mxu0 %v705
    %2181 = vmatpush1.msra.mxu0 %v704
    %2182 = vmatprep.subr.mxu0 %v702
    %2183 = vmatpush1.msra.mxu0 %v701
    %2184 = vmatprep.subr.mxu0 %v699
    %2185 = vmatpush1.msra.mxu0 %v698
    %2186 = vmatprep.subr.mxu0 %v696
    %2187 = vmatpush1.msra.mxu0 %v695
    %2188 = vmatprep.subr.mxu0 %v693
    %2189 = vmatpush1.msra.mxu0 %v692
    %2190 = vmatprep.subr.mxu0 %v690
    %2191 = vmatpush1.msra.mxu0 %v689
    %2192 = vmatprep.subr.mxu0 0.0
    %2193 = vmatpush2.msra.mxu0 0.0
    %2194 = vmatprep.subr.mxu0 0.0
    %2195 = vmatpush2.msra.mxu0 0.0
    %2196 = vmatprep.subr.mxu0 0.0
    %2197 = vmatpush2.msra.mxu0 0.0
    %2198 = vmatprep.subr.mxu0 0.0
    %2199 = vmatpush2.msra.mxu0 0.0
    %2200 = vmatprep.subr.mxu0 0.0
    %2201 = vmatpush2.msra.mxu0 0.0
    %2202 = vmatprep.subr.mxu0 0.0
    %2203 = vmatpush2.msra.mxu0 0.0
    %2204 = vmatprep.subr.mxu0 0.0
    %2205 = vmatpush2.msra.mxu0 0.0
    %2206 = vmatprep.subr.mxu0 0.0
    %2207 = vmatpush2.msra.mxu0 0.0
    %2208 = vmatprep.subr.mxu0 0.0
    %2209 = vmatpush2.msra.mxu0 0.0
    %2210 = vmatprep.subr.mxu0 0.0
    %2211 = vmatpush2.msra.mxu0 0.0
    %2212 = vmatprep.subr.mxu0 0.0
    %2213 = vmatpush2.msra.mxu0 0.0
    %2214 = vmatprep.subr.mxu0 0.0
    %2215 = vmatpush2.msra.mxu0 0.0
    %2216 = vmatprep.subr.mxu0 0.0
    %2217 = vmatpush2.msra.mxu0 0.0
    %2218 = vmatprep.subr.mxu0 0.0
    %2219 = vmatpush2.msra.mxu0 0.0
    %2220 = vmatprep.subr.mxu0 0.0
    %2221 = vmatpush2.msra.mxu0 0.0
    %2222 = vmatprep.subr.mxu0 0.0
    %2223 = vmatpush2.msra.mxu0 0.0
    %2224 = vmatprep.mubr.f32.mxu0 0.0
    %2225 = vmatmul.mubr.f32.gmra.mxu0 %v1986
    %v2226 = vpop.f32.mrf.mxu0
    %v2227 = vadd.f32 0.0, %v2226
    %v2228 = vpop.f32.mrf.mxu0
    %v2229 = vadd.f32 0.0, %v2228
    %2230 = vdwg.mxu0
    %2231 = vmatprep.subr.mxu0 0.0
    %2232 = vmatpush1.msra.mxu0 %v736
    %2233 = vmatprep.subr.mxu0 0.0
    %2234 = vmatpush1.msra.mxu0 %v733
    %2235 = vmatprep.subr.mxu0 0.0
    %2236 = vmatpush1.msra.mxu0 %v730
    %2237 = vmatprep.subr.mxu0 0.0
    %2238 = vmatpush1.msra.mxu0 %v727
    %2239 = vmatprep.subr.mxu0 0.0
    %2240 = vmatpush1.msra.mxu0 %v724
    %2241 = vmatprep.subr.mxu0 0.0
    %2242 = vmatpush1.msra.mxu0 %v721
    %2243 = vmatprep.subr.mxu0 0.0
    %2244 = vmatpush1.msra.mxu0 %v718
    %2245 = vmatprep.subr.mxu0 0.0
    %2246 = vmatpush1.msra.mxu0 %v715
    %2247 = vmatprep.subr.mxu0 0.0
    %2248 = vmatpush1.msra.mxu0 %v712
    %2249 = vmatprep.subr.mxu0 0.0
    %2250 = vmatpush1.msra.mxu0 %v709
    %2251 = vmatprep.subr.mxu0 0.0
    %2252 = vmatpush1.msra.mxu0 %v706
    %2253 = vmatprep.subr.mxu0 0.0
    %2254 = vmatpush1.msra.mxu0 %v703
    %2255 = vmatprep.subr.mxu0 0.0
    %2256 = vmatpush1.msra.mxu0 %v700
    %2257 = vmatprep.subr.mxu0 0.0
    %2258 = vmatpush1.msra.mxu0 %v697
    %2259 = vmatprep.subr.mxu0 0.0
    %2260 = vmatpush1.msra.mxu0 %v694
    %2261 = vmatprep.subr.mxu0 0.0
    %2262 = vmatpush1.msra.mxu0 %v691
    %2263 = vmatprep.subr.mxu0 0.0
    %2264 = vmatpush2.msra.mxu0 0.0
    %2265 = vmatprep.subr.mxu0 0.0
    %2266 = vmatpush2.msra.mxu0 0.0
    %2267 = vmatprep.subr.mxu0 0.0
    %2268 = vmatpush2.msra.mxu0 0.0
    %2269 = vmatprep.subr.mxu0 0.0
    %2270 = vmatpush2.msra.mxu0 0.0
    %2271 = vmatprep.subr.mxu0 0.0
    %2272 = vmatpush2.msra.mxu0 0.0
    %2273 = vmatprep.subr.mxu0 0.0
    %2274 = vmatpush2.msra.mxu0 0.0
    %2275 = vmatprep.subr.mxu0 0.0
    %2276 = vmatpush2.msra.mxu0 0.0
    %2277 = vmatprep.subr.mxu0 0.0
    %2278 = vmatpush2.msra.mxu0 0.0
    %2279 = vmatprep.subr.mxu0 0.0
    %2280 = vmatpush2.msra.mxu0 0.0
    %2281 = vmatprep.subr.mxu0 0.0
    %2282 = vmatpush2.msra.mxu0 0.0
    %2283 = vmatprep.subr.mxu0 0.0
    %2284 = vmatpush2.msra.mxu0 0.0
    %2285 = vmatprep.subr.mxu0 0.0
    %2286 = vmatpush2.msra.mxu0 0.0
    %2287 = vmatprep.subr.mxu0 0.0
    %2288 = vmatpush2.msra.mxu0 0.0
    %2289 = vmatprep.subr.mxu0 0.0
    %2290 = vmatpush2.msra.mxu0 0.0
    %2291 = vmatprep.subr.mxu0 0.0
    %2292 = vmatpush2.msra.mxu0 0.0
    %2293 = vmatprep.subr.mxu0 0.0
    %2294 = vmatpush2.msra.mxu0 0.0
    %2295 = vmatprep.mubr.f32.mxu0 0.0
    %2296 = vmatmul.mubr.f32.gmra.mxu0 %v1986
    %v2297 = vpop.f32.mrf.mxu0
    %v2298 = vadd.f32 0.0, %v2297
    %v2299 = vpop.f32.mrf.mxu0
    %2300 = vdwg.mxu0
    %v2301 = vadd.f32 %v2157, %v2227
    %v2302 = vxor.u32 %v2301, 2147483648
    %v2303 = vmul.f32 %v2302, 1.442695
    %v2304 = vpow.pop %v2303
    %v2305 = vadd.f32 %v2304, 1.0
    %v2306 = vrcp.pop %v2305
    %v2307 = vmul.f32 1.0, %v2306
    %v2308 = vadd.f32 %v2158, %v2229
    %v2309 = vxor.u32 %v2308, 2147483648
    %v2310 = vmul.f32 %v2309, 1.442695
    %v2311 = vpow.pop %v2310
    %v2312 = vadd.f32 %v2311, 1.0
    %v2313 = vrcp.pop %v2312
    %v2314 = vmul.f32 1.0, %v2313
    %v2315 = vadd.f32 %v2298, %v950
    %v2316 = vmul.f32 %v2307, %v2315
    %v2317 = vadd.f32 %v2159, %v2316
    %v2318 = vtanh.pop %v2317
    %v2319 = vsub.f32 1.0, %v2314
    %v2320 = vmul.f32 %v2319, %v2318
    %v2321 = vmul.f32 %v2314, %v1986
    %v2322 = vadd.f32 %v2320, %v2321
    %v2323 = vsub.f32 %v2322, %v1986
    %v2324 = vmul.f32 %v1990, %v2323
    %v2325 = vadd.f32 %v1986, %v2324
    %v2326 = vld [vmem:[#allocation3 + $0x48] sm:$0xff]
    %v2327 = vld [vmem:[#allocation3 + $0x50] sm:$0xff]
    %v2328 = vld [vmem:[#allocation3 + $0x58] sm:$0xff]
    %2329 = vmatprep.subr.mxu0 %v783
    %2330 = vmatpush1.msra.mxu0 %v782
    %2331 = vmatprep.subr.mxu0 %v780
    %2332 = vmatpush1.msra.mxu0 %v779
    %2333 = vmatprep.subr.mxu0 %v777
    %2334 = vmatpush1.msra.mxu0 %v776
    %2335 = vmatprep.subr.mxu0 %v774
    %2336 = vmatpush1.msra.mxu0 %v773
    %2337 = vmatprep.subr.mxu0 %v771
    %2338 = vmatpush1.msra.mxu0 %v770
    %2339 = vmatprep.subr.mxu0 %v768
    %2340 = vmatpush1.msra.mxu0 %v767
    %2341 = vmatprep.subr.mxu0 %v765
    %2342 = vmatpush1.msra.mxu0 %v764
    %2343 = vmatprep.subr.mxu0 %v762
    %2344 = vmatpush1.msra.mxu0 %v761
    %2345 = vmatprep.subr.mxu0 %v759
    %2346 = vmatpush1.msra.mxu0 %v758
    %2347 = vmatprep.subr.mxu0 %v756
    %2348 = vmatpush1.msra.mxu0 %v755
    %2349 = vmatprep.subr.mxu0 %v753
    %2350 = vmatpush1.msra.mxu0 %v752
    %2351 = vmatprep.subr.mxu0 %v750
    %2352 = vmatpush1.msra.mxu0 %v749
    %2353 = vmatprep.subr.mxu0 %v747
    %2354 = vmatpush1.msra.mxu0 %v746
    %2355 = vmatprep.subr.mxu0 %v744
    %2356 = vmatpush1.msra.mxu0 %v743
    %2357 = vmatprep.subr.mxu0 %v741
    %2358 = vmatpush1.msra.mxu0 %v740
    %2359 = vmatprep.subr.mxu0 %v738
    %2360 = vmatpush1.msra.mxu0 %v737
    %2361 = vmatprep.subr.mxu0 0.0
    %2362 = vmatpush2.msra.mxu0 0.0
    %2363 = vmatprep.subr.mxu0 0.0
    %2364 = vmatpush2.msra.mxu0 0.0
    %2365 = vmatprep.subr.mxu0 0.0
    %2366 = vmatpush2.msra.mxu0 0.0
    %2367 = vmatprep.subr.mxu0 0.0
    %2368 = vmatpush2.msra.mxu0 0.0
    %2369 = vmatprep.subr.mxu0 0.0
    %2370 = vmatpush2.msra.mxu0 0.0
    %2371 = vmatprep.subr.mxu0 0.0
    %2372 = vmatpush2.msra.mxu0 0.0
    %2373 = vmatprep.subr.mxu0 0.0
    %2374 = vmatpush2.msra.mxu0 0.0
    %2375 = vmatprep.subr.mxu0 0.0
    %2376 = vmatpush2.msra.mxu0 0.0
    %2377 = vmatprep.subr.mxu0 0.0
    %2378 = vmatpush2.msra.mxu0 0.0
    %2379 = vmatprep.subr.mxu0 0.0
    %2380 = vmatpush2.msra.mxu0 0.0
    %2381 = vmatprep.subr.mxu0 0.0
    %2382 = vmatpush2.msra.mxu0 0.0
    %2383 = vmatprep.subr.mxu0 0.0
    %2384 = vmatpush2.msra.mxu0 0.0
    %2385 = vmatprep.subr.mxu0 0.0
    %2386 = vmatpush2.msra.mxu0 0.0
    %2387 = vmatprep.subr.mxu0 0.0
    %2388 = vmatpush2.msra.mxu0 0.0
    %2389 = vmatprep.subr.mxu0 0.0
    %2390 = vmatpush2.msra.mxu0 0.0
    %2391 = vmatprep.subr.mxu0 0.0
    %2392 = vmatpush2.msra.mxu0 0.0
    %2393 = vmatprep.mubr.f32.mxu0 0.0
    %2394 = vmatmul.mubr.f32.gmra.mxu0 %v2156
    %v2395 = vpop.f32.mrf.mxu0
    %v2396 = vadd.f32 0.0, %v2395
    %v2397 = vpop.f32.mrf.mxu0
    %v2398 = vadd.f32 0.0, %v2397
    %2399 = vdwg.mxu0
    %2400 = vmatprep.subr.mxu0 0.0
    %2401 = vmatpush1.msra.mxu0 %v784
    %2402 = vmatprep.subr.mxu0 0.0
    %2403 = vmatpush1.msra.mxu0 %v781
    %2404 = vmatprep.subr.mxu0 0.0
    %2405 = vmatpush1.msra.mxu0 %v778
    %2406 = vmatprep.subr.mxu0 0.0
    %2407 = vmatpush1.msra.mxu0 %v775
    %2408 = vmatprep.subr.mxu0 0.0
    %2409 = vmatpush1.msra.mxu0 %v772
    %2410 = vmatprep.subr.mxu0 0.0
    %2411 = vmatpush1.msra.mxu0 %v769
    %2412 = vmatprep.subr.mxu0 0.0
    %2413 = vmatpush1.msra.mxu0 %v766
    %2414 = vmatprep.subr.mxu0 0.0
    %2415 = vmatpush1.msra.mxu0 %v763
    %2416 = vmatprep.subr.mxu0 0.0
    %2417 = vmatpush1.msra.mxu0 %v760
    %2418 = vmatprep.subr.mxu0 0.0
    %2419 = vmatpush1.msra.mxu0 %v757
    %2420 = vmatprep.subr.mxu0 0.0
    %2421 = vmatpush1.msra.mxu0 %v754
    %2422 = vmatprep.subr.mxu0 0.0
    %2423 = vmatpush1.msra.mxu0 %v751
    %2424 = vmatprep.subr.mxu0 0.0
    %2425 = vmatpush1.msra.mxu0 %v748
    %2426 = vmatprep.subr.mxu0 0.0
    %2427 = vmatpush1.msra.mxu0 %v745
    %2428 = vmatprep.subr.mxu0 0.0
    %2429 = vmatpush1.msra.mxu0 %v742
    %2430 = vmatprep.subr.mxu0 0.0
    %2431 = vmatpush1.msra.mxu0 %v739
    %2432 = vmatprep.subr.mxu0 0.0
    %2433 = vmatpush2.msra.mxu0 0.0
    %2434 = vmatprep.subr.mxu0 0.0
    %2435 = vmatpush2.msra.mxu0 0.0
    %2436 = vmatprep.subr.mxu0 0.0
    %2437 = vmatpush2.msra.mxu0 0.0
    %2438 = vmatprep.subr.mxu0 0.0
    %2439 = vmatpush2.msra.mxu0 0.0
    %2440 = vmatprep.subr.mxu0 0.0
    %2441 = vmatpush2.msra.mxu0 0.0
    %2442 = vmatprep.subr.mxu0 0.0
    %2443 = vmatpush2.msra.mxu0 0.0
    %2444 = vmatprep.subr.mxu0 0.0
    %2445 = vmatpush2.msra.mxu0 0.0
    %2446 = vmatprep.subr.mxu0 0.0
    %2447 = vmatpush2.msra.mxu0 0.0
    %2448 = vmatprep.subr.mxu0 0.0
    %2449 = vmatpush2.msra.mxu0 0.0
    %2450 = vmatprep.subr.mxu0 0.0
    %2451 = vmatpush2.msra.mxu0 0.0
    %2452 = vmatprep.subr.mxu0 0.0
    %2453 = vmatpush2.msra.mxu0 0.0
    %2454 = vmatprep.subr.mxu0 0.0
    %2455 = vmatpush2.msra.mxu0 0.0
    %2456 = vmatprep.subr.mxu0 0.0
    %2457 = vmatpush2.msra.mxu0 0.0
    %2458 = vmatprep.subr.mxu0 0.0
    %2459 = vmatpush2.msra.mxu0 0.0
    %2460 = vmatprep.subr.mxu0 0.0
    %2461 = vmatpush2.msra.mxu0 0.0
    %2462 = vmatprep.subr.mxu0 0.0
    %2463 = vmatpush2.msra.mxu0 0.0
    %2464 = vmatprep.mubr.f32.mxu0 0.0
    %2465 = vmatmul.mubr.f32.gmra.mxu0 %v2156
    %v2466 = vpop.f32.mrf.mxu0
    %v2467 = vadd.f32 0.0, %v2466
    %v2468 = vpop.f32.mrf.mxu0
    %2469 = vdwg.mxu0
    %v2470 = vadd.f32 %v2326, %v2396
    %v2471 = vxor.u32 %v2470, 2147483648
    %v2472 = vmul.f32 %v2471, 1.442695
    %v2473 = vpow.pop %v2472
    %v2474 = vadd.f32 %v2473, 1.0
    %v2475 = vrcp.pop %v2474
    %v2476 = vmul.f32 1.0, %v2475
    %v2477 = vadd.f32 %v2327, %v2398
    %v2478 = vxor.u32 %v2477, 2147483648
    %v2479 = vmul.f32 %v2478, 1.442695
    %v2480 = vpow.pop %v2479
    %v2481 = vadd.f32 %v2480, 1.0
    %v2482 = vrcp.pop %v2481
    %v2483 = vmul.f32 1.0, %v2482
    %v2484 = vadd.f32 %v2467, %v1125
    %v2485 = vmul.f32 %v2476, %v2484
    %v2486 = vadd.f32 %v2328, %v2485
    %v2487 = vtanh.pop %v2486
    %v2488 = vsub.f32 1.0, %v2483
    %v2489 = vmul.f32 %v2488, %v2487
    %v2490 = vmul.f32 %v2483, %v2156
    %v2491 = vadd.f32 %v2489, %v2490
    %v2492 = vsub.f32 %v2491, %v2156
    %v2493 = vmul.f32 %v1820, %v2492
    %v2494 = vadd.f32 %v2156, %v2493
    %v2495 = vld [vmem:[#allocation2 + $0x78] sm:$0xff]
    %v2496 = vld [vmem:[#allocation2 + $0x80] sm:$0xff]
    %v2497 = vld [vmem:[#allocation2 + $0x88] sm:$0xff]
    %2498 = vmatprep.subr.mxu0 %v735
    %2499 = vmatpush1.msra.mxu0 %v734
    %2500 = vmatprep.subr.mxu0 %v732
    %2501 = vmatpush1.msra.mxu0 %v731
    %2502 = vmatprep.subr.mxu0 %v729
    %2503 = vmatpush1.msra.mxu0 %v728
    %2504 = vmatprep.subr.mxu0 %v726
    %2505 = vmatpush1.msra.mxu0 %v725
    %2506 = vmatprep.subr.mxu0 %v723
    %2507 = vmatpush1.msra.mxu0 %v722
    %2508 = vmatprep.subr.mxu0 %v720
    %2509 = vmatpush1.msra.mxu0 %v719
    %2510 = vmatprep.subr.mxu0 %v717
    %2511 = vmatpush1.msra.mxu0 %v716
    %2512 = vmatprep.subr.mxu0 %v714
    %2513 = vmatpush1.msra.mxu0 %v713
    %2514 = vmatprep.subr.mxu0 %v711
    %2515 = vmatpush1.msra.mxu0 %v710
    %2516 = vmatprep.subr.mxu0 %v708
    %2517 = vmatpush1.msra.mxu0 %v707
    %2518 = vmatprep.subr.mxu0 %v705
    %2519 = vmatpush1.msra.mxu0 %v704
    %2520 = vmatprep.subr.mxu0 %v702
    %2521 = vmatpush1.msra.mxu0 %v701
    %2522 = vmatprep.subr.mxu0 %v699
    %2523 = vmatpush1.msra.mxu0 %v698
    %2524 = vmatprep.subr.mxu0 %v696
    %2525 = vmatpush1.msra.mxu0 %v695
    %2526 = vmatprep.subr.mxu0 %v693
    %2527 = vmatpush1.msra.mxu0 %v692
    %2528 = vmatprep.subr.mxu0 %v690
    %2529 = vmatpush1.msra.mxu0 %v689
    %2530 = vmatprep.subr.mxu0 0.0
    %2531 = vmatpush2.msra.mxu0 0.0
    %2532 = vmatprep.subr.mxu0 0.0
    %2533 = vmatpush2.msra.mxu0 0.0
    %2534 = vmatprep.subr.mxu0 0.0
    %2535 = vmatpush2.msra.mxu0 0.0
    %2536 = vmatprep.subr.mxu0 0.0
    %2537 = vmatpush2.msra.mxu0 0.0
    %2538 = vmatprep.subr.mxu0 0.0
    %2539 = vmatpush2.msra.mxu0 0.0
    %2540 = vmatprep.subr.mxu0 0.0
    %2541 = vmatpush2.msra.mxu0 0.0
    %2542 = vmatprep.subr.mxu0 0.0
    %2543 = vmatpush2.msra.mxu0 0.0
    %2544 = vmatprep.subr.mxu0 0.0
    %2545 = vmatpush2.msra.mxu0 0.0
    %2546 = vmatprep.subr.mxu0 0.0
    %2547 = vmatpush2.msra.mxu0 0.0
    %2548 = vmatprep.subr.mxu0 0.0
    %2549 = vmatpush2.msra.mxu0 0.0
    %2550 = vmatprep.subr.mxu0 0.0
    %2551 = vmatpush2.msra.mxu0 0.0
    %2552 = vmatprep.subr.mxu0 0.0
    %2553 = vmatpush2.msra.mxu0 0.0
    %2554 = vmatprep.subr.mxu0 0.0
    %2555 = vmatpush2.msra.mxu0 0.0
    %2556 = vmatprep.subr.mxu0 0.0
    %2557 = vmatpush2.msra.mxu0 0.0
    %2558 = vmatprep.subr.mxu0 0.0
    %2559 = vmatpush2.msra.mxu0 0.0
    %2560 = vmatprep.subr.mxu0 0.0
    %2561 = vmatpush2.msra.mxu0 0.0
    %2562 = vmatprep.mubr.f32.mxu0 0.0
    %2563 = vmatmul.mubr.f32.gmra.mxu0 %v2325
    %v2564 = vpop.f32.mrf.mxu0
    %v2565 = vadd.f32 0.0, %v2564
    %v2566 = vpop.f32.mrf.mxu0
    %v2567 = vadd.f32 0.0, %v2566
    %2568 = vdwg.mxu0
    %2569 = vmatprep.subr.mxu0 0.0
    %2570 = vmatpush1.msra.mxu0 %v736
    %2571 = vmatprep.subr.mxu0 0.0
    %2572 = vmatpush1.msra.mxu0 %v733
    %2573 = vmatprep.subr.mxu0 0.0
    %2574 = vmatpush1.msra.mxu0 %v730
    %2575 = vmatprep.subr.mxu0 0.0
    %2576 = vmatpush1.msra.mxu0 %v727
    %2577 = vmatprep.subr.mxu0 0.0
    %2578 = vmatpush1.msra.mxu0 %v724
    %2579 = vmatprep.subr.mxu0 0.0
    %2580 = vmatpush1.msra.mxu0 %v721
    %2581 = vmatprep.subr.mxu0 0.0
    %2582 = vmatpush1.msra.mxu0 %v718
    %2583 = vmatprep.subr.mxu0 0.0
    %2584 = vmatpush1.msra.mxu0 %v715
    %2585 = vmatprep.subr.mxu0 0.0
    %2586 = vmatpush1.msra.mxu0 %v712
    %2587 = vmatprep.subr.mxu0 0.0
    %2588 = vmatpush1.msra.mxu0 %v709
    %2589 = vmatprep.subr.mxu0 0.0
    %2590 = vmatpush1.msra.mxu0 %v706
    %2591 = vmatprep.subr.mxu0 0.0
    %2592 = vmatpush1.msra.mxu0 %v703
    %2593 = vmatprep.subr.mxu0 0.0
    %2594 = vmatpush1.msra.mxu0 %v700
    %2595 = vmatprep.subr.mxu0 0.0
    %2596 = vmatpush1.msra.mxu0 %v697
    %2597 = vmatprep.subr.mxu0 0.0
    %2598 = vmatpush1.msra.mxu0 %v694
    %2599 = vmatprep.subr.mxu0 0.0
    %2600 = vmatpush1.msra.mxu0 %v691
    %2601 = vmatprep.subr.mxu0 0.0
    %2602 = vmatpush2.msra.mxu0 0.0
    %2603 = vmatprep.subr.mxu0 0.0
    %2604 = vmatpush2.msra.mxu0 0.0
    %2605 = vmatprep.subr.mxu0 0.0
    %2606 = vmatpush2.msra.mxu0 0.0
    %2607 = vmatprep.subr.mxu0 0.0
    %2608 = vmatpush2.msra.mxu0 0.0
    %2609 = vmatprep.subr.mxu0 0.0
    %2610 = vmatpush2.msra.mxu0 0.0
    %2611 = vmatprep.subr.mxu0 0.0
    %2612 = vmatpush2.msra.mxu0 0.0
    %2613 = vmatprep.subr.mxu0 0.0
    %2614 = vmatpush2.msra.mxu0 0.0
    %2615 = vmatprep.subr.mxu0 0.0
    %2616 = vmatpush2.msra.mxu0 0.0
    %2617 = vmatprep.subr.mxu0 0.0
    %2618 = vmatpush2.msra.mxu0 0.0
    %2619 = vmatprep.subr.mxu0 0.0
    %2620 = vmatpush2.msra.mxu0 0.0
    %2621 = vmatprep.subr.mxu0 0.0
    %2622 = vmatpush2.msra.mxu0 0.0
    %2623 = vmatprep.subr.mxu0 0.0
    %2624 = vmatpush2.msra.mxu0 0.0
    %2625 = vmatprep.subr.mxu0 0.0
    %2626 = vmatpush2.msra.mxu0 0.0
    %2627 = vmatprep.subr.mxu0 0.0
    %2628 = vmatpush2.msra.mxu0 0.0
    %2629 = vmatprep.subr.mxu0 0.0
    %2630 = vmatpush2.msra.mxu0 0.0
    %2631 = vmatprep.subr.mxu0 0.0
    %2632 = vmatpush2.msra.mxu0 0.0
    %2633 = vmatprep.mubr.f32.mxu0 0.0
    %2634 = vmatmul.mubr.f32.gmra.mxu0 %v2325
    %v2635 = vpop.f32.mrf.mxu0
    %v2636 = vadd.f32 0.0, %v2635
    %v2637 = vpop.f32.mrf.mxu0
    %2638 = vdwg.mxu0
    %v2639 = vadd.f32 %v2495, %v2565
    %v2640 = vxor.u32 %v2639, 2147483648
    %v2641 = vmul.f32 %v2640, 1.442695
    %v2642 = vpow.pop %v2641
    %v2643 = vadd.f32 %v2642, 1.0
    %v2644 = vrcp.pop %v2643
    %v2645 = vmul.f32 1.0, %v2644
    %v2646 = vadd.f32 %v2496, %v2567
    %v2647 = vxor.u32 %v2646, 2147483648
    %v2648 = vmul.f32 %v2647, 1.442695
    %v2649 = vpow.pop %v2648
    %v2650 = vadd.f32 %v2649, 1.0
    %v2651 = vrcp.pop %v2650
    %v2652 = vmul.f32 1.0, %v2651
    %v2653 = vadd.f32 %v2636, %v950
    %v2654 = vmul.f32 %v2645, %v2653
    %v2655 = vadd.f32 %v2497, %v2654
    %v2656 = vtanh.pop %v2655
    %v2657 = vsub.f32 1.0, %v2652
    %v2658 = vmul.f32 %v2657, %v2656
    %v2659 = vmul.f32 %v2652, %v2325
    %v2660 = vadd.f32 %v2658, %v2659
    %v2661 = vsub.f32 %v2660, %v2325
    %v2662 = vmul.f32 %v1650, %v2661
    %v2663 = vadd.f32 %v2325, %v2662
    %v2664 = vld [vmem:[#allocation3 + $0x30] sm:$0xff]
    %v2665 = vld [vmem:[#allocation3 + $0x38] sm:$0xff]
    %v2666 = vld [vmem:[#allocation3 + $0x40] sm:$0xff]
    %2667 = vmatprep.subr.mxu0 %v783
    %2668 = vmatpush1.msra.mxu0 %v782
    %2669 = vmatprep.subr.mxu0 %v780
    %2670 = vmatpush1.msra.mxu0 %v779
    %2671 = vmatprep.subr.mxu0 %v777
    %2672 = vmatpush1.msra.mxu0 %v776
    %2673 = vmatprep.subr.mxu0 %v774
    %2674 = vmatpush1.msra.mxu0 %v773
    %2675 = vmatprep.subr.mxu0 %v771
    %2676 = vmatpush1.msra.mxu0 %v770
    %2677 = vmatprep.subr.mxu0 %v768
    %2678 = vmatpush1.msra.mxu0 %v767
    %2679 = vmatprep.subr.mxu0 %v765
    %2680 = vmatpush1.msra.mxu0 %v764
    %2681 = vmatprep.subr.mxu0 %v762
    %2682 = vmatpush1.msra.mxu0 %v761
    %2683 = vmatprep.subr.mxu0 %v759
    %2684 = vmatpush1.msra.mxu0 %v758
    %2685 = vmatprep.subr.mxu0 %v756
    %2686 = vmatpush1.msra.mxu0 %v755
    %2687 = vmatprep.subr.mxu0 %v753
    %2688 = vmatpush1.msra.mxu0 %v752
    %2689 = vmatprep.subr.mxu0 %v750
    %2690 = vmatpush1.msra.mxu0 %v749
    %2691 = vmatprep.subr.mxu0 %v747
    %2692 = vmatpush1.msra.mxu0 %v746
    %2693 = vmatprep.subr.mxu0 %v744
    %2694 = vmatpush1.msra.mxu0 %v743
    %2695 = vmatprep.subr.mxu0 %v741
    %2696 = vmatpush1.msra.mxu0 %v740
    %2697 = vmatprep.subr.mxu0 %v738
    %2698 = vmatpush1.msra.mxu0 %v737
    %2699 = vmatprep.subr.mxu0 0.0
    %2700 = vmatpush2.msra.mxu0 0.0
    %2701 = vmatprep.subr.mxu0 0.0
    %2702 = vmatpush2.msra.mxu0 0.0
    %2703 = vmatprep.subr.mxu0 0.0
    %2704 = vmatpush2.msra.mxu0 0.0
    %2705 = vmatprep.subr.mxu0 0.0
    %2706 = vmatpush2.msra.mxu0 0.0
    %2707 = vmatprep.subr.mxu0 0.0
    %2708 = vmatpush2.msra.mxu0 0.0
    %2709 = vmatprep.subr.mxu0 0.0
    %2710 = vmatpush2.msra.mxu0 0.0
    %2711 = vmatprep.subr.mxu0 0.0
    %2712 = vmatpush2.msra.mxu0 0.0
    %2713 = vmatprep.subr.mxu0 0.0
    %2714 = vmatpush2.msra.mxu0 0.0
    %2715 = vmatprep.subr.mxu0 0.0
    %2716 = vmatpush2.msra.mxu0 0.0
    %2717 = vmatprep.subr.mxu0 0.0
    %2718 = vmatpush2.msra.mxu0 0.0
    %2719 = vmatprep.subr.mxu0 0.0
    %2720 = vmatpush2.msra.mxu0 0.0
    %2721 = vmatprep.subr.mxu0 0.0
    %2722 = vmatpush2.msra.mxu0 0.0
    %2723 = vmatprep.subr.mxu0 0.0
    %2724 = vmatpush2.msra.mxu0 0.0
    %2725 = vmatprep.subr.mxu0 0.0
    %2726 = vmatpush2.msra.mxu0 0.0
    %2727 = vmatprep.subr.mxu0 0.0
    %2728 = vmatpush2.msra.mxu0 0.0
    %2729 = vmatprep.subr.mxu0 0.0
    %2730 = vmatpush2.msra.mxu0 0.0
    %2731 = vmatprep.mubr.f32.mxu0 0.0
    %2732 = vmatmul.mubr.f32.gmra.mxu0 %v2494
    %v2733 = vpop.f32.mrf.mxu0
    %v2734 = vadd.f32 0.0, %v2733
    %v2735 = vpop.f32.mrf.mxu0
    %v2736 = vadd.f32 0.0, %v2735
    %2737 = vdwg.mxu0
    %2738 = vmatprep.subr.mxu0 0.0
    %2739 = vmatpush1.msra.mxu0 %v784
    %2740 = vmatprep.subr.mxu0 0.0
    %2741 = vmatpush1.msra.mxu0 %v781
    %2742 = vmatprep.subr.mxu0 0.0
    %2743 = vmatpush1.msra.mxu0 %v778
    %2744 = vmatprep.subr.mxu0 0.0
    %2745 = vmatpush1.msra.mxu0 %v775
    %2746 = vmatprep.subr.mxu0 0.0
    %2747 = vmatpush1.msra.mxu0 %v772
    %2748 = vmatprep.subr.mxu0 0.0
    %2749 = vmatpush1.msra.mxu0 %v769
    %2750 = vmatprep.subr.mxu0 0.0
    %2751 = vmatpush1.msra.mxu0 %v766
    %2752 = vmatprep.subr.mxu0 0.0
    %2753 = vmatpush1.msra.mxu0 %v763
    %2754 = vmatprep.subr.mxu0 0.0
    %2755 = vmatpush1.msra.mxu0 %v760
    %2756 = vmatprep.subr.mxu0 0.0
    %2757 = vmatpush1.msra.mxu0 %v757
    %2758 = vmatprep.subr.mxu0 0.0
    %2759 = vmatpush1.msra.mxu0 %v754
    %2760 = vmatprep.subr.mxu0 0.0
    %2761 = vmatpush1.msra.mxu0 %v751
    %2762 = vmatprep.subr.mxu0 0.0
    %2763 = vmatpush1.msra.mxu0 %v748
    %2764 = vmatprep.subr.mxu0 0.0
    %2765 = vmatpush1.msra.mxu0 %v745
    %2766 = vmatprep.subr.mxu0 0.0
    %2767 = vmatpush1.msra.mxu0 %v742
    %2768 = vmatprep.subr.mxu0 0.0
    %2769 = vmatpush1.msra.mxu0 %v739
    %2770 = vmatprep.subr.mxu0 0.0
    %2771 = vmatpush2.msra.mxu0 0.0
    %2772 = vmatprep.subr.mxu0 0.0
    %2773 = vmatpush2.msra.mxu0 0.0
    %2774 = vmatprep.subr.mxu0 0.0
    %2775 = vmatpush2.msra.mxu0 0.0
    %2776 = vmatprep.subr.mxu0 0.0
    %2777 = vmatpush2.msra.mxu0 0.0
    %2778 = vmatprep.subr.mxu0 0.0
    %2779 = vmatpush2.msra.mxu0 0.0
    %2780 = vmatprep.subr.mxu0 0.0
    %2781 = vmatpush2.msra.mxu0 0.0
    %2782 = vmatprep.subr.mxu0 0.0
    %2783 = vmatpush2.msra.mxu0 0.0
    %2784 = vmatprep.subr.mxu0 0.0
    %2785 = vmatpush2.msra.mxu0 0.0
    %2786 = vmatprep.subr.mxu0 0.0
    %2787 = vmatpush2.msra.mxu0 0.0
    %2788 = vmatprep.subr.mxu0 0.0
    %2789 = vmatpush2.msra.mxu0 0.0
    %2790 = vmatprep.subr.mxu0 0.0
    %2791 = vmatpush2.msra.mxu0 0.0
    %2792 = vmatprep.subr.mxu0 0.0
    %2793 = vmatpush2.msra.mxu0 0.0
    %2794 = vmatprep.subr.mxu0 0.0
    %2795 = vmatpush2.msra.mxu0 0.0
    %2796 = vmatprep.subr.mxu0 0.0
    %2797 = vmatpush2.msra.mxu0 0.0
    %2798 = vmatprep.subr.mxu0 0.0
    %2799 = vmatpush2.msra.mxu0 0.0
    %2800 = vmatprep.subr.mxu0 0.0
    %2801 = vmatpush2.msra.mxu0 0.0
    %2802 = vmatprep.mubr.f32.mxu0 0.0
    %2803 = vmatmul.mubr.f32.gmra.mxu0 %v2494
    %v2804 = vpop.f32.mrf.mxu0
    %v2805 = vadd.f32 0.0, %v2804
    %v2806 = vpop.f32.mrf.mxu0
    %2807 = vdwg.mxu0
    %v2808 = vadd.f32 %v2664, %v2734
    %v2809 = vxor.u32 %v2808, 2147483648
    %v2810 = vmul.f32 %v2809, 1.442695
    %v2811 = vpow.pop %v2810
    %v2812 = vadd.f32 %v2811, 1.0
    %v2813 = vrcp.pop %v2812
    %v2814 = vmul.f32 1.0, %v2813
    %v2815 = vadd.f32 %v2665, %v2736
    %v2816 = vxor.u32 %v2815, 2147483648
    %v2817 = vmul.f32 %v2816, 1.442695
    %v2818 = vpow.pop %v2817
    %v2819 = vadd.f32 %v2818, 1.0
    %v2820 = vrcp.pop %v2819
    %v2821 = vmul.f32 1.0, %v2820
    %v2822 = vadd.f32 %v2805, %v1125
    %v2823 = vmul.f32 %v2814, %v2822
    %v2824 = vadd.f32 %v2666, %v2823
    %v2825 = vtanh.pop %v2824
    %v2826 = vsub.f32 1.0, %v2821
    %v2827 = vmul.f32 %v2826, %v2825
    %v2828 = vmul.f32 %v2821, %v2494
    %v2829 = vadd.f32 %v2827, %v2828
    %v2830 = vsub.f32 %v2829, %v2494
    %v2831 = vmul.f32 %v1480, %v2830
    %v2832 = vadd.f32 %v2494, %v2831
    %v2833 = vld [vmem:[#allocation2 + $0x90] sm:$0xff]
    %v2834 = vld [vmem:[#allocation2 + $0x98] sm:$0xff]
    %v2835 = vld [vmem:[#allocation2 + $0xa0] sm:$0xff]
    %2836 = vmatprep.subr.mxu0 %v735
    %2837 = vmatpush1.msra.mxu0 %v734
    %2838 = vmatprep.subr.mxu0 %v732
    %2839 = vmatpush1.msra.mxu0 %v731
    %2840 = vmatprep.subr.mxu0 %v729
    %2841 = vmatpush1.msra.mxu0 %v728
    %2842 = vmatprep.subr.mxu0 %v726
    %2843 = vmatpush1.msra.mxu0 %v725
    %2844 = vmatprep.subr.mxu0 %v723
    %2845 = vmatpush1.msra.mxu0 %v722
    %2846 = vmatprep.subr.mxu0 %v720
    %2847 = vmatpush1.msra.mxu0 %v719
    %2848 = vmatprep.subr.mxu0 %v717
    %2849 = vmatpush1.msra.mxu0 %v716
    %2850 = vmatprep.subr.mxu0 %v714
    %2851 = vmatpush1.msra.mxu0 %v713
    %2852 = vmatprep.subr.mxu0 %v711
    %2853 = vmatpush1.msra.mxu0 %v710
    %2854 = vmatprep.subr.mxu0 %v708
    %2855 = vmatpush1.msra.mxu0 %v707
    %2856 = vmatprep.subr.mxu0 %v705
    %2857 = vmatpush1.msra.mxu0 %v704
    %2858 = vmatprep.subr.mxu0 %v702
    %2859 = vmatpush1.msra.mxu0 %v701
    %2860 = vmatprep.subr.mxu0 %v699
    %2861 = vmatpush1.msra.mxu0 %v698
    %2862 = vmatprep.subr.mxu0 %v696
    %2863 = vmatpush1.msra.mxu0 %v695
    %2864 = vmatprep.subr.mxu0 %v693
    %2865 = vmatpush1.msra.mxu0 %v692
    %2866 = vmatprep.subr.mxu0 %v690
    %2867 = vmatpush1.msra.mxu0 %v689
    %2868 = vmatprep.subr.mxu0 0.0
    %2869 = vmatpush2.msra.mxu0 0.0
    %2870 = vmatprep.subr.mxu0 0.0
    %2871 = vmatpush2.msra.mxu0 0.0
    %2872 = vmatprep.subr.mxu0 0.0
    %2873 = vmatpush2.msra.mxu0 0.0
    %2874 = vmatprep.subr.mxu0 0.0
    %2875 = vmatpush2.msra.mxu0 0.0
    %2876 = vmatprep.subr.mxu0 0.0
    %2877 = vmatpush2.msra.mxu0 0.0
    %2878 = vmatprep.subr.mxu0 0.0
    %2879 = vmatpush2.msra.mxu0 0.0
    %2880 = vmatprep.subr.mxu0 0.0
    %2881 = vmatpush2.msra.mxu0 0.0
    %2882 = vmatprep.subr.mxu0 0.0
    %2883 = vmatpush2.msra.mxu0 0.0
    %2884 = vmatprep.subr.mxu0 0.0
    %2885 = vmatpush2.msra.mxu0 0.0
    %2886 = vmatprep.subr.mxu0 0.0
    %2887 = vmatpush2.msra.mxu0 0.0
    %2888 = vmatprep.subr.mxu0 0.0
    %2889 = vmatpush2.msra.mxu0 0.0
    %2890 = vmatprep.subr.mxu0 0.0
    %2891 = vmatpush2.msra.mxu0 0.0
    %2892 = vmatprep.subr.mxu0 0.0
    %2893 = vmatpush2.msra.mxu0 0.0
    %2894 = vmatprep.subr.mxu0 0.0
    %2895 = vmatpush2.msra.mxu0 0.0
    %2896 = vmatprep.subr.mxu0 0.0
    %2897 = vmatpush2.msra.mxu0 0.0
    %2898 = vmatprep.subr.mxu0 0.0
    %2899 = vmatpush2.msra.mxu0 0.0
    %2900 = vmatprep.mubr.f32.mxu0 0.0
    %2901 = vmatmul.mubr.f32.gmra.mxu0 %v2663
    %v2902 = vpop.f32.mrf.mxu0
    %v2903 = vadd.f32 0.0, %v2902
    %v2904 = vpop.f32.mrf.mxu0
    %v2905 = vadd.f32 0.0, %v2904
    %2906 = vdwg.mxu0
    %2907 = vmatprep.subr.mxu0 0.0
    %2908 = vmatpush1.msra.mxu0 %v736
    %2909 = vmatprep.subr.mxu0 0.0
    %2910 = vmatpush1.msra.mxu0 %v733
    %2911 = vmatprep.subr.mxu0 0.0
    %2912 = vmatpush1.msra.mxu0 %v730
    %2913 = vmatprep.subr.mxu0 0.0
    %2914 = vmatpush1.msra.mxu0 %v727
    %2915 = vmatprep.subr.mxu0 0.0
    %2916 = vmatpush1.msra.mxu0 %v724
    %2917 = vmatprep.subr.mxu0 0.0
    %2918 = vmatpush1.msra.mxu0 %v721
    %2919 = vmatprep.subr.mxu0 0.0
    %2920 = vmatpush1.msra.mxu0 %v718
    %2921 = vmatprep.subr.mxu0 0.0
    %2922 = vmatpush1.msra.mxu0 %v715
    %2923 = vmatprep.subr.mxu0 0.0
    %2924 = vmatpush1.msra.mxu0 %v712
    %2925 = vmatprep.subr.mxu0 0.0
    %2926 = vmatpush1.msra.mxu0 %v709
    %2927 = vmatprep.subr.mxu0 0.0
    %2928 = vmatpush1.msra.mxu0 %v706
    %2929 = vmatprep.subr.mxu0 0.0
    %2930 = vmatpush1.msra.mxu0 %v703
    %2931 = vmatprep.subr.mxu0 0.0
    %2932 = vmatpush1.msra.mxu0 %v700
    %2933 = vmatprep.subr.mxu0 0.0
    %2934 = vmatpush1.msra.mxu0 %v697
    %2935 = vmatprep.subr.mxu0 0.0
    %2936 = vmatpush1.msra.mxu0 %v694
    %2937 = vmatprep.subr.mxu0 0.0
    %2938 = vmatpush1.msra.mxu0 %v691
    %2939 = vmatprep.subr.mxu0 0.0
    %2940 = vmatpush2.msra.mxu0 0.0
    %2941 = vmatprep.subr.mxu0 0.0
    %2942 = vmatpush2.msra.mxu0 0.0
    %2943 = vmatprep.subr.mxu0 0.0
    %2944 = vmatpush2.msra.mxu0 0.0
    %2945 = vmatprep.subr.mxu0 0.0
    %2946 = vmatpush2.msra.mxu0 0.0
    %2947 = vmatprep.subr.mxu0 0.0
    %2948 = vmatpush2.msra.mxu0 0.0
    %2949 = vmatprep.subr.mxu0 0.0
    %2950 = vmatpush2.msra.mxu0 0.0
    %2951 = vmatprep.subr.mxu0 0.0
    %2952 = vmatpush2.msra.mxu0 0.0
    %2953 = vmatprep.subr.mxu0 0.0
    %2954 = vmatpush2.msra.mxu0 0.0
    %2955 = vmatprep.subr.mxu0 0.0
    %2956 = vmatpush2.msra.mxu0 0.0
    %2957 = vmatprep.subr.mxu0 0.0
    %2958 = vmatpush2.msra.mxu0 0.0
    %2959 = vmatprep.subr.mxu0 0.0
    %2960 = vmatpush2.msra.mxu0 0.0
    %2961 = vmatprep.subr.mxu0 0.0
    %2962 = vmatpush2.msra.mxu0 0.0
    %2963 = vmatprep.subr.mxu0 0.0
    %2964 = vmatpush2.msra.mxu0 0.0
    %2965 = vmatprep.subr.mxu0 0.0
    %2966 = vmatpush2.msra.mxu0 0.0
    %2967 = vmatprep.subr.mxu0 0.0
    %2968 = vmatpush2.msra.mxu0 0.0
    %2969 = vmatprep.subr.mxu0 0.0
    %2970 = vmatpush2.msra.mxu0 0.0
    %2971 = vmatprep.mubr.f32.mxu0 0.0
    %2972 = vmatmul.mubr.f32.gmra.mxu0 %v2663
    %v2973 = vpop.f32.mrf.mxu0
    %v2974 = vadd.f32 0.0, %v2973
    %v2975 = vpop.f32.mrf.mxu0
    %2976 = vdwg.mxu0
    %v2977 = vadd.f32 %v2833, %v2903
    %v2978 = vxor.u32 %v2977, 2147483648
    %v2979 = vmul.f32 %v2978, 1.442695
    %v2980 = vpow.pop %v2979
    %v2981 = vadd.f32 %v2980, 1.0
    %v2982 = vrcp.pop %v2981
    %v2983 = vmul.f32 1.0, %v2982
    %v2984 = vadd.f32 %v2834, %v2905
    %v2985 = vxor.u32 %v2984, 2147483648
    %v2986 = vmul.f32 %v2985, 1.442695
    %v2987 = vpow.pop %v2986
    %v2988 = vadd.f32 %v2987, 1.0
    %v2989 = vrcp.pop %v2988
    %v2990 = vmul.f32 1.0, %v2989
    %v2991 = vadd.f32 %v2974, %v950
    %v2992 = vmul.f32 %v2983, %v2991
    %v2993 = vadd.f32 %v2835, %v2992
    %v2994 = vtanh.pop %v2993
    %v2995 = vsub.f32 1.0, %v2990
    %v2996 = vmul.f32 %v2995, %v2994
    %v2997 = vmul.f32 %v2990, %v2663
    %v2998 = vadd.f32 %v2996, %v2997
    %v2999 = vsub.f32 %v2998, %v2663
    %v3000 = vmul.f32 %v1310, %v2999
    %v3001 = vadd.f32 %v2663, %v3000
    %v3002 = vld [vmem:[#allocation3 + $0x18] sm:$0xff]
    %v3003 = vld [vmem:[#allocation3 + $0x20] sm:$0xff]
    %v3004 = vld [vmem:[#allocation3 + $0x28] sm:$0xff]
    %3005 = vmatprep.subr.mxu0 %v783
    %3006 = vmatpush1.msra.mxu0 %v782
    %3007 = vmatprep.subr.mxu0 %v780
    %3008 = vmatpush1.msra.mxu0 %v779
    %3009 = vmatprep.subr.mxu0 %v777
    %3010 = vmatpush1.msra.mxu0 %v776
    %3011 = vmatprep.subr.mxu0 %v774
    %3012 = vmatpush1.msra.mxu0 %v773
    %3013 = vmatprep.subr.mxu0 %v771
    %3014 = vmatpush1.msra.mxu0 %v770
    %3015 = vmatprep.subr.mxu0 %v768
    %3016 = vmatpush1.msra.mxu0 %v767
    %3017 = vmatprep.subr.mxu0 %v765
    %3018 = vmatpush1.msra.mxu0 %v764
    %3019 = vmatprep.subr.mxu0 %v762
    %3020 = vmatpush1.msra.mxu0 %v761
    %3021 = vmatprep.subr.mxu0 %v759
    %3022 = vmatpush1.msra.mxu0 %v758
    %3023 = vmatprep.subr.mxu0 %v756
    %3024 = vmatpush1.msra.mxu0 %v755
    %3025 = vmatprep.subr.mxu0 %v753
    %3026 = vmatpush1.msra.mxu0 %v752
    %3027 = vmatprep.subr.mxu0 %v750
    %3028 = vmatpush1.msra.mxu0 %v749
    %3029 = vmatprep.subr.mxu0 %v747
    %3030 = vmatpush1.msra.mxu0 %v746
    %3031 = vmatprep.subr.mxu0 %v744
    %3032 = vmatpush1.msra.mxu0 %v743
    %3033 = vmatprep.subr.mxu0 %v741
    %3034 = vmatpush1.msra.mxu0 %v740
    %3035 = vmatprep.subr.mxu0 %v738
    %3036 = vmatpush1.msra.mxu0 %v737
    %3037 = vmatprep.subr.mxu0 0.0
    %3038 = vmatpush2.msra.mxu0 0.0
    %3039 = vmatprep.subr.mxu0 0.0
    %3040 = vmatpush2.msra.mxu0 0.0
    %3041 = vmatprep.subr.mxu0 0.0
    %3042 = vmatpush2.msra.mxu0 0.0
    %3043 = vmatprep.subr.mxu0 0.0
    %3044 = vmatpush2.msra.mxu0 0.0
    %3045 = vmatprep.subr.mxu0 0.0
    %3046 = vmatpush2.msra.mxu0 0.0
    %3047 = vmatprep.subr.mxu0 0.0
    %3048 = vmatpush2.msra.mxu0 0.0
    %3049 = vmatprep.subr.mxu0 0.0
    %3050 = vmatpush2.msra.mxu0 0.0
    %3051 = vmatprep.subr.mxu0 0.0
    %3052 = vmatpush2.msra.mxu0 0.0
    %3053 = vmatprep.subr.mxu0 0.0
    %3054 = vmatpush2.msra.mxu0 0.0
    %3055 = vmatprep.subr.mxu0 0.0
    %3056 = vmatpush2.msra.mxu0 0.0
    %3057 = vmatprep.subr.mxu0 0.0
    %3058 = vmatpush2.msra.mxu0 0.0
    %3059 = vmatprep.subr.mxu0 0.0
    %3060 = vmatpush2.msra.mxu0 0.0
    %3061 = vmatprep.subr.mxu0 0.0
    %3062 = vmatpush2.msra.mxu0 0.0
    %3063 = vmatprep.subr.mxu0 0.0
    %3064 = vmatpush2.msra.mxu0 0.0
    %3065 = vmatprep.subr.mxu0 0.0
    %3066 = vmatpush2.msra.mxu0 0.0
    %3067 = vmatprep.subr.mxu0 0.0
    %3068 = vmatpush2.msra.mxu0 0.0
    %3069 = vmatprep.mubr.f32.mxu0 0.0
    %3070 = vmatmul.mubr.f32.gmra.mxu0 %v2832
    %v3071 = vpop.f32.mrf.mxu0
    %v3072 = vadd.f32 0.0, %v3071
    %v3073 = vpop.f32.mrf.mxu0
    %v3074 = vadd.f32 0.0, %v3073
    %3075 = vdwg.mxu0
    %3076 = vmatprep.subr.mxu0 0.0
    %3077 = vmatpush1.msra.mxu0 %v784
    %3078 = vmatprep.subr.mxu0 0.0
    %3079 = vmatpush1.msra.mxu0 %v781
    %3080 = vmatprep.subr.mxu0 0.0
    %3081 = vmatpush1.msra.mxu0 %v778
    %3082 = vmatprep.subr.mxu0 0.0
    %3083 = vmatpush1.msra.mxu0 %v775
    %3084 = vmatprep.subr.mxu0 0.0
    %3085 = vmatpush1.msra.mxu0 %v772
    %3086 = vmatprep.subr.mxu0 0.0
    %3087 = vmatpush1.msra.mxu0 %v769
    %3088 = vmatprep.subr.mxu0 0.0
    %3089 = vmatpush1.msra.mxu0 %v766
    %3090 = vmatprep.subr.mxu0 0.0
    %3091 = vmatpush1.msra.mxu0 %v763
    %3092 = vmatprep.subr.mxu0 0.0
    %3093 = vmatpush1.msra.mxu0 %v760
    %3094 = vmatprep.subr.mxu0 0.0
    %3095 = vmatpush1.msra.mxu0 %v757
    %3096 = vmatprep.subr.mxu0 0.0
    %3097 = vmatpush1.msra.mxu0 %v754
    %3098 = vmatprep.subr.mxu0 0.0
    %3099 = vmatpush1.msra.mxu0 %v751
    %3100 = vmatprep.subr.mxu0 0.0
    %3101 = vmatpush1.msra.mxu0 %v748
    %3102 = vmatprep.subr.mxu0 0.0
    %3103 = vmatpush1.msra.mxu0 %v745
    %3104 = vmatprep.subr.mxu0 0.0
    %3105 = vmatpush1.msra.mxu0 %v742
    %3106 = vmatprep.subr.mxu0 0.0
    %3107 = vmatpush1.msra.mxu0 %v739
    %3108 = vmatprep.subr.mxu0 0.0
    %3109 = vmatpush2.msra.mxu0 0.0
    %3110 = vmatprep.subr.mxu0 0.0
    %3111 = vmatpush2.msra.mxu0 0.0
    %3112 = vmatprep.subr.mxu0 0.0
    %3113 = vmatpush2.msra.mxu0 0.0
    %3114 = vmatprep.subr.mxu0 0.0
    %3115 = vmatpush2.msra.mxu0 0.0
    %3116 = vmatprep.subr.mxu0 0.0
    %3117 = vmatpush2.msra.mxu0 0.0
    %3118 = vmatprep.subr.mxu0 0.0
    %3119 = vmatpush2.msra.mxu0 0.0
    %3120 = vmatprep.subr.mxu0 0.0
    %3121 = vmatpush2.msra.mxu0 0.0
    %3122 = vmatprep.subr.mxu0 0.0
    %3123 = vmatpush2.msra.mxu0 0.0
    %3124 = vmatprep.subr.mxu0 0.0
    %3125 = vmatpush2.msra.mxu0 0.0
    %3126 = vmatprep.subr.mxu0 0.0
    %3127 = vmatpush2.msra.mxu0 0.0
    %3128 = vmatprep.subr.mxu0 0.0
    %3129 = vmatpush2.msra.mxu0 0.0
    %3130 = vmatprep.subr.mxu0 0.0
    %3131 = vmatpush2.msra.mxu0 0.0
    %3132 = vmatprep.subr.mxu0 0.0
    %3133 = vmatpush2.msra.mxu0 0.0
    %3134 = vmatprep.subr.mxu0 0.0
    %3135 = vmatpush2.msra.mxu0 0.0
    %3136 = vmatprep.subr.mxu0 0.0
    %3137 = vmatpush2.msra.mxu0 0.0
    %3138 = vmatprep.subr.mxu0 0.0
    %3139 = vmatpush2.msra.mxu0 0.0
    %3140 = vmatprep.mubr.f32.mxu0 0.0
    %3141 = vmatmul.mubr.f32.gmra.mxu0 %v2832
    %v3142 = vpop.f32.mrf.mxu0
    %v3143 = vadd.f32 0.0, %v3142
    %v3144 = vpop.f32.mrf.mxu0
    %3145 = vdwg.mxu0
    %v3146 = vadd.f32 %v3002, %v3072
    %v3147 = vxor.u32 %v3146, 2147483648
    %v3148 = vmul.f32 %v3147, 1.442695
    %v3149 = vpow.pop %v3148
    %v3150 = vadd.f32 %v3149, 1.0
    %v3151 = vrcp.pop %v3150
    %v3152 = vmul.f32 1.0, %v3151
    %v3153 = vadd.f32 %v3003, %v3074
    %v3154 = vxor.u32 %v3153, 2147483648
    %v3155 = vmul.f32 %v3154, 1.442695
    %v3156 = vpow.pop %v3155
    %v3157 = vadd.f32 %v3156, 1.0
    %v3158 = vrcp.pop %v3157
    %v3159 = vmul.f32 1.0, %v3158
    %v3160 = vadd.f32 %v3143, %v1125
    %v3161 = vmul.f32 %v3152, %v3160
    %v3162 = vadd.f32 %v3004, %v3161
    %v3163 = vtanh.pop %v3162
    %v3164 = vsub.f32 1.0, %v3159
    %v3165 = vmul.f32 %v3164, %v3163
    %v3166 = vmul.f32 %v3159, %v2832
    %v3167 = vadd.f32 %v3165, %v3166
    %v3168 = vsub.f32 %v3167, %v2832
    %v3169 = vmul.f32 %v1140, %v3168
    %v3170 = vadd.f32 %v2832, %v3169
    %v3171 = vld [vmem:[#allocation2 + $0xa8] sm:$0xff]
    %v3172 = vld [vmem:[#allocation2 + $0xb0] sm:$0xff]
    %v3173 = vld [vmem:[#allocation2 + $0xb8] sm:$0xff]
    %3174 = vmatprep.subr.mxu0 %v735
    %3175 = vmatpush1.msra.mxu0 %v734
    %3176 = vmatprep.subr.mxu0 %v732
    %3177 = vmatpush1.msra.mxu0 %v731
    %3178 = vmatprep.subr.mxu0 %v729
    %3179 = vmatpush1.msra.mxu0 %v728
    %3180 = vmatprep.subr.mxu0 %v726
    %3181 = vmatpush1.msra.mxu0 %v725
    %3182 = vmatprep.subr.mxu0 %v723
    %3183 = vmatpush1.msra.mxu0 %v722
    %3184 = vmatprep.subr.mxu0 %v720
    %3185 = vmatpush1.msra.mxu0 %v719
    %3186 = vmatprep.subr.mxu0 %v717
    %3187 = vmatpush1.msra.mxu0 %v716
    %3188 = vmatprep.subr.mxu0 %v714
    %3189 = vmatpush1.msra.mxu0 %v713
    %3190 = vmatprep.subr.mxu0 %v711
    %3191 = vmatpush1.msra.mxu0 %v710
    %3192 = vmatprep.subr.mxu0 %v708
    %3193 = vmatpush1.msra.mxu0 %v707
    %3194 = vmatprep.subr.mxu0 %v705
    %3195 = vmatpush1.msra.mxu0 %v704
    %3196 = vmatprep.subr.mxu0 %v702
    %3197 = vmatpush1.msra.mxu0 %v701
    %3198 = vmatprep.subr.mxu0 %v699
    %3199 = vmatpush1.msra.mxu0 %v698
    %3200 = vmatprep.subr.mxu0 %v696
    %3201 = vmatpush1.msra.mxu0 %v695
    %3202 = vmatprep.subr.mxu0 %v693
    %3203 = vmatpush1.msra.mxu0 %v692
    %3204 = vmatprep.subr.mxu0 %v690
    %3205 = vmatpush1.msra.mxu0 %v689
    %3206 = vmatprep.subr.mxu0 0.0
    %3207 = vmatpush2.msra.mxu0 0.0
    %3208 = vmatprep.subr.mxu0 0.0
    %3209 = vmatpush2.msra.mxu0 0.0
    %3210 = vmatprep.subr.mxu0 0.0
    %3211 = vmatpush2.msra.mxu0 0.0
    %3212 = vmatprep.subr.mxu0 0.0
    %3213 = vmatpush2.msra.mxu0 0.0
    %3214 = vmatprep.subr.mxu0 0.0
    %3215 = vmatpush2.msra.mxu0 0.0
    %3216 = vmatprep.subr.mxu0 0.0
    %3217 = vmatpush2.msra.mxu0 0.0
    %3218 = vmatprep.subr.mxu0 0.0
    %3219 = vmatpush2.msra.mxu0 0.0
    %3220 = vmatprep.subr.mxu0 0.0
    %3221 = vmatpush2.msra.mxu0 0.0
    %3222 = vmatprep.subr.mxu0 0.0
    %3223 = vmatpush2.msra.mxu0 0.0
    %3224 = vmatprep.subr.mxu0 0.0
    %3225 = vmatpush2.msra.mxu0 0.0
    %3226 = vmatprep.subr.mxu0 0.0
    %3227 = vmatpush2.msra.mxu0 0.0
    %3228 = vmatprep.subr.mxu0 0.0
    %3229 = vmatpush2.msra.mxu0 0.0
    %3230 = vmatprep.subr.mxu0 0.0
    %3231 = vmatpush2.msra.mxu0 0.0
    %3232 = vmatprep.subr.mxu0 0.0
    %3233 = vmatpush2.msra.mxu0 0.0
    %3234 = vmatprep.subr.mxu0 0.0
    %3235 = vmatpush2.msra.mxu0 0.0
    %3236 = vmatprep.subr.mxu0 0.0
    %3237 = vmatpush2.msra.mxu0 0.0
    %3238 = vmatprep.mubr.f32.mxu0 0.0
    %3239 = vmatmul.mubr.f32.gmra.mxu0 %v3001
    %v3240 = vpop.f32.mrf.mxu0
    %v3241 = vadd.f32 0.0, %v3240
    %v3242 = vpop.f32.mrf.mxu0
    %v3243 = vadd.f32 0.0, %v3242
    %3244 = vdwg.mxu0
    %3245 = vmatprep.subr.mxu0 0.0
    %3246 = vmatpush1.msra.mxu0 %v736
    %3247 = vmatprep.subr.mxu0 0.0
    %3248 = vmatpush1.msra.mxu0 %v733
    %3249 = vmatprep.subr.mxu0 0.0
    %3250 = vmatpush1.msra.mxu0 %v730
    %3251 = vmatprep.subr.mxu0 0.0
    %3252 = vmatpush1.msra.mxu0 %v727
    %3253 = vmatprep.subr.mxu0 0.0
    %3254 = vmatpush1.msra.mxu0 %v724
    %3255 = vmatprep.subr.mxu0 0.0
    %3256 = vmatpush1.msra.mxu0 %v721
    %3257 = vmatprep.subr.mxu0 0.0
    %3258 = vmatpush1.msra.mxu0 %v718
    %3259 = vmatprep.subr.mxu0 0.0
    %3260 = vmatpush1.msra.mxu0 %v715
    %3261 = vmatprep.subr.mxu0 0.0
    %3262 = vmatpush1.msra.mxu0 %v712
    %3263 = vmatprep.subr.mxu0 0.0
    %3264 = vmatpush1.msra.mxu0 %v709
    %3265 = vmatprep.subr.mxu0 0.0
    %3266 = vmatpush1.msra.mxu0 %v706
    %3267 = vmatprep.subr.mxu0 0.0
    %3268 = vmatpush1.msra.mxu0 %v703
    %3269 = vmatprep.subr.mxu0 0.0
    %3270 = vmatpush1.msra.mxu0 %v700
    %3271 = vmatprep.subr.mxu0 0.0
    %3272 = vmatpush1.msra.mxu0 %v697
    %3273 = vmatprep.subr.mxu0 0.0
    %3274 = vmatpush1.msra.mxu0 %v694
    %3275 = vmatprep.subr.mxu0 0.0
    %3276 = vmatpush1.msra.mxu0 %v691
    %3277 = vmatprep.subr.mxu0 0.0
    %3278 = vmatpush2.msra.mxu0 0.0
    %3279 = vmatprep.subr.mxu0 0.0
    %3280 = vmatpush2.msra.mxu0 0.0
    %3281 = vmatprep.subr.mxu0 0.0
    %3282 = vmatpush2.msra.mxu0 0.0
    %3283 = vmatprep.subr.mxu0 0.0
    %3284 = vmatpush2.msra.mxu0 0.0
    %3285 = vmatprep.subr.mxu0 0.0
    %3286 = vmatpush2.msra.mxu0 0.0
    %3287 = vmatprep.subr.mxu0 0.0
    %3288 = vmatpush2.msra.mxu0 0.0
    %3289 = vmatprep.subr.mxu0 0.0
    %3290 = vmatpush2.msra.mxu0 0.0
    %3291 = vmatprep.subr.mxu0 0.0
    %3292 = vmatpush2.msra.mxu0 0.0
    %3293 = vmatprep.subr.mxu0 0.0
    %3294 = vmatpush2.msra.mxu0 0.0
    %3295 = vmatprep.subr.mxu0 0.0
    %3296 = vmatpush2.msra.mxu0 0.0
    %3297 = vmatprep.subr.mxu0 0.0
    %3298 = vmatpush2.msra.mxu0 0.0
    %3299 = vmatprep.subr.mxu0 0.0
    %3300 = vmatpush2.msra.mxu0 0.0
    %3301 = vmatprep.subr.mxu0 0.0
    %3302 = vmatpush2.msra.mxu0 0.0
    %3303 = vmatprep.subr.mxu0 0.0
    %3304 = vmatpush2.msra.mxu0 0.0
    %3305 = vmatprep.subr.mxu0 0.0
    %3306 = vmatpush2.msra.mxu0 0.0
    %3307 = vmatprep.subr.mxu0 0.0
    %3308 = vmatpush2.msra.mxu0 0.0
    %3309 = vmatprep.mubr.f32.mxu0 0.0
    %3310 = vmatmul.mubr.f32.gmra.mxu0 %v3001
    %v3311 = vpop.f32.mrf.mxu0
    %v3312 = vadd.f32 0.0, %v3311
    %v3313 = vpop.f32.mrf.mxu0
    %3314 = vdwg.mxu0
    %v3315 = vadd.f32 %v3171, %v3241
    %v3316 = vxor.u32 %v3315, 2147483648
    %v3317 = vmul.f32 %v3316, 1.442695
    %v3318 = vpow.pop %v3317
    %v3319 = vadd.f32 %v3318, 1.0
    %v3320 = vrcp.pop %v3319
    %v3321 = vmul.f32 1.0, %v3320
    %v3322 = vadd.f32 %v3172, %v3243
    %v3323 = vxor.u32 %v3322, 2147483648
    %v3324 = vmul.f32 %v3323, 1.442695
    %v3325 = vpow.pop %v3324
    %v3326 = vadd.f32 %v3325, 1.0
    %v3327 = vrcp.pop %v3326
    %v3328 = vmul.f32 1.0, %v3327
    %v3329 = vadd.f32 %v3312, %v950
    %v3330 = vmul.f32 %v3321, %v3329
    %v3331 = vadd.f32 %v3173, %v3330
    %v3332 = vtanh.pop %v3331
    %v3333 = vsub.f32 1.0, %v3328
    %v3334 = vmul.f32 %v3333, %v3332
    %v3335 = vmul.f32 %v3328, %v3001
    %v3336 = vadd.f32 %v3334, %v3335
    %v3337 = vsub.f32 %v3336, %v3001
    %v3338 = vmul.f32 %v965, %v3337
    %v3339 = vadd.f32 %v3001, %v3338
    %v3340 = vld [vmem:[#allocation3] sm:$0xff]
    %v3341 = vld [vmem:[#allocation3 + $0x8] sm:$0xff]
    %v3342 = vld [vmem:[#allocation3 + $0x10] sm:$0xff]
    %3343 = vmatprep.subr.mxu0 %v783
    %3344 = vmatpush1.msra.mxu0 %v782
    %3345 = vmatprep.subr.mxu0 %v780
    %3346 = vmatpush1.msra.mxu0 %v779
    %3347 = vmatprep.subr.mxu0 %v777
    %3348 = vmatpush1.msra.mxu0 %v776
    %3349 = vmatprep.subr.mxu0 %v774
    %3350 = vmatpush1.msra.mxu0 %v773
    %3351 = vmatprep.subr.mxu0 %v771
    %3352 = vmatpush1.msra.mxu0 %v770
    %3353 = vmatprep.subr.mxu0 %v768
    %3354 = vmatpush1.msra.mxu0 %v767
    %3355 = vmatprep.subr.mxu0 %v765
    %3356 = vmatpush1.msra.mxu0 %v764
    %3357 = vmatprep.subr.mxu0 %v762
    %3358 = vmatpush1.msra.mxu0 %v761
    %3359 = vmatprep.subr.mxu0 %v759
    %3360 = vmatpush1.msra.mxu0 %v758
    %3361 = vmatprep.subr.mxu0 %v756
    %3362 = vmatpush1.msra.mxu0 %v755
    %3363 = vmatprep.subr.mxu0 %v753
    %3364 = vmatpush1.msra.mxu0 %v752
    %3365 = vmatprep.subr.mxu0 %v750
    %3366 = vmatpush1.msra.mxu0 %v749
    %3367 = vmatprep.subr.mxu0 %v747
    %3368 = vmatpush1.msra.mxu0 %v746
    %3369 = vmatprep.subr.mxu0 %v744
    %3370 = vmatpush1.msra.mxu0 %v743
    %3371 = vmatprep.subr.mxu0 %v741
    %3372 = vmatpush1.msra.mxu0 %v740
    %3373 = vmatprep.subr.mxu0 %v738
    %3374 = vmatpush1.msra.mxu0 %v737
    %3375 = vmatprep.subr.mxu0 0.0
    %3376 = vmatpush2.msra.mxu0 0.0
    %3377 = vmatprep.subr.mxu0 0.0
    %3378 = vmatpush2.msra.mxu0 0.0
    %3379 = vmatprep.subr.mxu0 0.0
    %3380 = vmatpush2.msra.mxu0 0.0
    %3381 = vmatprep.subr.mxu0 0.0
    %3382 = vmatpush2.msra.mxu0 0.0
    %3383 = vmatprep.subr.mxu0 0.0
    %3384 = vmatpush2.msra.mxu0 0.0
    %3385 = vmatprep.subr.mxu0 0.0
    %3386 = vmatpush2.msra.mxu0 0.0
    %3387 = vmatprep.subr.mxu0 0.0
    %3388 = vmatpush2.msra.mxu0 0.0
    %3389 = vmatprep.subr.mxu0 0.0
    %3390 = vmatpush2.msra.mxu0 0.0
    %3391 = vmatprep.subr.mxu0 0.0
    %3392 = vmatpush2.msra.mxu0 0.0
    %3393 = vmatprep.subr.mxu0 0.0
    %3394 = vmatpush2.msra.mxu0 0.0
    %3395 = vmatprep.subr.mxu0 0.0
    %3396 = vmatpush2.msra.mxu0 0.0
    %3397 = vmatprep.subr.mxu0 0.0
    %3398 = vmatpush2.msra.mxu0 0.0
    %3399 = vmatprep.subr.mxu0 0.0
    %3400 = vmatpush2.msra.mxu0 0.0
    %3401 = vmatprep.subr.mxu0 0.0
    %3402 = vmatpush2.msra.mxu0 0.0
    %3403 = vmatprep.subr.mxu0 0.0
    %3404 = vmatpush2.msra.mxu0 0.0
    %3405 = vmatprep.subr.mxu0 0.0
    %3406 = vmatpush2.msra.mxu0 0.0
    %3407 = vmatprep.mubr.f32.mxu0 0.0
    %3408 = vmatmul.mubr.f32.gmra.mxu0 %v3170
    %v3409 = vpop.f32.mrf.mxu0
    %v3410 = vadd.f32 0.0, %v3409
    %v3411 = vpop.f32.mrf.mxu0
    %v3412 = vadd.f32 0.0, %v3411
    %3413 = vdwg.mxu0
    %3414 = vmatprep.subr.mxu0 0.0
    %3415 = vmatpush1.msra.mxu0 %v784
    %3416 = vmatprep.subr.mxu0 0.0
    %3417 = vmatpush1.msra.mxu0 %v781
    %3418 = vmatprep.subr.mxu0 0.0
    %3419 = vmatpush1.msra.mxu0 %v778
    %3420 = vmatprep.subr.mxu0 0.0
    %3421 = vmatpush1.msra.mxu0 %v775
    %3422 = vmatprep.subr.mxu0 0.0
    %3423 = vmatpush1.msra.mxu0 %v772
    %3424 = vmatprep.subr.mxu0 0.0
    %3425 = vmatpush1.msra.mxu0 %v769
    %3426 = vmatprep.subr.mxu0 0.0
    %3427 = vmatpush1.msra.mxu0 %v766
    %3428 = vmatprep.subr.mxu0 0.0
    %3429 = vmatpush1.msra.mxu0 %v763
    %3430 = vmatprep.subr.mxu0 0.0
    %3431 = vmatpush1.msra.mxu0 %v760
    %3432 = vmatprep.subr.mxu0 0.0
    %3433 = vmatpush1.msra.mxu0 %v757
    %3434 = vmatprep.subr.mxu0 0.0
    %3435 = vmatpush1.msra.mxu0 %v754
    %3436 = vmatprep.subr.mxu0 0.0
    %3437 = vmatpush1.msra.mxu0 %v751
    %3438 = vmatprep.subr.mxu0 0.0
    %3439 = vmatpush1.msra.mxu0 %v748
    %3440 = vmatprep.subr.mxu0 0.0
    %3441 = vmatpush1.msra.mxu0 %v745
    %3442 = vmatprep.subr.mxu0 0.0
    %3443 = vmatpush1.msra.mxu0 %v742
    %3444 = vmatprep.subr.mxu0 0.0
    %3445 = vmatpush1.msra.mxu0 %v739
    %3446 = vmatprep.subr.mxu0 0.0
    %3447 = vmatpush2.msra.mxu0 0.0
    %3448 = vmatprep.subr.mxu0 0.0
    %3449 = vmatpush2.msra.mxu0 0.0
    %3450 = vmatprep.subr.mxu0 0.0
    %3451 = vmatpush2.msra.mxu0 0.0
    %3452 = vmatprep.subr.mxu0 0.0
    %3453 = vmatpush2.msra.mxu0 0.0
    %3454 = vmatprep.subr.mxu0 0.0
    %3455 = vmatpush2.msra.mxu0 0.0
    %3456 = vmatprep.subr.mxu0 0.0
    %3457 = vmatpush2.msra.mxu0 0.0
    %3458 = vmatprep.subr.mxu0 0.0
    %3459 = vmatpush2.msra.mxu0 0.0
    %3460 = vmatprep.subr.mxu0 0.0
    %3461 = vmatpush2.msra.mxu0 0.0
    %3462 = vmatprep.subr.mxu0 0.0
    %3463 = vmatpush2.msra.mxu0 0.0
    %3464 = vmatprep.subr.mxu0 0.0
    %3465 = vmatpush2.msra.mxu0 0.0
    %3466 = vmatprep.subr.mxu0 0.0
    %3467 = vmatpush2.msra.mxu0 0.0
    %3468 = vmatprep.subr.mxu0 0.0
    %3469 = vmatpush2.msra.mxu0 0.0
    %3470 = vmatprep.subr.mxu0 0.0
    %3471 = vmatpush2.msra.mxu0 0.0
    %3472 = vmatprep.subr.mxu0 0.0
    %3473 = vmatpush2.msra.mxu0 0.0
    %3474 = vmatprep.subr.mxu0 0.0
    %3475 = vmatpush2.msra.mxu0 0.0
    %3476 = vmatprep.subr.mxu0 0.0
    %3477 = vmatpush2.msra.mxu0 0.0
    %3478 = vmatprep.mubr.f32.mxu0 0.0
    %3479 = vmatmul.mubr.f32.gmra.mxu0 %v3170
    %v3480 = vpop.f32.mrf.mxu0
    %v3481 = vadd.f32 0.0, %v3480
    %v3482 = vpop.f32.mrf.mxu0
    %3483 = vdwg.mxu0
    %v3484 = vadd.f32 %v3340, %v3410
    %v3485 = vxor.u32 %v3484, 2147483648
    %v3486 = vmul.f32 %v3485, 1.442695
    %v3487 = vpow.pop %v3486
    %v3488 = vadd.f32 %v3487, 1.0
    %v3489 = vrcp.pop %v3488
    %v3490 = vmul.f32 1.0, %v3489
    %v3491 = vadd.f32 %v3341, %v3412
    %v3492 = vxor.u32 %v3491, 2147483648
    %v3493 = vmul.f32 %v3492, 1.442695
    %v3494 = vpow.pop %v3493
    %v3495 = vadd.f32 %v3494, 1.0
    %v3496 = vrcp.pop %v3495
    %v3497 = vmul.f32 1.0, %v3496
    %v3498 = vadd.f32 %v3481, %v1125
    %v3499 = vmul.f32 %v3490, %v3498
    %v3500 = vadd.f32 %v3342, %v3499
    %v3501 = vtanh.pop %v3500
    %v3502 = vsub.f32 1.0, %v3497
    %v3503 = vmul.f32 %v3502, %v3501
    %v3504 = vmul.f32 %v3497, %v3170
    %v3505 = vadd.f32 %v3503, %v3504
    %v3506 = vsub.f32 %v3505, %v3170
    %v3507 = vmul.f32 %v790, %v3506
    %v3508 = vadd.f32 %v3170, %v3507
    %3509 = vst [vmem:[#allocation13] sm:$0xff] %v3339
    %3510 = vst [vmem:[#allocation14] sm:$0xff] %v3508
    %v3511 = vld [vmem:[#allocation12] sm:$0xff]
    %v3512 = vld [vmem:[#allocation12 + $0x8] sm:$0xff]
    %v3513 = vld [vmem:[#allocation12 + $0x10] sm:$0xff]
    %v3514 = vld [vmem:[#allocation12 + $0x18] sm:$0xff]
    %v3515 = vld [vmem:[#allocation12 + $0x20] sm:$0xff]
    %v3516 = vld [vmem:[#allocation12 + $0x28] sm:$0xff]
    %v3517 = vld [vmem:[#allocation12 + $0x30] sm:$0xff]
    %v3518 = vld [vmem:[#allocation12 + $0x38] sm:$0xff]
    %v3519 = vld [vmem:[#allocation12 + $0x40] sm:$0xff]
    %v3520 = vld [vmem:[#allocation12 + $0x48] sm:$0xff]
    %v3521 = vld [vmem:[#allocation12 + $0x50] sm:$0xff]
    %v3522 = vld [vmem:[#allocation12 + $0x58] sm:$0xff]
    %v3523 = vld [vmem:[#allocation12 + $0x60] sm:$0xff]
    %v3524 = vld [vmem:[#allocation12 + $0x68] sm:$0xff]
    %v3525 = vld [vmem:[#allocation12 + $0x70] sm:$0xff]
    %v3526 = vld [vmem:[#allocation12 + $0x78] sm:$0xff]
    %v3527 = vld [vmem:[%s11] sm:$0x1]
    %v3529 = vlaneseq
    %v3530 = vshrl.u32 %v3529, 7
    %v3531 = vsub.s32 0, %v3530
    %v3532 = vrot.slane %v3527, %v3531
    %3534 = vmatprep.subr.mxu0 0.0
    %3535 = vmatpush1.msra.mxu0 %v3526
    %3536 = vmatprep.subr.mxu0 0.0
    %3537 = vmatpush1.msra.mxu0 %v3525
    %3538 = vmatprep.subr.mxu0 0.0
    %3539 = vmatpush1.msra.mxu0 %v3524
    %3540 = vmatprep.subr.mxu0 0.0
    %3541 = vmatpush1.msra.mxu0 %v3523
    %3542 = vmatprep.subr.mxu0 0.0
    %3543 = vmatpush1.msra.mxu0 %v3522
    %3544 = vmatprep.subr.mxu0 0.0
    %3545 = vmatpush1.msra.mxu0 %v3521
    %3546 = vmatprep.subr.mxu0 0.0
    %3547 = vmatpush1.msra.mxu0 %v3520
    %3548 = vmatprep.subr.mxu0 0.0
    %3549 = vmatpush1.msra.mxu0 %v3519
    %3550 = vmatprep.subr.mxu0 0.0
    %3551 = vmatpush1.msra.mxu0 %v3518
    %3552 = vmatprep.subr.mxu0 0.0
    %3553 = vmatpush1.msra.mxu0 %v3517
    %3554 = vmatprep.subr.mxu0 0.0
    %3555 = vmatpush1.msra.mxu0 %v3516
    %3556 = vmatprep.subr.mxu0 0.0
    %3557 = vmatpush1.msra.mxu0 %v3515
    %3558 = vmatprep.subr.mxu0 0.0
    %3559 = vmatpush1.msra.mxu0 %v3514
    %3560 = vmatprep.subr.mxu0 0.0
    %3561 = vmatpush1.msra.mxu0 %v3513
    %3562 = vmatprep.subr.mxu0 0.0
    %3563 = vmatpush1.msra.mxu0 %v3512
    %3564 = vmatprep.subr.mxu0 0.0
    %3565 = vmatpush1.msra.mxu0 %v3511
    %3566 = vmatprep.subr.mxu0 0.0
    %3567 = vmatpush2.msra.mxu0 0.0
    %3568 = vmatprep.subr.mxu0 0.0
    %3569 = vmatpush2.msra.mxu0 0.0
    %3570 = vmatprep.subr.mxu0 0.0
    %3571 = vmatpush2.msra.mxu0 0.0
    %3572 = vmatprep.subr.mxu0 0.0
    %3573 = vmatpush2.msra.mxu0 0.0
    %3574 = vmatprep.subr.mxu0 0.0
    %3575 = vmatpush2.msra.mxu0 0.0
    %3576 = vmatprep.subr.mxu0 0.0
    %3577 = vmatpush2.msra.mxu0 0.0
    %3578 = vmatprep.subr.mxu0 0.0
    %3579 = vmatpush2.msra.mxu0 0.0
    %3580 = vmatprep.subr.mxu0 0.0
    %3581 = vmatpush2.msra.mxu0 0.0
    %3582 = vmatprep.subr.mxu0 0.0
    %3583 = vmatpush2.msra.mxu0 0.0
    %3584 = vmatprep.subr.mxu0 0.0
    %3585 = vmatpush2.msra.mxu0 0.0
    %3586 = vmatprep.subr.mxu0 0.0
    %3587 = vmatpush2.msra.mxu0 0.0
    %3588 = vmatprep.subr.mxu0 0.0
    %3589 = vmatpush2.msra.mxu0 0.0
    %3590 = vmatprep.subr.mxu0 0.0
    %3591 = vmatpush2.msra.mxu0 0.0
    %3592 = vmatprep.subr.mxu0 0.0
    %3593 = vmatpush2.msra.mxu0 0.0
    %3594 = vmatprep.subr.mxu0 0.0
    %3595 = vmatpush2.msra.mxu0 0.0
    %3596 = vmatprep.subr.mxu0 0.0
    %3597 = vmatpush2.msra.mxu0 0.0
    %3598 = vmatprep.mubr.f32.mxu0 0.0
    %3599 = vmatmul.mubr.f32.gmra.mxu0 %v3508
    %v3600 = vpop.f32.mrf.mxu0
    %v3601 = vadd.f32 %v3532, %v3600
    %v3602 = vpop.f32.mrf.mxu0
    %3603 = vdwg.mxu0
    %3604 = vst [vmem:[#allocation16] sm:$0xff] %v3601
    // Predicated region
    $region70: #{tpu_custom_call.1} parent=1 // pred_check
      _
    $region71: #{tpu_custom_call.1} parent=1 // pred_check_branch
      %3606 = sbr.rel (0) target = $region73
    $region72: #{tpu_custom_call.1} parent=1 // pred_region
      %s3608 = ssub.s32 128, 128
      %3609 = vsyncadd [#allocation6], %s3608
      %s3611 = sshll.u32 [#allocation13], 4
      %s3612 = int_to_ptr.vmem [resolvable:$true] %s3611
      %3614 = dma.vmem_to_hbm [thread:$0]  %s3612, 128, %s12, [#allocation6]
    $region73: #{tpu_custom_call.1} parent=1 // pred_fallthru
      _
    // Predicated region
    $region74: #{tpu_custom_call.1} parent=1 // pred_check
      _
    $region75: #{tpu_custom_call.1} parent=1 // pred_check_branch
      %3616 = sbr.rel (0) target = $region77
    $region76: #{tpu_custom_call.1} parent=1 // pred_region
      %s3618 = ssub.s32 128, 128
      %3619 = vsyncadd [#allocation15], %s3618
      %s3621 = sshll.u32 [#allocation14], 4
      %s3622 = int_to_ptr.vmem [resolvable:$true] %s3621
      %3624 = dma.vmem_to_hbm [thread:$0]  %s3622, 128, %s13, [#allocation15]
    $region77: #{tpu_custom_call.1} parent=1 // pred_fallthru
      _
    // Predicated region
    $region78: #{tpu_custom_call.1} parent=1 // pred_check
      _
    $region79: #{tpu_custom_call.1} parent=1 // pred_check_branch
      %3626 = sbr.rel (0) target = $region81
    $region80: #{tpu_custom_call.1} parent=1 // pred_region
      %s3628 = ssub.s32 128, 128
      %3629 = vsyncadd [#allocation15], %s3628
      %s3631 = sshll.u32 [#allocation16], 4
      %s3632 = int_to_ptr.vmem [resolvable:$true] %s3631
      %3634 = dma.vmem_to_hbm [thread:$0]  %s3632, 128, %s14, [#allocation15]
    $region81: #{tpu_custom_call.1} parent=1 // pred_fallthru
      _
    // Predicated region
    $region82: #{tpu_custom_call.1} parent=1 // pred_check
      _
    $region83: #{tpu_custom_call.1} parent=1 // pred_check_branch
      %3636 = sbr.rel (0) target = $region85
    $region84: #{tpu_custom_call.1} parent=1 // pred_region
      %3637 = dma.done [#allocation6], 128
    $region85: #{tpu_custom_call.1} parent=1 // pred_fallthru
      _
    // Predicated region
    $region86: #{tpu_custom_call.1} parent=1 // pred_check
      _
    $region87: #{tpu_custom_call.1} parent=1 // pred_check_branch
      %3639 = sbr.rel (0) target = $region89
    $region88: #{tpu_custom_call.1} parent=1 // pred_region
      %3640 = dma.done [#allocation15], 128
    $region89: #{tpu_custom_call.1} parent=1 // pred_fallthru
      _
    // Predicated region
    $region90: #{tpu_custom_call.1} parent=1 // pred_check
      _
    $region91: #{tpu_custom_call.1} parent=1 // pred_check_branch
      %3642 = sbr.rel (0) target = $region93
    $region92: #{tpu_custom_call.1} parent=1 // pred_region
      %3643 = dma.done [#allocation15], 128
    $region93: #{tpu_custom_call.1} parent=1 // pred_fallthru
      _
    %3644 = vsyncpa [#allocation5], 1
    %3645 = vsyncpa [#allocation8], 1
    %3646 = vsyncpa [#allocation11], 1
    %3647 = vsyncpa [#allocation6], 1
    %3648 = vsyncpa [#allocation15], 1

</llo_original>
